<compile_context>
chip_gen: v6e
topology: v6e:2x2x1
jax: 0.10.0
libtpu: 0.0.40
codegen_flags: <defaults>
</compile_context>

<pallas_src>
import functools

import jax
import jax.numpy as jnp
from jax import lax
from jax.experimental import pallas as pl
from jax.experimental.pallas import tpu as pltpu

DICE_EPS = 1e-8  # Dice's internal BatchNorm eps (DeepCTR-Torch Dice default)


def _dice(h, mean, m2, count, gamma, beta, alpha):
    """Dice gate from globally accumulated BN stats (training mode, biased var).

    h: (Bblk, H, TILE) f32;  mean/m2/gamma/beta/alpha: (H, 1) f32;  count: scalar f32.
    """
    var = jnp.maximum(m2 / count, 0.0)
    xn = (h - mean) * lax.rsqrt(var + DICE_EPS) * gamma + beta
    p = jax.nn.sigmoid(xn)
    return (alpha * (1.0 - p) + p) * h


def lau_kernel(ub_ref, w_eff_ref, c_ref, g1_ref, be1_ref, a1_ref,
               w2_ref, b2_ref, g2_ref, be2_ref, a2_ref, w3_ref, b3_ref,
               out_ref,
               mean1_ref, m2_1_ref, mean2_ref, m2_2_ref, cnt_ref,
               *, seq_len):
    phase = pl.program_id(0)
    first_block = (pl.program_id(1) == 0) & (pl.program_id(2) == 0)

    bblk, _, tile_t = ub_ref.shape
    h1_dim = w_eff_ref.shape[1]
    h2_dim = w2_ref.shape[0]

    # Valid (non-padded) sequence positions covered by this tile.
    t_start = pl.program_id(2) * tile_t
    valid_i = jnp.minimum(seq_len - t_start, tile_t)           # int32 scalar >= 1
    valid_f = valid_i.astype(jnp.float32)
    lane = lax.broadcasted_iota(jnp.int32, (1, 1, tile_t), 2)
    mask = lane < (seq_len - t_start)                           # (1, 1, TILE) bool
    blk_n_i = valid_i * bblk                                    # samples in this block

    @pl.when((phase == 0) & first_block)
    def _init_stats():
        mean1_ref[...] = jnp.zeros_like(mean1_ref)
        m2_1_ref[...] = jnp.zeros_like(m2_1_ref)
        mean2_ref[...] = jnp.zeros_like(mean2_ref)
        m2_2_ref[...] = jnp.zeros_like(m2_2_ref)
        cnt_ref[0] = jnp.int32(0)
        cnt_ref[1] = jnp.int32(0)

    def combine(mean_ref, m2_ref, idx, blk_mean, blk_m2, n_b_i):
        # Chan/Welford parallel combine of (count, mean, M2) -- numerically stable,
        # order independent, no E[x^2]-E[x]^2 cancellation.
        n_a = cnt_ref[idx]
        n_new = n_a + n_b_i
        na_f = n_a.astype(jnp.float32)
        nb_f = n_b_i.astype(jnp.float32)
        n_f = n_new.astype(jnp.float32)
        delta = blk_mean - mean_ref[...]
        mean_ref[...] = mean_ref[...] + delta * (nb_f / n_f)
        m2_ref[...] = m2_ref[...] + blk_m2 + delta * delta * (na_f * nb_f / n_f)
        cnt_ref[idx] = n_new

    # -------------------- phase 0: analytic layer-1 statistics --------------------
    # h1 = W_eff @ ub + c.  Over this block's valid columns:
    #   per-batch mean   mu_b   = W_eff[b] @ mean_t(ub) + c[b]
    #   per-batch M2     diag_b = diag(W_eff[b] @ Gc_b @ W_eff[b]^T),
    # where Gc_b is the column-centered ExE Gram of ub.  Only E-sized reductions and
    # ExE matmuls touch the TILE axis, so phase 0 is nearly free.
    @pl.when(phase == 0)
    def _phase0():
        ub = ub_ref[...].astype(jnp.float32)                        # (Bblk, E, TILE)
        w = w_eff_ref[...].astype(jnp.float32)                      # (Bblk, H1, E)
        c = c_ref[...]                                              # (Bblk, H1, 1)
        ub_m = jnp.where(mask, ub, 0.0)
        u_mean = jnp.sum(ub_m, axis=2, keepdims=True) / valid_f     # (Bblk, E, 1)
        ub_c = jnp.where(mask, ub - u_mean, 0.0).astype(jnp.bfloat16)
        gram = jnp.einsum("bet,bft->bef", ub_c, ub_c,
                          preferred_element_type=jnp.float32)       # (Bblk, E, E)
        mu = jnp.einsum("bhe,bef->bhf", w, u_mean,
                        preferred_element_type=jnp.float32) + c     # (Bblk, H1, 1)
        wg = jnp.einsum("bhe,bef->bhf", w, gram,
                        preferred_element_type=jnp.float32)         # (Bblk, H1, E)
        diag = jnp.sum(wg * w, axis=2, keepdims=True)               # (Bblk, H1, 1)
        blk_mean = jnp.mean(mu, axis=0)                             # (H1, 1)
        blk_m2 = jnp.sum(diag + valid_f * (mu - blk_mean) ** 2, axis=0)
        combine(mean1_ref, m2_1_ref, 0, blk_mean, blk_m2, blk_n_i)

    # -------------------- phases 1 & 2: full forward -------------------------------
    @pl.when(phase >= 1)
    def _phase12():
        c = c_ref[...]                                              # f32
        h1 = jnp.einsum("bhe,bet->bht", w_eff_ref[...], ub_ref[...],
                        preferred_element_type=jnp.float32) + c     # (Bblk, H1, TILE)
        h1d = _dice(h1, mean1_ref[...], m2_1_ref[...],
                    cnt_ref[0].astype(jnp.float32),
                    g1_ref[...], be1_ref[...], a1_ref[...])

        w2b = jnp.broadcast_to(w2_ref[...][None], (bblk, h2_dim, h1_dim))
        h2 = jnp.einsum("bkh,bht->bkt", w2b, h1d.astype(jnp.bfloat16),
                        preferred_element_type=jnp.float32) + b2_ref[...]

        @pl.when(phase == 1)
        def _layer2_stats():
            h2m = jnp.where(mask, h2, 0.0)
            blk_mean = (jnp.sum(jnp.sum(h2m, axis=0), axis=1, keepdims=True)
                        / (valid_f * bblk))                         # (H2, 1)
            dev = jnp.where(mask, h2 - blk_mean, 0.0)
            blk_m2 = jnp.sum(jnp.sum(dev * dev, axis=0), axis=1, keepdims=True)
            combine(mean2_ref, m2_2_ref, 1, blk_mean, blk_m2, blk_n_i)

        @pl.when(phase == 2)
        def _emit():
            h2d = _dice(h2, mean2_ref[...], m2_2_ref[...],
                        cnt_ref[1].astype(jnp.float32),
                        g2_ref[...], be2_ref[...], a2_ref[...])
            w3b = jnp.broadcast_to(w3_ref[...][None], (bblk, 1, h2_dim))
            score = jnp.einsum("bok,bkt->bot", w3b, h2d.astype(jnp.bfloat16),
                               preferred_element_type=jnp.float32) + b3_ref[...]
            out_ref[...] = score.astype(out_ref.dtype)


def _choose_tiling(T, tile_t=None, max_tile=512):
    """Pick (tile_t, padded_T): tile_t == T (single tile) or a multiple of 128."""
    if tile_t is None:
        if T <= max_tile:
            return T, T
        for t in range(max_tile, 0, -128):      # prefer an exact divisor (no padding)
            if T % t == 0:
                return t, T
        tile_t = max_tile                       # pad + mask the tail
    if tile_t >= T:
        return T, T
    assert tile_t % 128 == 0, "tile_t must be a multiple of 128 when tiling the sequence"
    t_pad = -(-T // tile_t) * tile_t
    return tile_t, t_pad


def _choose_block_b(B, tile_t, max_block_elems=4096):
    """Largest divisor of B keeping block_b * tile_t bounded (VMEM-safe on all gens)."""
    bb = max(1, min(B, max_block_elems // max(tile_t, 1)))
    while B % bb:
        bb -= 1
    return bb


def local_activation_unit(query, user_behavior, params, *, tile_t=None, block_b=None):
    """query: (B, 1, E), user_behavior: (B, T, E) -> attention_score: (B, T, 1)."""
    B, _, E = query.shape
    T = user_behavior.shape[1]
    H1 = params["w1"].shape[1]
    H2 = params["w2"].shape[1]

    tile_t, t_pad = _choose_tiling(T, tile_t)
    num_t = t_pad // tile_t
    if block_b is None:
        block_b = _choose_block_b(B, tile_t)
    assert B % block_b == 0

    # ---- pre-fold the query into the layer-1 weights (tiny XLA op, done once) ----
    # cat([q, ub, q-ub, q*ub]) @ W1 + b1  ==  W_eff[b] @ ub  +  c[b]   with
    #   W_eff[b] = (W1u - W1d + diag(q_b) W1p)^T,  c[b] = (W1q + W1d)^T q_b + b1.
    w1 = params["w1"]                                   # (4E, H1): blocks q|ub|q-ub|q*ub
    w1q, w1u, w1d, w1p = w1[0:E], w1[E:2 * E], w1[2 * E:3 * E], w1[3 * E:4 * E]
    q = query[:, 0, :]                                  # (B, E)
    w_eff = (w1u - w1d).T[None] + w1p.T[None] * q[:, None, :]            # (B, H1, E)
    c = (q @ (w1q + w1d))[:, :, None] + params["b1"].reshape(1, H1, 1)   # (B, H1, 1)

    # ---- layout plumbing: lane-dense behavior tensor, bf16 matmul operands -------
    # TODO(synk): produce (B, E, T) upstream (or allow_input_fusion) to drop this
    # standalone XLA transpose of user_behavior.
    ub_t = jnp.transpose(user_behavior, (0, 2, 1)).astype(jnp.bfloat16)  # (B, E, T)
    if t_pad != T:
        ub_t = jnp.pad(ub_t, ((0, 0), (0, 0), (0, t_pad - T)))

    f32 = jnp.float32
    w_eff16 = w_eff.astype(jnp.bfloat16)
    c = c.astype(f32)
    g1, be1, a1 = (params["g1"].T.astype(f32), params["be1"].T.astype(f32),
                   params["a1"].T.astype(f32))                           # (H1, 1)
    w2_16 = params["w2"].T.astype(jnp.bfloat16)                          # (H2, H1)
    b2, g2, be2, a2 = (params["b2"].T.astype(f32), params["g2"].T.astype(f32),
                       params["be2"].T.astype(f32), params["a2"].T.astype(f32))
    w3_16 = params["w3"].T.astype(jnp.bfloat16)                          # (1, H2)
    b3 = params["b3"].astype(f32)                                        # (1, 1)

    def _const_spec(shape):
        return pl.BlockSpec(shape, lambda p, b, t: (0,) * len(shape))

    grid = (3, B // block_b, num_t)                 # (phase, batch block, seq tile)
    kernel = functools.partial(lau_kernel, seq_len=T)

    out = pl.pallas_call(
        kernel,
        out_shape=jax.ShapeDtypeStruct((B, 1, t_pad), jnp.float32),
        grid=grid,
        in_specs=[
            pl.BlockSpec((block_b, E, tile_t), lambda p, b, t: (b, 0, t)),   # ub^T (bf16)
            pl.BlockSpec((block_b, H1, E), lambda p, b, t: (b, 0, 0)),       # W_eff (bf16)
            pl.BlockSpec((block_b, H1, 1), lambda p, b, t: (b, 0, 0)),       # c (f32)
            _const_spec((H1, 1)), _const_spec((H1, 1)), _const_spec((H1, 1)),  # g1 be1 a1
            _const_spec((H2, H1)),                                             # W2^T
            _const_spec((H2, 1)), _const_spec((H2, 1)),
            _const_spec((H2, 1)), _const_spec((H2, 1)),                        # b2 g2 be2 a2
            _const_spec((1, H2)), _const_spec((1, 1)),                         # W3^T b3
        ],
        # The output block is only written during phase 2; in phases 0/1 the (unread)
        # resident block is written back untouched -- tiny (B*T*4 B) and safe because
        # the phase axis is outermost and traversal is strictly sequential.
        out_specs=pl.BlockSpec((block_b, 1, tile_t), lambda p, b, t: (b, 0, t)),
        scratch_shapes=[
            pltpu.VMEM((H1, 1), jnp.float32),   # running mean of h1 (per feature)
            pltpu.VMEM((H1, 1), jnp.float32),   # running M2 of h1
            pltpu.VMEM((H2, 1), jnp.float32),   # running mean of h2
            pltpu.VMEM((H2, 1), jnp.float32),   # running M2 of h2
            pltpu.SMEM((2,), jnp.int32),        # accumulated sample counts (layer1, layer2)
        ],
        compiler_params=pltpu.CompilerParams(
            # The phase axis + shared global-BN scratch require strictly sequential
            # traversal; 'parallel' here would silently corrupt the statistics.
            dimension_semantics=("arbitrary", "arbitrary", "arbitrary"),
            vmem_limit_bytes=32 * 1024 * 1024,
        ),
    )(ub_t, w_eff16, c, g1, be1, a1, w2_16, b2, g2, be2, a2, w3_16, b3)

    return out[:, 0, :T][:, :, None]


def init_params(key, embedding_dim=4, hidden_unit=(80, 40)):
    """Deterministic init matching the module's __init__ shapes (PyTorch-style uniform)."""
    H1, H2 = hidden_unit
    in1 = 4 * embedding_dim

    def linear_init(k, fan_in, fan_out):
        kw, kb = jax.random.split(k)
        bound = 1.0 / (fan_in ** 0.5)
        w = jax.random.uniform(kw, (fan_in, fan_out), jnp.float32, -bound, bound)
        b = jax.random.uniform(kb, (1, fan_out), jnp.float32, -bound, bound)
        return w, b

    k1, k2, k3 = jax.random.split(key, 3)
    w1, b1 = linear_init(k1, in1, H1)
    w2, b2 = linear_init(k2, H1, H2)
    w3, b3 = linear_init(k3, H2, 1)
    return dict(
        w1=w1, b1=b1,
        g1=jnp.ones((1, H1), jnp.float32), be1=jnp.zeros((1, H1), jnp.float32),
        a1=jnp.zeros((1, H1), jnp.float32),          # Dice alpha init = 0
        w2=w2, b2=b2,
        g2=jnp.ones((1, H2), jnp.float32), be2=jnp.zeros((1, H2), jnp.float32),
        a2=jnp.zeros((1, H2), jnp.float32),
        w3=w3, b3=b3,
    )


def _local_activation_unit_ref(query, user_behavior, params):
    """Pure-JAX reference (mirrors the PyTorch forward, training-mode Dice)."""
    B, _, E = query.shape
    T = user_behavior.shape[1]
    q = jnp.broadcast_to(query, (B, T, E)).reshape(B * T, E)
    ub = user_behavior.reshape(B * T, E)
    x = jnp.concatenate([q, ub, q - ub, q * ub], axis=-1)

    def dice(h, g, be, a):
        mean = jnp.mean(h, axis=0, keepdims=True)
        var = jnp.mean((h - mean) ** 2, axis=0, keepdims=True)
        xn = (h - mean) * lax.rsqrt(var + DICE_EPS) * g + be
        p = jax.nn.sigmoid(xn)
        return (a * (1.0 - p) + p) * h

    h1 = dice(x @ params["w1"] + params["b1"], params["g1"], params["be1"], params["a1"])
    h2 = dice(h1 @ params["w2"] + params["b2"], params["g2"], params["be2"], params["a2"])
    return (h2 @ params["w3"] + params["b3"]).reshape(B, T, 1)


if __name__ == "__main__":
    key = jax.random.PRNGKey(0)
    k_q1, k_ub1, k_q2, k_ub2, k_p = jax.random.split(key, 5)

    E = 4
    params = init_params(k_p, embedding_dim=E, hidden_unit=(80, 40))

    # Case 1: DIN-default tiny shapes; block_b=2 gives two batch blocks per phase,
    # exercising the cross-block Welford combine of the BN statistics.
    B1, T1 = 4, 8
    q1 = jax.random.normal(k_q1, (B1, 1, E), jnp.float32)
    ub1 = jax.random.normal(k_ub1, (B1, T1, E), jnp.float32)
    out1 = local_activation_unit(q1, ub1, params, block_b=2)
    jax.block_until_ready(out1)
    assert out1.shape == (B1, T1, 1) and out1.dtype == jnp.float32
    ref1 = _local_activation_unit_ref(q1, ub1, params)
    # bf16 matmul operands (f32 accumulation): allow ~ a few % relative deviation.
    tol1 = 4e-2 + 8e-2 * float(jnp.max(jnp.abs(ref1)))
    err1 = float(jnp.max(jnp.abs(out1 - ref1)))
    assert err1 < tol1, f"case 1 mismatch: max_err={err1} tol={tol1}"

    # Case 2: sequence tiling with a zero-padded, masked tail (T=200 -> 2 tiles of 128).
    B2, T2 = 2, 200
    q2 = jax.random.normal(k_q2, (B2, 1, E), jnp.float32)
    ub2 = jax.random.normal(k_ub2, (B2, T2, E), jnp.float32)
    out2 = local_activation_unit(q2, ub2, params, tile_t=128)
    jax.block_until_ready(out2)
    assert out2.shape == (B2, T2, 1)
    ref2 = _local_activation_unit_ref(q2, ub2, params)
    tol2 = 4e-2 + 8e-2 * float(jnp.max(jnp.abs(ref2)))
    err2 = float(jnp.max(jnp.abs(out2 - ref2)))
    assert err2 < tol2, f"case 2 mismatch: max_err={err2} tol={tol2}"

    print("KERNEL_OK")
</pallas_src>

<mosaic_0001>
module attributes {stable_mosaic.version = 11 : i64} {
  func.func @lau_kernel(%arg0: i32, %arg1: i32, %arg2: i32, %arg3: memref<2x4x8xbf16, #tpu.memory_space<vmem>>, %arg4: memref<2x80x4xbf16, #tpu.memory_space<vmem>>, %arg5: memref<2x80x1xf32, #tpu.memory_space<vmem>>, %arg6: memref<80x1xf32, #tpu.memory_space<vmem>>, %arg7: memref<80x1xf32, #tpu.memory_space<vmem>>, %arg8: memref<80x1xf32, #tpu.memory_space<vmem>>, %arg9: memref<40x80xbf16, #tpu.memory_space<vmem>>, %arg10: memref<40x1xf32, #tpu.memory_space<vmem>>, %arg11: memref<40x1xf32, #tpu.memory_space<vmem>>, %arg12: memref<40x1xf32, #tpu.memory_space<vmem>>, %arg13: memref<40x1xf32, #tpu.memory_space<vmem>>, %arg14: memref<1x40xbf16, #tpu.memory_space<vmem>>, %arg15: memref<1x1xf32, #tpu.memory_space<vmem>>, %arg16: memref<2x1x8xf32, #tpu.memory_space<vmem>>, %arg17: memref<80x1xf32, #tpu.memory_space<vmem>>, %arg18: memref<80x1xf32, #tpu.memory_space<vmem>>, %arg19: memref<40x1xf32, #tpu.memory_space<vmem>>, %arg20: memref<40x1xf32, #tpu.memory_space<vmem>>, %arg21: memref<2xi32, #tpu.memory_space<smem>>) attributes {dimension_semantics = [#tpu.dimension_semantics<arbitrary>, #tpu.dimension_semantics<arbitrary>, #tpu.dimension_semantics<arbitrary>], iteration_bounds = array<i64: 3, 2, 1>, scalar_prefetch = 0 : i64, scratch_operands = 5 : i64, tpu.core_type = #tpu.core_type<tc>, window_params = [{transform_indices = @transform_0, window_bounds = array<i64: 2, 4, 8>}, {transform_indices = @transform_1, window_bounds = array<i64: 2, 80, 4>}, {transform_indices = @transform_2, window_bounds = array<i64: 2, 80, 1>}, {pipeline_mode = #tpu.pipeline_mode<synchronous>, transform_indices = @transform_3, window_bounds = array<i64: 80, 1>}, {pipeline_mode = #tpu.pipeline_mode<synchronous>, transform_indices = @transform_4, window_bounds = array<i64: 80, 1>}, {pipeline_mode = #tpu.pipeline_mode<synchronous>, transform_indices = @transform_5, window_bounds = array<i64: 80, 1>}, {pipeline_mode = #tpu.pipeline_mode<synchronous>, transform_indices = @transform_6, window_bounds = array<i64: 40, 80>}, {pipeline_mode = #tpu.pipeline_mode<synchronous>, transform_indices = @transform_7, window_bounds = array<i64: 40, 1>}, {pipeline_mode = #tpu.pipeline_mode<synchronous>, transform_indices = @transform_8, window_bounds = array<i64: 40, 1>}, {pipeline_mode = #tpu.pipeline_mode<synchronous>, transform_indices = @transform_9, window_bounds = array<i64: 40, 1>}, {pipeline_mode = #tpu.pipeline_mode<synchronous>, transform_indices = @transform_10, window_bounds = array<i64: 40, 1>}, {pipeline_mode = #tpu.pipeline_mode<synchronous>, transform_indices = @transform_11, window_bounds = array<i64: 1, 40>}, {pipeline_mode = #tpu.pipeline_mode<synchronous>, transform_indices = @transform_12, window_bounds = array<i64: 1, 1>}, {transform_indices = @transform_13, window_bounds = array<i64: 2, 1, 8>}]} {
    %c0_i32 = arith.constant 0 : i32
    %0 = arith.cmpi eq, %arg1, %c0_i32 : i32
    %c0_i32_0 = arith.constant 0 : i32
    %1 = arith.cmpi eq, %arg2, %c0_i32_0 : i32
    %2 = arith.andi %0, %1 : i1
    %c8_i32 = arith.constant 8 : i32
    %3 = arith.muli %arg2, %c8_i32 : i32
    %c8_i32_1 = arith.constant 8 : i32
    %4 = arith.subi %c8_i32_1, %3 : i32
    %c8_i32_2 = arith.constant 8 : i32
    %5 = arith.minsi %4, %c8_i32_2 : i32
    %6 = arith.sitofp %5 : i32 to f32
    %7 = tpu.iota {dimensions = array<i32: 2>} : vector<1x1x8xi32>
    %c8_i32_3 = arith.constant 8 : i32
    %8 = arith.subi %c8_i32_3, %3 : i32
    %9 = vector.broadcast %8 : i32 to vector<1x1x8xi32>
    %10 = arith.cmpi slt, %7, %9 : vector<1x1x8xi32>
    %c2_i32 = arith.constant 2 : i32
    %11 = arith.muli %5, %c2_i32 : i32
    %c0_i32_4 = arith.constant 0 : i32
    %12 = arith.cmpi eq, %arg0, %c0_i32_4 : i32
    %13 = arith.andi %12, %2 : i1
    %14 = arith.extui %13 : i1 to i32
    %c0_i32_5 = arith.constant 0 : i32
    %15 = arith.cmpi ne, %14, %c0_i32_5 : i32
    scf.if %15 {
      %cst = arith.constant 0.000000e+00 : f32
      %22 = vector.broadcast %cst : f32 to vector<80x1xf32>
      %c0 = arith.constant 0 : index
      %c0_9 = arith.constant 0 : index
      %23 = vector.load %arg17[%c0, %c0_9] : memref<80x1xf32, #tpu.memory_space<vmem>>, vector<80x1xf32>
      tpu.vector_store %arg17[%c0, %c0_9], %22 {strides = array<i32>} : memref<80x1xf32, #tpu.memory_space<vmem>>, vector<80x1xf32>,
      %cst_10 = arith.constant 0.000000e+00 : f32
      %24 = vector.broadcast %cst_10 : f32 to vector<80x1xf32>
      %c0_11 = arith.constant 0 : index
      %c0_12 = arith.constant 0 : index
      %25 = vector.load %arg18[%c0_11, %c0_12] : memref<80x1xf32, #tpu.memory_space<vmem>>, vector<80x1xf32>
      tpu.vector_store %arg18[%c0_11, %c0_12], %24 {strides = array<i32>} : memref<80x1xf32, #tpu.memory_space<vmem>>, vector<80x1xf32>,
      %cst_13 = arith.constant 0.000000e+00 : f32
      %26 = vector.broadcast %cst_13 : f32 to vector<40x1xf32>
      %c0_14 = arith.constant 0 : index
      %c0_15 = arith.constant 0 : index
      %27 = vector.load %arg19[%c0_14, %c0_15] : memref<40x1xf32, #tpu.memory_space<vmem>>, vector<40x1xf32>
      tpu.vector_store %arg19[%c0_14, %c0_15], %26 {strides = array<i32>} : memref<40x1xf32, #tpu.memory_space<vmem>>, vector<40x1xf32>,
      %cst_16 = arith.constant 0.000000e+00 : f32
      %28 = vector.broadcast %cst_16 : f32 to vector<40x1xf32>
      %c0_17 = arith.constant 0 : index
      %c0_18 = arith.constant 0 : index
      %29 = vector.load %arg20[%c0_17, %c0_18] : memref<40x1xf32, #tpu.memory_space<vmem>>, vector<40x1xf32>
      tpu.vector_store %arg20[%c0_17, %c0_18], %28 {strides = array<i32>} : memref<40x1xf32, #tpu.memory_space<vmem>>, vector<40x1xf32>,
      %c0_i32_19 = arith.constant 0 : i32
      %c0_20 = arith.constant 0 : index
      %30 = memref.load %arg21[%c0_20] : memref<2xi32, #tpu.memory_space<smem>>
      memref.store %c0_i32_19, %arg21[%c0_20] : memref<2xi32, #tpu.memory_space<smem>>
      %c0_i32_21 = arith.constant 0 : i32
      %c1 = arith.constant 1 : index
      %31 = memref.load %arg21[%c1] : memref<2xi32, #tpu.memory_space<smem>>
      memref.store %c0_i32_21, %arg21[%c1] : memref<2xi32, #tpu.memory_space<smem>>
    } else {
    }
    %c0_i32_6 = arith.constant 0 : i32
    %16 = arith.cmpi eq, %arg0, %c0_i32_6 : i32
    %17 = arith.extui %16 : i1 to i32
    %c0_i32_7 = arith.constant 0 : i32
    %18 = arith.cmpi ne, %17, %c0_i32_7 : i32
    scf.if %18 {
      %c0 = arith.constant 0 : index
      %c0_9 = arith.constant 0 : index
      %c0_10 = arith.constant 0 : index
      %22 = vector.load %arg3[%c0, %c0_9, %c0_10] : memref<2x4x8xbf16, #tpu.memory_space<vmem>>, vector<2x4x8xbf16>
      %23 = arith.extf %22 : vector<2x4x8xbf16> to vector<2x4x8xf32>
      %c0_11 = arith.constant 0 : index
      %c0_12 = arith.constant 0 : index
      %c0_13 = arith.constant 0 : index
      %24 = vector.load %arg4[%c0_11, %c0_12, %c0_13] : memref<2x80x4xbf16, #tpu.memory_space<vmem>>, vector<2x80x4xbf16>
      %25 = arith.extf %24 : vector<2x80x4xbf16> to vector<2x80x4xf32>
      %c0_14 = arith.constant 0 : index
      %c0_15 = arith.constant 0 : index
      %c0_16 = arith.constant 0 : index
      %26 = vector.load %arg5[%c0_14, %c0_15, %c0_16] : memref<2x80x1xf32, #tpu.memory_space<vmem>>, vector<2x80x1xf32>
      %cst = arith.constant 0.000000e+00 : f32
      %27 = vector.shape_cast %10 : vector<1x1x8xi1> to vector<1x1x8xi1>
      %28 = vector.broadcast %27 : vector<1x1x8xi1> to vector<2x4x8xi1>
      %29 = vector.broadcast %cst : f32 to vector<2x4x8xf32>
      %30 = arith.select %28, %23, %29 : vector<2x4x8xi1>, vector<2x4x8xf32>
      %cst_17 = arith.constant dense<0.000000e+00> : vector<2x4xf32>
      %31 = vector.multi_reduction <add>, %30, %cst_17 [2] : vector<2x4x8xf32> to vector<2x4xf32>
      %32 = vector.shape_cast %31 : vector<2x4xf32> to vector<2x4x1xf32>
      %33 = vector.broadcast %6 : f32 to vector<2x4x1xf32>
      %34 = arith.divf %32, %33 : vector<2x4x1xf32>
      %35 = vector.broadcast %34 : vector<2x4x1xf32> to vector<2x4x8xf32>
      %36 = arith.subf %23, %35 : vector<2x4x8xf32>
      %cst_18 = arith.constant 0.000000e+00 : f32
      %37 = vector.shape_cast %10 : vector<1x1x8xi1> to vector<1x1x8xi1>
      %38 = vector.broadcast %37 : vector<1x1x8xi1> to vector<2x4x8xi1>
      %39 = vector.broadcast %cst_18 : f32 to vector<2x4x8xf32>
      %40 = arith.select %38, %36, %39 : vector<2x4x8xi1>, vector<2x4x8xf32>
      %41 = arith.truncf %40 : vector<2x4x8xf32> to vector<2x4x8xbf16>
      "tpu.trace_start"() <{level = 10 : i32, message = "bet,bft->bef"}> : () -> ()
      %cst_19 = arith.constant dense<0.000000e+00> : vector<2x4x4xf32>
      %42 = tpu.matmul %41, %41, %cst_19 {dimension_numbers = #tpu.dot_dimension_numbers<[2], [2], [1], [1], [0, 0, 0, 1, 1, 1], [0], [0]>} : vector<2x4x8xbf16>, vector<2x4x8xbf16>, vector<2x4x4xf32> -> vector<2x4x4xf32>
      "tpu.trace_stop"() : () -> ()
      "tpu.trace_start"() <{level = 10 : i32, message = "bhe,bef->bhf"}> : () -> ()
      %cst_20 = arith.constant dense<0.000000e+00> : vector<2x80x1xf32>
      %43 = tpu.matmul %25, %34, %cst_20 {dimension_numbers = #tpu.dot_dimension_numbers<[2], [1], [1], [2], [0, 0, 0, 1, 1, 2], [0], [0]>} : vector<2x80x4xf32>, vector<2x4x1xf32>, vector<2x80x1xf32> -> vector<2x80x1xf32>
      "tpu.trace_stop"() : () -> ()
      %44 = arith.addf %43, %26 : vector<2x80x1xf32>
      "tpu.trace_start"() <{level = 10 : i32, message = "bhe,bef->bhf"}> : () -> ()
      %cst_21 = arith.constant dense<0.000000e+00> : vector<2x80x4xf32>
      %45 = tpu.matmul %25, %42, %cst_21 {dimension_numbers = #tpu.dot_dimension_numbers<[2], [1], [1], [2], [0, 0, 0, 1, 1, 2], [0], [0]>} : vector<2x80x4xf32>, vector<2x4x4xf32>, vector<2x80x4xf32> -> vector<2x80x4xf32>
      "tpu.trace_stop"() : () -> ()
      %46 = arith.mulf %45, %25 : vector<2x80x4xf32>
      %cst_22 = arith.constant dense<0.000000e+00> : vector<2x80xf32>
      %47 = vector.multi_reduction <add>, %46, %cst_22 [2] : vector<2x80x4xf32> to vector<2x80xf32>
      %48 = vector.shape_cast %47 : vector<2x80xf32> to vector<2x80x1xf32>
      %cst_23 = arith.constant dense<0.000000e+00> : vector<80x1xf32>
      %49 = vector.multi_reduction <add>, %44, %cst_23 [0] : vector<2x80x1xf32> to vector<80x1xf32>
      %cst_24 = arith.constant 2.000000e+00 : f32
      %50 = vector.broadcast %cst_24 : f32 to vector<80x1xf32>
      %51 = arith.divf %49, %50 : vector<80x1xf32>
      %52 = vector.shape_cast %51 : vector<80x1xf32> to vector<1x80x1xf32>
      %53 = vector.broadcast %52 : vector<1x80x1xf32> to vector<2x80x1xf32>
      %54 = arith.subf %44, %53 : vector<2x80x1xf32>
      %55 = arith.mulf %54, %54 : vector<2x80x1xf32>
      %56 = vector.broadcast %6 : f32 to vector<2x80x1xf32>
      %57 = arith.mulf %56, %55 : vector<2x80x1xf32>
      %58 = arith.addf %48, %57 : vector<2x80x1xf32>
      %cst_25 = arith.constant dense<0.000000e+00> : vector<80x1xf32>
      %59 = vector.multi_reduction <add>, %58, %cst_25 [0] : vector<2x80x1xf32> to vector<80x1xf32>
      %c0_26 = arith.constant 0 : index
      %60 = memref.load %arg21[%c0_26] : memref<2xi32, #tpu.memory_space<smem>>
      %61 = arith.addi %60, %11 : i32
      %62 = arith.sitofp %60 : i32 to f32
      %63 = arith.sitofp %11 : i32 to f32
      %64 = arith.sitofp %61 : i32 to f32
      %c0_27 = arith.constant 0 : index
      %c0_28 = arith.constant 0 : index
      %65 = vector.load %arg17[%c0_27, %c0_28] : memref<80x1xf32, #tpu.memory_space<vmem>>, vector<80x1xf32>
      %66 = arith.subf %51, %65 : vector<80x1xf32>
      %c0_29 = arith.constant 0 : index
      %c0_30 = arith.constant 0 : index
      %67 = vector.load %arg17[%c0_29, %c0_30] : memref<80x1xf32, #tpu.memory_space<vmem>>, vector<80x1xf32>
      %68 = arith.divf %63, %64 : f32
      %69 = vector.broadcast %68 : f32 to vector<80x1xf32>
      %70 = arith.mulf %66, %69 : vector<80x1xf32>
      %71 = arith.addf %67, %70 : vector<80x1xf32>
      %c0_31 = arith.constant 0 : index
      %c0_32 = arith.constant 0 : index
      %72 = vector.load %arg17[%c0_31, %c0_32] : memref<80x1xf32, #tpu.memory_space<vmem>>, vector<80x1xf32>
      tpu.vector_store %arg17[%c0_31, %c0_32], %71 {strides = array<i32>} : memref<80x1xf32, #tpu.memory_space<vmem>>, vector<80x1xf32>,
      %c0_33 = arith.constant 0 : index
      %c0_34 = arith.constant 0 : index
      %73 = vector.load %arg18[%c0_33, %c0_34] : memref<80x1xf32, #tpu.memory_space<vmem>>, vector<80x1xf32>
      %74 = arith.addf %73, %59 : vector<80x1xf32>
      %75 = arith.mulf %66, %66 : vector<80x1xf32>
      %76 = arith.mulf %62, %63 : f32
      %77 = arith.divf %76, %64 : f32
      %78 = vector.broadcast %77 : f32 to vector<80x1xf32>
      %79 = arith.mulf %75, %78 : vector<80x1xf32>
      %80 = arith.addf %74, %79 : vector<80x1xf32>
      %c0_35 = arith.constant 0 : index
      %c0_36 = arith.constant 0 : index
      %81 = vector.load %arg18[%c0_35, %c0_36] : memref<80x1xf32, #tpu.memory_space<vmem>>, vector<80x1xf32>
      tpu.vector_store %arg18[%c0_35, %c0_36], %80 {strides = array<i32>} : memref<80x1xf32, #tpu.memory_space<vmem>>, vector<80x1xf32>,
      %c0_37 = arith.constant 0 : index
      %82 = memref.load %arg21[%c0_37] : memref<2xi32, #tpu.memory_space<smem>>
      memref.store %61, %arg21[%c0_37] : memref<2xi32, #tpu.memory_space<smem>>
    } else {
    }
    %c1_i32 = arith.constant 1 : i32
    %19 = arith.cmpi sge, %arg0, %c1_i32 : i32
    %20 = arith.extui %19 : i1 to i32
    %c0_i32_8 = arith.constant 0 : i32
    %21 = arith.cmpi ne, %20, %c0_i32_8 : i32
    scf.if %21 {
      %c0 = arith.constant 0 : index
      %c0_9 = arith.constant 0 : index
      %c0_10 = arith.constant 0 : index
      %22 = vector.load %arg5[%c0, %c0_9, %c0_10] : memref<2x80x1xf32, #tpu.memory_space<vmem>>, vector<2x80x1xf32>
      %c0_11 = arith.constant 0 : index
      %c0_12 = arith.constant 0 : index
      %c0_13 = arith.constant 0 : index
      %23 = vector.load %arg4[%c0_11, %c0_12, %c0_13] : memref<2x80x4xbf16, #tpu.memory_space<vmem>>, vector<2x80x4xbf16>
      %c0_14 = arith.constant 0 : index
      %c0_15 = arith.constant 0 : index
      %c0_16 = arith.constant 0 : index
      %24 = vector.load %arg3[%c0_14, %c0_15, %c0_16] : memref<2x4x8xbf16, #tpu.memory_space<vmem>>, vector<2x4x8xbf16>
      "tpu.trace_start"() <{level = 10 : i32, message = "bhe,bet->bht"}> : () -> ()
      %cst = arith.constant dense<0.000000e+00> : vector<2x80x8xf32>
      %25 = tpu.matmul %23, %24, %cst {dimension_numbers = #tpu.dot_dimension_numbers<[2], [1], [1], [2], [0, 0, 0, 1, 1, 2], [0], [0]>} : vector<2x80x4xbf16>, vector<2x4x8xbf16>, vector<2x80x8xf32> -> vector<2x80x8xf32>
      "tpu.trace_stop"() : () -> ()
      %26 = vector.broadcast %22 : vector<2x80x1xf32> to vector<2x80x8xf32>
      %27 = arith.addf %25, %26 : vector<2x80x8xf32>
      %c0_17 = arith.constant 0 : index
      %c0_18 = arith.constant 0 : index
      %28 = vector.load %arg17[%c0_17, %c0_18] : memref<80x1xf32, #tpu.memory_space<vmem>>, vector<80x1xf32>
      %c0_19 = arith.constant 0 : index
      %c0_20 = arith.constant 0 : index
      %29 = vector.load %arg18[%c0_19, %c0_20] : memref<80x1xf32, #tpu.memory_space<vmem>>, vector<80x1xf32>
      %c0_21 = arith.constant 0 : index
      %30 = memref.load %arg21[%c0_21] : memref<2xi32, #tpu.memory_space<smem>>
      %31 = arith.sitofp %30 : i32 to f32
      %c0_22 = arith.constant 0 : index
      %c0_23 = arith.constant 0 : index
      %32 = vector.load %arg6[%c0_22, %c0_23] : memref<80x1xf32, #tpu.memory_space<vmem>>, vector<80x1xf32>
      %c0_24 = arith.constant 0 : index
      %c0_25 = arith.constant 0 : index
      %33 = vector.load %arg7[%c0_24, %c0_25] : memref<80x1xf32, #tpu.memory_space<vmem>>, vector<80x1xf32>
      %c0_26 = arith.constant 0 : index
      %c0_27 = arith.constant 0 : index
      %34 = vector.load %arg8[%c0_26, %c0_27] : memref<80x1xf32, #tpu.memory_space<vmem>>, vector<80x1xf32>
      %35 = vector.broadcast %31 : f32 to vector<80x1xf32>
      %36 = arith.divf %29, %35 : vector<80x1xf32>
      %cst_28 = arith.constant 0.000000e+00 : f32
      %37 = vector.broadcast %cst_28 : f32 to vector<80x1xf32>
      %38 = arith.maximumf %36, %37 : vector<80x1xf32>
      %39 = vector.shape_cast %28 : vector<80x1xf32> to vector<1x80x1xf32>
      %40 = vector.broadcast %39 : vector<1x80x1xf32> to vector<2x80x8xf32>
      %41 = arith.subf %27, %40 : vector<2x80x8xf32>
      %cst_29 = arith.constant 9.99999993E-9 : f32
      %42 = vector.broadcast %cst_29 : f32 to vector<80x1xf32>
      %43 = arith.addf %38, %42 : vector<80x1xf32>
      %44 = math.rsqrt %43 : vector<80x1xf32>
      %45 = vector.shape_cast %44 : vector<80x1xf32> to vector<1x80x1xf32>
      %46 = vector.broadcast %45 : vector<1x80x1xf32> to vector<2x80x8xf32>
      %47 = arith.mulf %41, %46 : vector<2x80x8xf32>
      %48 = vector.shape_cast %32 : vector<80x1xf32> to vector<1x80x1xf32>
      %49 = vector.broadcast %48 : vector<1x80x1xf32> to vector<2x80x8xf32>
      %50 = arith.mulf %47, %49 : vector<2x80x8xf32>
      %51 = vector.shape_cast %33 : vector<80x1xf32> to vector<1x80x1xf32>
      %52 = vector.broadcast %51 : vector<1x80x1xf32> to vector<2x80x8xf32>
      %53 = arith.addf %50, %52 : vector<2x80x8xf32>
      %54 = arith.negf %53 : vector<2x80x8xf32>
      %55 = math.exp %54 : vector<2x80x8xf32>
      %cst_30 = arith.constant 1.000000e+00 : f32
      %56 = vector.broadcast %cst_30 : f32 to vector<2x80x8xf32>
      %57 = arith.addf %56, %55 : vector<2x80x8xf32>
      %58 = arith.divf %56, %57 : vector<2x80x8xf32>
      %cst_31 = arith.constant 1.000000e+00 : f32
      %59 = vector.broadcast %cst_31 : f32 to vector<2x80x8xf32>
      %60 = arith.subf %59, %58 : vector<2x80x8xf32>
      %61 = vector.shape_cast %34 : vector<80x1xf32> to vector<1x80x1xf32>
      %62 = vector.broadcast %61 : vector<1x80x1xf32> to vector<2x80x8xf32>
      %63 = arith.mulf %62, %60 : vector<2x80x8xf32>
      %64 = arith.addf %63, %58 : vector<2x80x8xf32>
      %65 = arith.mulf %64, %27 : vector<2x80x8xf32>
      %c0_32 = arith.constant 0 : index
      %c0_33 = arith.constant 0 : index
      %66 = vector.load %arg9[%c0_32, %c0_33] : memref<40x80xbf16, #tpu.memory_space<vmem>>, vector<40x80xbf16>
      %67 = vector.shape_cast %66 : vector<40x80xbf16> to vector<1x40x80xbf16>
      %68 = vector.shape_cast %67 : vector<1x40x80xbf16> to vector<1x40x80xbf16>
      %69 = vector.broadcast %68 : vector<1x40x80xbf16> to vector<2x40x80xbf16>
      %70 = arith.truncf %65 : vector<2x80x8xf32> to vector<2x80x8xbf16>
      "tpu.trace_start"() <{level = 10 : i32, message = "bkh,bht->bkt"}> : () -> ()
      %cst_34 = arith.constant dense<0.000000e+00> : vector<2x40x8xf32>
      %71 = tpu.matmul %69, %70, %cst_34 {dimension_numbers = #tpu.dot_dimension_numbers<[2], [1], [1], [2], [0, 0, 0, 1, 1, 2], [0], [0]>} : vector<2x40x80xbf16>, vector<2x80x8xbf16>, vector<2x40x8xf32> -> vector<2x40x8xf32>
      "tpu.trace_stop"() : () -> ()
      %c0_35 = arith.constant 0 : index
      %c0_36 = arith.constant 0 : index
      %72 = vector.load %arg10[%c0_35, %c0_36] : memref<40x1xf32, #tpu.memory_space<vmem>>, vector<40x1xf32>
      %73 = vector.shape_cast %72 : vector<40x1xf32> to vector<1x40x1xf32>
      %74 = vector.broadcast %73 : vector<1x40x1xf32> to vector<2x40x8xf32>
      %75 = arith.addf %71, %74 : vector<2x40x8xf32>
      %c1_i32_37 = arith.constant 1 : i32
      %76 = arith.cmpi eq, %arg0, %c1_i32_37 : i32
      %77 = arith.extui %76 : i1 to i32
      %c0_i32_38 = arith.constant 0 : i32
      %78 = arith.cmpi ne, %77, %c0_i32_38 : i32
      scf.if %78 {
        %cst_41 = arith.constant 0.000000e+00 : f32
        %82 = vector.shape_cast %10 : vector<1x1x8xi1> to vector<1x1x8xi1>
        %83 = vector.broadcast %82 : vector<1x1x8xi1> to vector<2x40x8xi1>
        %84 = vector.broadcast %cst_41 : f32 to vector<2x40x8xf32>
        %85 = arith.select %83, %75, %84 : vector<2x40x8xi1>, vector<2x40x8xf32>
        %cst_42 = arith.constant dense<0.000000e+00> : vector<40x8xf32>
        %86 = vector.multi_reduction <add>, %85, %cst_42 [0] : vector<2x40x8xf32> to vector<40x8xf32>
        %cst_43 = arith.constant dense<0.000000e+00> : vector<40xf32>
        %87 = vector.multi_reduction <add>, %86, %cst_43 [1] : vector<40x8xf32> to vector<40xf32>
        %88 = vector.shape_cast %87 : vector<40xf32> to vector<40x1xf32>
        %cst_44 = arith.constant 2.000000e+00 : f32
        %89 = arith.mulf %6, %cst_44 : f32
        %90 = vector.broadcast %89 : f32 to vector<40x1xf32>
        %91 = arith.divf %88, %90 : vector<40x1xf32>
        %92 = vector.shape_cast %91 : vector<40x1xf32> to vector<1x40x1xf32>
        %93 = vector.broadcast %92 : vector<1x40x1xf32> to vector<2x40x8xf32>
        %94 = arith.subf %75, %93 : vector<2x40x8xf32>
        %cst_45 = arith.constant 0.000000e+00 : f32
        %95 = vector.shape_cast %10 : vector<1x1x8xi1> to vector<1x1x8xi1>
        %96 = vector.broadcast %95 : vector<1x1x8xi1> to vector<2x40x8xi1>
        %97 = vector.broadcast %cst_45 : f32 to vector<2x40x8xf32>
        %98 = arith.select %96, %94, %97 : vector<2x40x8xi1>, vector<2x40x8xf32>
        %99 = arith.mulf %98, %98 : vector<2x40x8xf32>
        %cst_46 = arith.constant dense<0.000000e+00> : vector<40x8xf32>
        %100 = vector.multi_reduction <add>, %99, %cst_46 [0] : vector<2x40x8xf32> to vector<40x8xf32>
        %cst_47 = arith.constant dense<0.000000e+00> : vector<40xf32>
        %101 = vector.multi_reduction <add>, %100, %cst_47 [1] : vector<40x8xf32> to vector<40xf32>
        %102 = vector.shape_cast %101 : vector<40xf32> to vector<40x1xf32>
        %c1 = arith.constant 1 : index
        %103 = memref.load %arg21[%c1] : memref<2xi32, #tpu.memory_space<smem>>
        %104 = arith.addi %103, %11 : i32
        %105 = arith.sitofp %103 : i32 to f32
        %106 = arith.sitofp %11 : i32 to f32
        %107 = arith.sitofp %104 : i32 to f32
        %c0_48 = arith.constant 0 : index
        %c0_49 = arith.constant 0 : index
        %108 = vector.load %arg19[%c0_48, %c0_49] : memref<40x1xf32, #tpu.memory_space<vmem>>, vector<40x1xf32>
        %109 = arith.subf %91, %108 : vector<40x1xf32>
        %c0_50 = arith.constant 0 : index
        %c0_51 = arith.constant 0 : index
        %110 = vector.load %arg19[%c0_50, %c0_51] : memref<40x1xf32, #tpu.memory_space<vmem>>, vector<40x1xf32>
        %111 = arith.divf %106, %107 : f32
        %112 = vector.broadcast %111 : f32 to vector<40x1xf32>
        %113 = arith.mulf %109, %112 : vector<40x1xf32>
        %114 = arith.addf %110, %113 : vector<40x1xf32>
        %c0_52 = arith.constant 0 : index
        %c0_53 = arith.constant 0 : index
        %115 = vector.load %arg19[%c0_52, %c0_53] : memref<40x1xf32, #tpu.memory_space<vmem>>, vector<40x1xf32>
        tpu.vector_store %arg19[%c0_52, %c0_53], %114 {strides = array<i32>} : memref<40x1xf32, #tpu.memory_space<vmem>>, vector<40x1xf32>,
        %c0_54 = arith.constant 0 : index
        %c0_55 = arith.constant 0 : index
        %116 = vector.load %arg20[%c0_54, %c0_55] : memref<40x1xf32, #tpu.memory_space<vmem>>, vector<40x1xf32>
        %117 = arith.addf %116, %102 : vector<40x1xf32>
        %118 = arith.mulf %109, %109 : vector<40x1xf32>
        %119 = arith.mulf %105, %106 : f32
        %120 = arith.divf %119, %107 : f32
        %121 = vector.broadcast %120 : f32 to vector<40x1xf32>
        %122 = arith.mulf %118, %121 : vector<40x1xf32>
        %123 = arith.addf %117, %122 : vector<40x1xf32>
        %c0_56 = arith.constant 0 : index
        %c0_57 = arith.constant 0 : index
        %124 = vector.load %arg20[%c0_56, %c0_57] : memref<40x1xf32, #tpu.memory_space<vmem>>, vector<40x1xf32>
        tpu.vector_store %arg20[%c0_56, %c0_57], %123 {strides = array<i32>} : memref<40x1xf32, #tpu.memory_space<vmem>>, vector<40x1xf32>,
        %c1_58 = arith.constant 1 : index
        %125 = memref.load %arg21[%c1_58] : memref<2xi32, #tpu.memory_space<smem>>
        memref.store %104, %arg21[%c1_58] : memref<2xi32, #tpu.memory_space<smem>>
      } else {
      }
      %c2_i32_39 = arith.constant 2 : i32
      %79 = arith.cmpi eq, %arg0, %c2_i32_39 : i32
      %80 = arith.extui %79 : i1 to i32
      %c0_i32_40 = arith.constant 0 : i32
      %81 = arith.cmpi ne, %80, %c0_i32_40 : i32
      scf.if %81 {
        %c0_41 = arith.constant 0 : index
        %c0_42 = arith.constant 0 : index
        %82 = vector.load %arg19[%c0_41, %c0_42] : memref<40x1xf32, #tpu.memory_space<vmem>>, vector<40x1xf32>
        %c0_43 = arith.constant 0 : index
        %c0_44 = arith.constant 0 : index
        %83 = vector.load %arg20[%c0_43, %c0_44] : memref<40x1xf32, #tpu.memory_space<vmem>>, vector<40x1xf32>
        %c1 = arith.constant 1 : index
        %84 = memref.load %arg21[%c1] : memref<2xi32, #tpu.memory_space<smem>>
        %85 = arith.sitofp %84 : i32 to f32
        %c0_45 = arith.constant 0 : index
        %c0_46 = arith.constant 0 : index
        %86 = vector.load %arg11[%c0_45, %c0_46] : memref<40x1xf32, #tpu.memory_space<vmem>>, vector<40x1xf32>
        %c0_47 = arith.constant 0 : index
        %c0_48 = arith.constant 0 : index
        %87 = vector.load %arg12[%c0_47, %c0_48] : memref<40x1xf32, #tpu.memory_space<vmem>>, vector<40x1xf32>
        %c0_49 = arith.constant 0 : index
        %c0_50 = arith.constant 0 : index
        %88 = vector.load %arg13[%c0_49, %c0_50] : memref<40x1xf32, #tpu.memory_space<vmem>>, vector<40x1xf32>
        %89 = vector.broadcast %85 : f32 to vector<40x1xf32>
        %90 = arith.divf %83, %89 : vector<40x1xf32>
        %cst_51 = arith.constant 0.000000e+00 : f32
        %91 = vector.broadcast %cst_51 : f32 to vector<40x1xf32>
        %92 = arith.maximumf %90, %91 : vector<40x1xf32>
        %93 = vector.shape_cast %82 : vector<40x1xf32> to vector<1x40x1xf32>
        %94 = vector.broadcast %93 : vector<1x40x1xf32> to vector<2x40x8xf32>
        %95 = arith.subf %75, %94 : vector<2x40x8xf32>
        %cst_52 = arith.constant 9.99999993E-9 : f32
        %96 = vector.broadcast %cst_52 : f32 to vector<40x1xf32>
        %97 = arith.addf %92, %96 : vector<40x1xf32>
        %98 = math.rsqrt %97 : vector<40x1xf32>
        %99 = vector.shape_cast %98 : vector<40x1xf32> to vector<1x40x1xf32>
        %100 = vector.broadcast %99 : vector<1x40x1xf32> to vector<2x40x8xf32>
        %101 = arith.mulf %95, %100 : vector<2x40x8xf32>
        %102 = vector.shape_cast %86 : vector<40x1xf32> to vector<1x40x1xf32>
        %103 = vector.broadcast %102 : vector<1x40x1xf32> to vector<2x40x8xf32>
        %104 = arith.mulf %101, %103 : vector<2x40x8xf32>
        %105 = vector.shape_cast %87 : vector<40x1xf32> to vector<1x40x1xf32>
        %106 = vector.broadcast %105 : vector<1x40x1xf32> to vector<2x40x8xf32>
        %107 = arith.addf %104, %106 : vector<2x40x8xf32>
        %108 = arith.negf %107 : vector<2x40x8xf32>
        %109 = math.exp %108 : vector<2x40x8xf32>
        %cst_53 = arith.constant 1.000000e+00 : f32
        %110 = vector.broadcast %cst_53 : f32 to vector<2x40x8xf32>
        %111 = arith.addf %110, %109 : vector<2x40x8xf32>
        %112 = arith.divf %110, %111 : vector<2x40x8xf32>
        %cst_54 = arith.constant 1.000000e+00 : f32
        %113 = vector.broadcast %cst_54 : f32 to vector<2x40x8xf32>
        %114 = arith.subf %113, %112 : vector<2x40x8xf32>
        %115 = vector.shape_cast %88 : vector<40x1xf32> to vector<1x40x1xf32>
        %116 = vector.broadcast %115 : vector<1x40x1xf32> to vector<2x40x8xf32>
        %117 = arith.mulf %116, %114 : vector<2x40x8xf32>
        %118 = arith.addf %117, %112 : vector<2x40x8xf32>
        %119 = arith.mulf %118, %75 : vector<2x40x8xf32>
        %c0_55 = arith.constant 0 : index
        %c0_56 = arith.constant 0 : index
        %120 = vector.load %arg14[%c0_55, %c0_56] : memref<1x40xbf16, #tpu.memory_space<vmem>>, vector<1x40xbf16>
        %121 = vector.shape_cast %120 : vector<1x40xbf16> to vector<1x1x40xbf16>
        %122 = vector.shape_cast %121 : vector<1x1x40xbf16> to vector<1x1x40xbf16>
        %123 = vector.broadcast %122 : vector<1x1x40xbf16> to vector<2x1x40xbf16>
        %124 = arith.truncf %119 : vector<2x40x8xf32> to vector<2x40x8xbf16>
        "tpu.trace_start"() <{level = 10 : i32, message = "bok,bkt->bot"}> : () -> ()
        %cst_57 = arith.constant dense<0.000000e+00> : vector<2x1x8xf32>
        %125 = tpu.matmul %123, %124, %cst_57 {dimension_numbers = #tpu.dot_dimension_numbers<[2], [1], [1], [2], [0, 0, 0, 1, 1, 2], [0], [0]>} : vector<2x1x40xbf16>, vector<2x40x8xbf16>, vector<2x1x8xf32> -> vector<2x1x8xf32>
        "tpu.trace_stop"() : () -> ()
        %c0_58 = arith.constant 0 : index
        %c0_59 = arith.constant 0 : index
        %126 = vector.load %arg15[%c0_58, %c0_59] : memref<1x1xf32, #tpu.memory_space<vmem>>, vector<1x1xf32>
        %127 = vector.shape_cast %126 : vector<1x1xf32> to vector<1x1x1xf32>
        %128 = vector.broadcast %127 : vector<1x1x1xf32> to vector<2x1x8xf32>
        %129 = arith.addf %125, %128 : vector<2x1x8xf32>
        %c0_60 = arith.constant 0 : index
        %c0_61 = arith.constant 0 : index
        %c0_62 = arith.constant 0 : index
        %130 = vector.load %arg16[%c0_60, %c0_61, %c0_62] : memref<2x1x8xf32, #tpu.memory_space<vmem>>, vector<2x1x8xf32>
        tpu.vector_store %arg16[%c0_60, %c0_61, %c0_62], %129 {strides = array<i32>} : memref<2x1x8xf32, #tpu.memory_space<vmem>>, vector<2x1x8xf32>,
      } else {
      }
    } else {
    }
    return
  }
  func.func @transform_0(%arg0: i32, %arg1: i32, %arg2: i32) -> (i32, i32, i32) {
    %c0_i32 = arith.constant 0 : i32
    %c0_i32_0 = arith.constant 0 : i32
    return %arg1, %c0_i32, %arg2 : i32, i32, i32
  }
  func.func @transform_1(%arg0: i32, %arg1: i32, %arg2: i32) -> (i32, i32, i32) {
    %c0_i32 = arith.constant 0 : i32
    %c0_i32_0 = arith.constant 0 : i32
    %c0_i32_1 = arith.constant 0 : i32
    return %arg1, %c0_i32, %c0_i32_0 : i32, i32, i32
  }
  func.func @transform_2(%arg0: i32, %arg1: i32, %arg2: i32) -> (i32, i32, i32) {
    %c0_i32 = arith.constant 0 : i32
    %c0_i32_0 = arith.constant 0 : i32
    %c0_i32_1 = arith.constant 0 : i32
    return %arg1, %c0_i32, %c0_i32_0 : i32, i32, i32
  }
  func.func @transform_3(%arg0: i32, %arg1: i32, %arg2: i32) -> (i32, i32) {
    %c0_i32 = arith.constant 0 : i32
    %c0_i32_0 = arith.constant 0 : i32
    %c0_i32_1 = arith.constant 0 : i32
    return %c0_i32, %c0_i32_0 : i32, i32
  }
  func.func @transform_4(%arg0: i32, %arg1: i32, %arg2: i32) -> (i32, i32) {
    %c0_i32 = arith.constant 0 : i32
    %c0_i32_0 = arith.constant 0 : i32
    %c0_i32_1 = arith.constant 0 : i32
    return %c0_i32, %c0_i32_0 : i32, i32
  }
  func.func @transform_5(%arg0: i32, %arg1: i32, %arg2: i32) -> (i32, i32) {
    %c0_i32 = arith.constant 0 : i32
    %c0_i32_0 = arith.constant 0 : i32
    %c0_i32_1 = arith.constant 0 : i32
    return %c0_i32, %c0_i32_0 : i32, i32
  }
  func.func @transform_6(%arg0: i32, %arg1: i32, %arg2: i32) -> (i32, i32) {
    %c0_i32 = arith.constant 0 : i32
    %c0_i32_0 = arith.constant 0 : i32
    %c0_i32_1 = arith.constant 0 : i32
    return %c0_i32, %c0_i32_0 : i32, i32
  }
  func.func @transform_7(%arg0: i32, %arg1: i32, %arg2: i32) -> (i32, i32) {
    %c0_i32 = arith.constant 0 : i32
    %c0_i32_0 = arith.constant 0 : i32
    %c0_i32_1 = arith.constant 0 : i32
    return %c0_i32, %c0_i32_0 : i32, i32
  }
  func.func @transform_8(%arg0: i32, %arg1: i32, %arg2: i32) -> (i32, i32) {
    %c0_i32 = arith.constant 0 : i32
    %c0_i32_0 = arith.constant 0 : i32
    %c0_i32_1 = arith.constant 0 : i32
    return %c0_i32, %c0_i32_0 : i32, i32
  }
  func.func @transform_9(%arg0: i32, %arg1: i32, %arg2: i32) -> (i32, i32) {
    %c0_i32 = arith.constant 0 : i32
    %c0_i32_0 = arith.constant 0 : i32
    %c0_i32_1 = arith.constant 0 : i32
    return %c0_i32, %c0_i32_0 : i32, i32
  }
  func.func @transform_10(%arg0: i32, %arg1: i32, %arg2: i32) -> (i32, i32) {
    %c0_i32 = arith.constant 0 : i32
    %c0_i32_0 = arith.constant 0 : i32
    %c0_i32_1 = arith.constant 0 : i32
    return %c0_i32, %c0_i32_0 : i32, i32
  }
  func.func @transform_11(%arg0: i32, %arg1: i32, %arg2: i32) -> (i32, i32) {
    %c0_i32 = arith.constant 0 : i32
    %c0_i32_0 = arith.constant 0 : i32
    %c0_i32_1 = arith.constant 0 : i32
    return %c0_i32, %c0_i32_0 : i32, i32
  }
  func.func @transform_12(%arg0: i32, %arg1: i32, %arg2: i32) -> (i32, i32) {
    %c0_i32 = arith.constant 0 : i32
    %c0_i32_0 = arith.constant 0 : i32
    %c0_i32_1 = arith.constant 0 : i32
    return %c0_i32, %c0_i32_0 : i32, i32
  }
  func.func @transform_13(%arg0: i32, %arg1: i32, %arg2: i32) -> (i32, i32, i32) {
    %c0_i32 = arith.constant 0 : i32
    %c0_i32_0 = arith.constant 0 : i32
    return %arg1, %c0_i32, %arg2 : i32, i32, i32
  }
}

</mosaic_0001>

<llo_original>
// kernel: tpu_custom_call.1
$region0: #{tpu_custom_call.1}
  #allocation0 [shape = 'u32[]', space=smem, size = 0x4, offset = 0x4, fixed_abs, tag = 'smem constant byte address 0x4 - core index']
  #allocation1 [shape = 'u32[144,128]{1,0:T(1,128)}', space=vmem, size = 0x12000, scoped, tag = 'internal scratch']
  #allocation2 [shape = 'f32[80,1]{1,0:T(8,128)}', space=vmem, size = 0xa000, scoped, tag = 'scratch operand']
  #allocation3 [shape = 'f32[80,1]{1,0:T(8,128)}', space=vmem, size = 0xa000, scoped, tag = 'scratch operand']
  #allocation4 [shape = 'f32[40,1]{1,0:T(8,128)}', space=vmem, size = 0x5000, scoped, tag = 'scratch operand']
  #allocation5 [shape = 'f32[40,1]{1,0:T(8,128)}', space=vmem, size = 0x5000, scoped, tag = 'scratch operand']
  #allocation6 [shape = 's32[2]{0:T(128)}', space=smem, size = 0x200, scoped, tag = 'scratch operand']
  #allocation7 [shape = 'f32[1,1]{1,0:T(1,128)S(1)}', space=vmem, size = 0x200, scoped, tag = 'scoped memory for tpu_custom_call.1']
  %s0 = inlined_call_operand.vmem [shape: bf16[4,4,8], index: 0, kind: input, shape index: {}]
  %s1 = inlined_call_operand.vmem [shape: bf16[4,80,4], index: 1, kind: input, shape index: {}]
  %s2 = inlined_call_operand.vmem [shape: f32[4,80,1], index: 2, kind: input, shape index: {}]
  %s3 = inlined_call_operand.vmem [shape: f32[80,1], index: 3, kind: input, shape index: {}]
  %s4 = inlined_call_operand.vmem [shape: f32[80,1], index: 4, kind: input, shape index: {}]
  %s5 = inlined_call_operand.vmem [shape: f32[80,1], index: 5, kind: input, shape index: {}]
  %s6 = inlined_call_operand.vmem [shape: bf16[40,80], index: 6, kind: input, shape index: {}]
  %s7 = inlined_call_operand.vmem [shape: f32[40,1], index: 7, kind: input, shape index: {}]
  %s8 = inlined_call_operand.vmem [shape: f32[40,1], index: 8, kind: input, shape index: {}]
  %s9 = inlined_call_operand.vmem [shape: f32[40,1], index: 9, kind: input, shape index: {}]
  %s10 = inlined_call_operand.vmem [shape: f32[40,1], index: 10, kind: input, shape index: {}]
  %s11 = inlined_call_operand.vmem [shape: bf16[1,40], index: 11, kind: input, shape index: {}]
  %s12 = inlined_call_operand.<no memory space> [shape: f32[1,1], index: 12, kind: input, shape index: {}]
  %s13 = inlined_call_operand.hbm [shape: f32[4,1,8], index: 13, kind: output, shape index: {}]
  %s14 = sld [smem:[#allocation0]]
  $region105: #{tpu_custom_call.1} parent=0
    _
  %s16 = ssub.s32 1, %s14
  %s17 = scalar_select 0, %s16, %s14
  %v18 = vstv %s12
  %19 = vst [vmem:[#allocation7] sm:$0x1] %v18
  $region1: #{tpu_custom_call.1} parent=0
    #allocation8 [shape = 'u8[2048]{0}', space=vmem, size = 0x800, scoped, tag = 'output window, operand 0']
    #allocation9 [shape = 's32[2]{0}', space=sflag, size = 0x8, scoped, tag = 'scoped memory for tpu_custom_call.1']
    %20 = vsyncpa [#allocation9], 0
    %s21 = scalar_lea.sflag [#allocation9], 1
    %22 = vsyncpa %s21, 0
    loop: start=0, step=1, limit=8
    $region2: #{tpu_custom_call.1} parent=1 // loop_pre_header
      _
    $region3: #{tpu_custom_call.1} parent=1 // loop_header
      %s24 = sphi 0, %s28
      %p25 = scmp.ge.s32.totalorder %s24, 8
      %s31 = sphi 0, %s50
      %s32 = sphi 0, %s46
      %s33 = sphi 0, %s42
      %s34 = sphi 0, %s31
      %s35 = sphi 0, %s32
      %s36 = sphi 0, %s33
      %s37 = sphi 0, %s34
      %s38 = sphi 0, %s35
      %s39 = sphi 0, %s36
      %s55 = sphi 0, %s57
      %s58 = sphi 0, %s55
      %s59 = sphi 0, %s58
      %s75 = sphi 0, %s59
      %s81 = sphi 0, %s83
      %s84 = sphi 0, %s81
      %s85 = sphi 0, %s84
      %s101 = sphi 0, %s85
      %s107 = sphi 0, %s109
      %s110 = sphi 0, %s107
      %s111 = sphi 0, %s110
      %s127 = sphi 0, %s111
      %s131 = sphi 0, %s131
      %s133 = sphi 0, %s131
      %s134 = sphi 0, %s133
      %s148 = sphi 0, %s134
      %s152 = sphi 0, %s152
      %s154 = sphi 0, %s152
      %s155 = sphi 0, %s154
      %s169 = sphi 0, %s155
      %s173 = sphi 0, %s173
      %s175 = sphi 0, %s173
      %s176 = sphi 0, %s175
      %s190 = sphi 0, %s176
      %s194 = sphi 0, %s194
      %s196 = sphi 0, %s194
      %s197 = sphi 0, %s196
      %s211 = sphi 0, %s197
      %s215 = sphi 0, %s215
      %s217 = sphi 0, %s215
      %s218 = sphi 0, %s217
      %s232 = sphi 0, %s218
      %s236 = sphi 0, %s236
      %s238 = sphi 0, %s236
      %s239 = sphi 0, %s238
      %s253 = sphi 0, %s239
      %s257 = sphi 0, %s257
      %s259 = sphi 0, %s257
      %s260 = sphi 0, %s259
      %s274 = sphi 0, %s260
      %s278 = sphi 0, %s278
      %s280 = sphi 0, %s278
      %s281 = sphi 0, %s280
      %s295 = sphi 0, %s281
      %s299 = sphi 0, %s299
      %s301 = sphi 0, %s299
      %s302 = sphi 0, %s301
      %s316 = sphi 0, %s302
      %s320 = sphi 0, %s320
      %s322 = sphi 0, %s320
      %s323 = sphi 0, %s322
      %s337 = sphi 0, %s323
      %s345 = sphi 0, %s347
      %s348 = sphi 0, %s345
      %s349 = sphi 0, %s348
      %s365 = sphi 0, %s349
    $region4: #{tpu_custom_call.1} parent=1 // loop_header_branch
      %27 = sbr.rel (%p25) target = $region8
    $region5: #{tpu_custom_call.1} parent=1 // loop_body
      %s29 = ssub.s32 %s24, 1
      %s30 = ssub.s32 %s24, 2
      %s40 = sadd.s32 1, %s33
      %p41 = scmp.ge.s32.totalorder %s40, 1
      %s42 = scalar_select %p41, 0, %s40
      %s43 = sadd.s32 1, %s32
      %s44 = scalar_select %p41, %s43, %s32
      %p45 = scmp.ge.s32.totalorder %s44, 2
      %s46 = scalar_select %p45, 0, %s44
      %s47 = sadd.s32 1, %s31
      %s48 = scalar_select %p45, %s47, %s31
      %p49 = scmp.ge.s32.totalorder %s48, 3
      %s50 = scalar_select %p49, 0, %s48
      %s51 = ssub.s32 %s32, %s46
      %s52 = ssub.s32 %s33, %s42
      %s53 = sor.u32 %s51, %s52
      %p54 = scmp.eq.s32.totalorder %s53, 0
      %s56 = sadd.s32 %s55, 1
      %s57 = scalar_select %p54, %s55, %s56
      %p60 = pneg %p54
      %p61 = scmp.eq.s32.totalorder %s24, 5
      %p62 = por %p60, %p61
      %p63 = scmp.ne.s32.totalorder %s55, %s58
      %p64 = scmp.eq.s32.totalorder %s24, 0
      %p65 = por %p63, %p64
      %p66 = scmp.ne.s32.totalorder %s55, %s58
      %p67 = scmp.eq.s32.totalorder %s29, 5
      %p68 = por %p66, %p67
      %p69 = scmp.ne.s32.totalorder %s58, %s59
      %p70 = scmp.eq.s32.totalorder %s29, 0
      %p71 = por %p69, %p70
      %p72 = scmp.ne.s32.totalorder %s58, %s59
      %p73 = scmp.eq.s32.totalorder %s30, 5
      %p74 = por %p72, %p73
      %p76 = scmp.ne.s32.totalorder %s59, %s75
      %p77 = scmp.eq.s32.totalorder %s30, 0
      %p78 = por %p76, %p77
      %s79 = ssub.s32 %s32, %s46
      %p80 = scmp.eq.s32.totalorder %s79, 0
      %s82 = sadd.s32 %s81, 1
      %s83 = scalar_select %p80, %s81, %s82
      %p86 = pneg %p80
      %p87 = scmp.eq.s32.totalorder %s24, 5
      %p88 = por %p86, %p87
      %p89 = scmp.ne.s32.totalorder %s81, %s84
      %p90 = scmp.eq.s32.totalorder %s24, 0
      %p91 = por %p89, %p90
      %p92 = scmp.ne.s32.totalorder %s81, %s84
      %p93 = scmp.eq.s32.totalorder %s29, 5
      %p94 = por %p92, %p93
      %p95 = scmp.ne.s32.totalorder %s84, %s85
      %p96 = scmp.eq.s32.totalorder %s29, 0
      %p97 = por %p95, %p96
      %p98 = scmp.ne.s32.totalorder %s84, %s85
      %p99 = scmp.eq.s32.totalorder %s30, 5
      %p100 = por %p98, %p99
      %p102 = scmp.ne.s32.totalorder %s85, %s101
      %p103 = scmp.eq.s32.totalorder %s30, 0
      %p104 = por %p102, %p103
      %s105 = ssub.s32 %s32, %s46
      %p106 = scmp.eq.s32.totalorder %s105, 0
      %s108 = sadd.s32 %s107, 1
      %s109 = scalar_select %p106, %s107, %s108
      %p112 = pneg %p106
      %p113 = scmp.eq.s32.totalorder %s24, 5
      %p114 = por %p112, %p113
      %p115 = scmp.ne.s32.totalorder %s107, %s110
      %p116 = scmp.eq.s32.totalorder %s24, 0
      %p117 = por %p115, %p116
      %p118 = scmp.ne.s32.totalorder %s107, %s110
      %p119 = scmp.eq.s32.totalorder %s29, 5
      %p120 = por %p118, %p119
      %p121 = scmp.ne.s32.totalorder %s110, %s111
      %p122 = scmp.eq.s32.totalorder %s29, 0
      %p123 = por %p121, %p122
      %p124 = scmp.ne.s32.totalorder %s110, %s111
      %p125 = scmp.eq.s32.totalorder %s30, 5
      %p126 = por %p124, %p125
      %p128 = scmp.ne.s32.totalorder %s111, %s127
      %p129 = scmp.eq.s32.totalorder %s30, 0
      %p130 = por %p128, %p129
      %s132 = sadd.s32 %s131, 1
      %p135 = scmp.eq.s32.totalorder %s24, 5
      %p136 = scmp.ne.s32.totalorder %s131, %s133
      %p137 = scmp.eq.s32.totalorder %s24, 0
      %p138 = por %p136, %p137
      %p139 = scmp.ne.s32.totalorder %s131, %s133
      %p140 = scmp.eq.s32.totalorder %s29, 5
      %p141 = por %p139, %p140
      %p142 = scmp.ne.s32.totalorder %s133, %s134
      %p143 = scmp.eq.s32.totalorder %s29, 0
      %p144 = por %p142, %p143
      %p145 = scmp.ne.s32.totalorder %s133, %s134
      %p146 = scmp.eq.s32.totalorder %s30, 5
      %p147 = por %p145, %p146
      %p149 = scmp.ne.s32.totalorder %s134, %s148
      %p150 = scmp.eq.s32.totalorder %s30, 0
      %p151 = por %p149, %p150
      %s153 = sadd.s32 %s152, 1
      %p156 = scmp.eq.s32.totalorder %s24, 5
      %p157 = scmp.ne.s32.totalorder %s152, %s154
      %p158 = scmp.eq.s32.totalorder %s24, 0
      %p159 = por %p157, %p158
      %p160 = scmp.ne.s32.totalorder %s152, %s154
      %p161 = scmp.eq.s32.totalorder %s29, 5
      %p162 = por %p160, %p161
      %p163 = scmp.ne.s32.totalorder %s154, %s155
      %p164 = scmp.eq.s32.totalorder %s29, 0
      %p165 = por %p163, %p164
      %p166 = scmp.ne.s32.totalorder %s154, %s155
      %p167 = scmp.eq.s32.totalorder %s30, 5
      %p168 = por %p166, %p167
      %p170 = scmp.ne.s32.totalorder %s155, %s169
      %p171 = scmp.eq.s32.totalorder %s30, 0
      %p172 = por %p170, %p171
      %s174 = sadd.s32 %s173, 1
      %p177 = scmp.eq.s32.totalorder %s24, 5
      %p178 = scmp.ne.s32.totalorder %s173, %s175
      %p179 = scmp.eq.s32.totalorder %s24, 0
      %p180 = por %p178, %p179
      %p181 = scmp.ne.s32.totalorder %s173, %s175
      %p182 = scmp.eq.s32.totalorder %s29, 5
      %p183 = por %p181, %p182
      %p184 = scmp.ne.s32.totalorder %s175, %s176
      %p185 = scmp.eq.s32.totalorder %s29, 0
      %p186 = por %p184, %p185
      %p187 = scmp.ne.s32.totalorder %s175, %s176
      %p188 = scmp.eq.s32.totalorder %s30, 5
      %p189 = por %p187, %p188
      %p191 = scmp.ne.s32.totalorder %s176, %s190
      %p192 = scmp.eq.s32.totalorder %s30, 0
      %p193 = por %p191, %p192
      %s195 = sadd.s32 %s194, 1
      %p198 = scmp.eq.s32.totalorder %s24, 5
      %p199 = scmp.ne.s32.totalorder %s194, %s196
      %p200 = scmp.eq.s32.totalorder %s24, 0
      %p201 = por %p199, %p200
      %p202 = scmp.ne.s32.totalorder %s194, %s196
      %p203 = scmp.eq.s32.totalorder %s29, 5
      %p204 = por %p202, %p203
      %p205 = scmp.ne.s32.totalorder %s196, %s197
      %p206 = scmp.eq.s32.totalorder %s29, 0
      %p207 = por %p205, %p206
      %p208 = scmp.ne.s32.totalorder %s196, %s197
      %p209 = scmp.eq.s32.totalorder %s30, 5
      %p210 = por %p208, %p209
      %p212 = scmp.ne.s32.totalorder %s197, %s211
      %p213 = scmp.eq.s32.totalorder %s30, 0
      %p214 = por %p212, %p213
      %s216 = sadd.s32 %s215, 1
      %p219 = scmp.eq.s32.totalorder %s24, 5
      %p220 = scmp.ne.s32.totalorder %s215, %s217
      %p221 = scmp.eq.s32.totalorder %s24, 0
      %p222 = por %p220, %p221
      %p223 = scmp.ne.s32.totalorder %s215, %s217
      %p224 = scmp.eq.s32.totalorder %s29, 5
      %p225 = por %p223, %p224
      %p226 = scmp.ne.s32.totalorder %s217, %s218
      %p227 = scmp.eq.s32.totalorder %s29, 0
      %p228 = por %p226, %p227
      %p229 = scmp.ne.s32.totalorder %s217, %s218
      %p230 = scmp.eq.s32.totalorder %s30, 5
      %p231 = por %p229, %p230
      %p233 = scmp.ne.s32.totalorder %s218, %s232
      %p234 = scmp.eq.s32.totalorder %s30, 0
      %p235 = por %p233, %p234
      %s237 = sadd.s32 %s236, 1
      %p240 = scmp.eq.s32.totalorder %s24, 5
      %p241 = scmp.ne.s32.totalorder %s236, %s238
      %p242 = scmp.eq.s32.totalorder %s24, 0
      %p243 = por %p241, %p242
      %p244 = scmp.ne.s32.totalorder %s236, %s238
      %p245 = scmp.eq.s32.totalorder %s29, 5
      %p246 = por %p244, %p245
      %p247 = scmp.ne.s32.totalorder %s238, %s239
      %p248 = scmp.eq.s32.totalorder %s29, 0
      %p249 = por %p247, %p248
      %p250 = scmp.ne.s32.totalorder %s238, %s239
      %p251 = scmp.eq.s32.totalorder %s30, 5
      %p252 = por %p250, %p251
      %p254 = scmp.ne.s32.totalorder %s239, %s253
      %p255 = scmp.eq.s32.totalorder %s30, 0
      %p256 = por %p254, %p255
      %s258 = sadd.s32 %s257, 1
      %p261 = scmp.eq.s32.totalorder %s24, 5
      %p262 = scmp.ne.s32.totalorder %s257, %s259
      %p263 = scmp.eq.s32.totalorder %s24, 0
      %p264 = por %p262, %p263
      %p265 = scmp.ne.s32.totalorder %s257, %s259
      %p266 = scmp.eq.s32.totalorder %s29, 5
      %p267 = por %p265, %p266
      %p268 = scmp.ne.s32.totalorder %s259, %s260
      %p269 = scmp.eq.s32.totalorder %s29, 0
      %p270 = por %p268, %p269
      %p271 = scmp.ne.s32.totalorder %s259, %s260
      %p272 = scmp.eq.s32.totalorder %s30, 5
      %p273 = por %p271, %p272
      %p275 = scmp.ne.s32.totalorder %s260, %s274
      %p276 = scmp.eq.s32.totalorder %s30, 0
      %p277 = por %p275, %p276
      %s279 = sadd.s32 %s278, 1
      %p282 = scmp.eq.s32.totalorder %s24, 5
      %p283 = scmp.ne.s32.totalorder %s278, %s280
      %p284 = scmp.eq.s32.totalorder %s24, 0
      %p285 = por %p283, %p284
      %p286 = scmp.ne.s32.totalorder %s278, %s280
      %p287 = scmp.eq.s32.totalorder %s29, 5
      %p288 = por %p286, %p287
      %p289 = scmp.ne.s32.totalorder %s280, %s281
      %p290 = scmp.eq.s32.totalorder %s29, 0
      %p291 = por %p289, %p290
      %p292 = scmp.ne.s32.totalorder %s280, %s281
      %p293 = scmp.eq.s32.totalorder %s30, 5
      %p294 = por %p292, %p293
      %p296 = scmp.ne.s32.totalorder %s281, %s295
      %p297 = scmp.eq.s32.totalorder %s30, 0
      %p298 = por %p296, %p297
      %s300 = sadd.s32 %s299, 1
      %p303 = scmp.eq.s32.totalorder %s24, 5
      %p304 = scmp.ne.s32.totalorder %s299, %s301
      %p305 = scmp.eq.s32.totalorder %s24, 0
      %p306 = por %p304, %p305
      %p307 = scmp.ne.s32.totalorder %s299, %s301
      %p308 = scmp.eq.s32.totalorder %s29, 5
      %p309 = por %p307, %p308
      %p310 = scmp.ne.s32.totalorder %s301, %s302
      %p311 = scmp.eq.s32.totalorder %s29, 0
      %p312 = por %p310, %p311
      %p313 = scmp.ne.s32.totalorder %s301, %s302
      %p314 = scmp.eq.s32.totalorder %s30, 5
      %p315 = por %p313, %p314
      %p317 = scmp.ne.s32.totalorder %s302, %s316
      %p318 = scmp.eq.s32.totalorder %s30, 0
      %p319 = por %p317, %p318
      %s321 = sadd.s32 %s320, 1
      %p324 = scmp.eq.s32.totalorder %s24, 5
      %p325 = scmp.ne.s32.totalorder %s320, %s322
      %p326 = scmp.eq.s32.totalorder %s24, 0
      %p327 = por %p325, %p326
      %p328 = scmp.ne.s32.totalorder %s320, %s322
      %p329 = scmp.eq.s32.totalorder %s29, 5
      %p330 = por %p328, %p329
      %p331 = scmp.ne.s32.totalorder %s322, %s323
      %p332 = scmp.eq.s32.totalorder %s29, 0
      %p333 = por %p331, %p332
      %p334 = scmp.ne.s32.totalorder %s322, %s323
      %p335 = scmp.eq.s32.totalorder %s30, 5
      %p336 = por %p334, %p335
      %p338 = scmp.ne.s32.totalorder %s323, %s337
      %p339 = scmp.eq.s32.totalorder %s30, 0
      %p340 = por %p338, %p339
      %s341 = ssub.s32 %s32, %s46
      %s342 = ssub.s32 %s33, %s42
      %s343 = sor.u32 %s341, %s342
      %p344 = scmp.eq.s32.totalorder %s343, 0
      %s346 = sadd.s32 %s345, 1
      %s347 = scalar_select %p344, %s345, %s346
      %p350 = pneg %p344
      %p351 = scmp.eq.s32.totalorder %s24, 5
      %p352 = por %p350, %p351
      %p353 = scmp.ne.s32.totalorder %s345, %s348
      %p354 = scmp.eq.s32.totalorder %s24, 0
      %p355 = por %p353, %p354
      %p356 = scmp.ne.s32.totalorder %s345, %s348
      %p357 = scmp.eq.s32.totalorder %s29, 5
      %p358 = por %p356, %p357
      %p359 = scmp.ne.s32.totalorder %s348, %s349
      %p360 = scmp.eq.s32.totalorder %s29, 0
      %p361 = por %p359, %p360
      %p362 = scmp.ne.s32.totalorder %s348, %s349
      %p363 = scmp.eq.s32.totalorder %s30, 5
      %p364 = por %p362, %p363
      %p366 = scmp.ne.s32.totalorder %s349, %s365
      %p367 = scmp.eq.s32.totalorder %s30, 0
      %p368 = por %p366, %p367
      %p369 = scmp.le.s32.totalorder 1, %s24
      %p370 = scmp.lt.s32.totalorder %s24, 7
      %p371 = pnand %p369, %p370
      %p372 = pneg %p371
      // Predicated region
      $region9: #{tpu_custom_call.1} parent=5 // pred_check
        _
      $region10: #{tpu_custom_call.1} parent=5 // pred_check_branch
        %374 = sbr.rel (%p371) target = $region12
      $region11: #{tpu_custom_call.1} parent=5 // pred_region
        %s375 = ssub.s32 %s24, 1
        // Predicated region
        $region13: #{tpu_custom_call.1} parent=11 // pred_check
          %p376 = pneg %p144
        $region14: #{tpu_custom_call.1} parent=11 // pred_check_branch
          %378 = sbr.rel (%p376) target = $region16
        $region15: #{tpu_custom_call.1} parent=11 // pred_region
          _
        $region16: #{tpu_custom_call.1} parent=11 // pred_fallthru
          _
        // Predicated region
        $region17: #{tpu_custom_call.1} parent=11 // pred_check
          %p379 = pneg %p165
        $region18: #{tpu_custom_call.1} parent=11 // pred_check_branch
          %381 = sbr.rel (%p379) target = $region20
        $region19: #{tpu_custom_call.1} parent=11 // pred_region
          _
        $region20: #{tpu_custom_call.1} parent=11 // pred_fallthru
          _
        // Predicated region
        $region21: #{tpu_custom_call.1} parent=11 // pred_check
          %p382 = pneg %p186
        $region22: #{tpu_custom_call.1} parent=11 // pred_check_branch
          %384 = sbr.rel (%p382) target = $region24
        $region23: #{tpu_custom_call.1} parent=11 // pred_region
          _
        $region24: #{tpu_custom_call.1} parent=11 // pred_fallthru
          _
        // Predicated region
        $region25: #{tpu_custom_call.1} parent=11 // pred_check
          %p385 = pneg %p207
        $region26: #{tpu_custom_call.1} parent=11 // pred_check_branch
          %387 = sbr.rel (%p385) target = $region28
        $region27: #{tpu_custom_call.1} parent=11 // pred_region
          _
        $region28: #{tpu_custom_call.1} parent=11 // pred_fallthru
          _
        // Predicated region
        $region29: #{tpu_custom_call.1} parent=11 // pred_check
          %p388 = pneg %p228
        $region30: #{tpu_custom_call.1} parent=11 // pred_check_branch
          %390 = sbr.rel (%p388) target = $region32
        $region31: #{tpu_custom_call.1} parent=11 // pred_region
          _
        $region32: #{tpu_custom_call.1} parent=11 // pred_fallthru
          _
        // Predicated region
        $region33: #{tpu_custom_call.1} parent=11 // pred_check
          %p391 = pneg %p249
        $region34: #{tpu_custom_call.1} parent=11 // pred_check_branch
          %393 = sbr.rel (%p391) target = $region36
        $region35: #{tpu_custom_call.1} parent=11 // pred_region
          _
        $region36: #{tpu_custom_call.1} parent=11 // pred_fallthru
          _
        // Predicated region
        $region37: #{tpu_custom_call.1} parent=11 // pred_check
          %p394 = pneg %p270
        $region38: #{tpu_custom_call.1} parent=11 // pred_check_branch
          %396 = sbr.rel (%p394) target = $region40
        $region39: #{tpu_custom_call.1} parent=11 // pred_region
          _
        $region40: #{tpu_custom_call.1} parent=11 // pred_fallthru
          _
        // Predicated region
        $region41: #{tpu_custom_call.1} parent=11 // pred_check
          %p397 = pneg %p291
        $region42: #{tpu_custom_call.1} parent=11 // pred_check_branch
          %399 = sbr.rel (%p397) target = $region44
        $region43: #{tpu_custom_call.1} parent=11 // pred_region
          _
        $region44: #{tpu_custom_call.1} parent=11 // pred_fallthru
          _
        // Predicated region
        $region45: #{tpu_custom_call.1} parent=11 // pred_check
          %p400 = pneg %p312
        $region46: #{tpu_custom_call.1} parent=11 // pred_check_branch
          %402 = sbr.rel (%p400) target = $region48
        $region47: #{tpu_custom_call.1} parent=11 // pred_region
          _
        $region48: #{tpu_custom_call.1} parent=11 // pred_fallthru
          _
        // Predicated region
        $region49: #{tpu_custom_call.1} parent=11 // pred_check
          %p403 = pneg %p333
        $region50: #{tpu_custom_call.1} parent=11 // pred_check_branch
          %405 = sbr.rel (%p403) target = $region52
        $region51: #{tpu_custom_call.1} parent=11 // pred_region
          _
        $region52: #{tpu_custom_call.1} parent=11 // pred_fallthru
          _
      $region12: #{tpu_custom_call.1} parent=5 // pred_fallthru
        _
      %p406 = scmp.lt.s32.totalorder %s24, 6
      // Predicated region
      $region53: #{tpu_custom_call.1} parent=5 // pred_check
        %p407 = pneg %p406
      $region54: #{tpu_custom_call.1} parent=5 // pred_check_branch
        %409 = sbr.rel (%p407) target = $region56
      $region55: #{tpu_custom_call.1} parent=5 // pred_region
        // Predicated region
        $region57: #{tpu_custom_call.1} parent=55 // pred_check
          %p410 = pneg %p65
        $region58: #{tpu_custom_call.1} parent=55 // pred_check_branch
          %412 = sbr.rel (%p410) target = $region60
        $region59: #{tpu_custom_call.1} parent=55 // pred_region
          %s413 = smul.u32 2, %s32
          %p414 = scmp.lt.s32.totalorder %s413, 3
          %s415 = scalar_select %p414, %s413, 3
          %p416 = scmp.lt.s32.totalorder %s33, 0
          %s417 = scalar_select %p416, %s33, 0
          %s418 = sadd.s32 %s417, %s415
          %s419 = smul.addr %s418, 2
          %s420 = scalar_lea.vmem %s0, %s419
          %s421 = smul.u32 2, %s32
        $region60: #{tpu_custom_call.1} parent=55 // pred_fallthru
          _
        // Predicated region
        $region61: #{tpu_custom_call.1} parent=55 // pred_check
          %p422 = pneg %p91
        $region62: #{tpu_custom_call.1} parent=55 // pred_check_branch
          %424 = sbr.rel (%p422) target = $region64
        $region63: #{tpu_custom_call.1} parent=55 // pred_region
          %s425 = smul.u32 2, %s32
          %p426 = scmp.lt.s32.totalorder %s425, 3
          %s427 = scalar_select %p426, %s425, 3
          %s428 = smul.addr %s427, 10
          %s429 = smul.addr %s428, 4
          %s430 = scalar_lea.vmem %s1, %s429
          %s431 = smul.u32 2, %s32
        $region64: #{tpu_custom_call.1} parent=55 // pred_fallthru
          _
        // Predicated region
        $region65: #{tpu_custom_call.1} parent=55 // pred_check
          %p432 = pneg %p117
        $region66: #{tpu_custom_call.1} parent=55 // pred_check_branch
          %434 = sbr.rel (%p432) target = $region68
        $region67: #{tpu_custom_call.1} parent=55 // pred_region
          %s435 = smul.u32 2, %s32
          %p436 = scmp.lt.s32.totalorder %s435, 3
          %s437 = scalar_select %p436, %s435, 3
          %s438 = smul.addr %s437, 10
          %s439 = smul.addr %s438, 8
          %s440 = scalar_lea.vmem %s2, %s439
          %s441 = smul.u32 2, %s32
        $region68: #{tpu_custom_call.1} parent=55 // pred_fallthru
          _
      $region56: #{tpu_custom_call.1} parent=5 // pred_fallthru
        _
      %p442 = scmp.le.s32.totalorder 1, %s24
      %p443 = scmp.lt.s32.totalorder %s24, 7
      %p444 = pnand %p442, %p443
      %p445 = pneg %p444
      // Predicated region
      $region69: #{tpu_custom_call.1} parent=5 // pred_check
        _
      $region70: #{tpu_custom_call.1} parent=5 // pred_check_branch
        %447 = sbr.rel (%p444) target = $region72
      $region71: #{tpu_custom_call.1} parent=5 // pred_region
        %s448 = ssub.s32 %s24, 1
        %s449 = smul.u32 2, %s35
        %p450 = scmp.lt.s32.totalorder %s449, 3
        %s451 = scalar_select %p450, %s449, 3
        %p452 = scmp.lt.s32.totalorder %s36, 0
        %s453 = scalar_select %p452, %s36, 0
        %s454 = sadd.s32 %s453, %s451
        %s455 = smul.addr %s454, 2
        %s456 = scalar_lea.vmem %s0, %s455
        %p457 = pneg %p71
        %p458 = pneg %p68
        %s459 = smul.u32 2, %s35
        %p460 = scmp.lt.s32.totalorder %s459, 3
        %s461 = scalar_select %p460, %s459, 3
        %s462 = smul.addr %s461, 10
        %s463 = smul.addr %s462, 4
        %s464 = scalar_lea.vmem %s1, %s463
        %p465 = pneg %p97
        %p466 = pneg %p94
        %s467 = smul.u32 2, %s35
        %p468 = scmp.lt.s32.totalorder %s467, 3
        %s469 = scalar_select %p468, %s467, 3
        %s470 = smul.addr %s469, 10
        %s471 = smul.addr %s470, 8
        %s472 = scalar_lea.vmem %s2, %s471
        %p473 = pneg %p123
        %p474 = pneg %p120
        %p475 = pneg %p144
        %p476 = pneg %p141
        %p477 = pneg %p165
        %p478 = pneg %p162
        %p479 = pneg %p186
        %p480 = pneg %p183
        %p481 = pneg %p207
        %p482 = pneg %p204
        %p483 = pneg %p228
        %p484 = pneg %p225
        %p485 = pneg %p249
        %p486 = pneg %p246
        %p487 = pneg %p270
        %p488 = pneg %p267
        %p489 = pneg %p291
        %p490 = pneg %p288
        %p491 = pneg %p312
        %p492 = pneg %p309
        %p493 = pneg %p333
        %p494 = pneg %p330
        %p495 = pneg %p361
        %p496 = pneg %p358
        %s497 = sand.u32 %s348, 1
        %s498 = scalar_lea.sflag [#allocation9], %s497
        %s499 = sand.u32 %s348, 1
        %s500 = smul.addr %s499, 2
        %s501 = scalar_lea.vmem [#allocation8], %s500
        %s502 = smul.u32 2, %s35
        %p503 = scmp.lt.s32.totalorder %s502, 3
        %s504 = scalar_select %p503, %s502, 3
        %p505 = scmp.lt.s32.totalorder %s36, 0
        %s506 = scalar_select %p505, %s36, 0
        %s507 = sadd.s32 %s506, %s504
        %s508 = smul.addr %s507, 2
        %s509 = scalar_lea.vmem %s0, %s508
        %s510 = smul.u32 2, %s35
        %s511 = smul.u32 2, %s35
        %p512 = scmp.lt.s32.totalorder %s511, 3
        %s513 = scalar_select %p512, %s511, 3
        %s514 = smul.addr %s513, 10
        %s515 = smul.addr %s514, 4
        %s516 = scalar_lea.vmem %s1, %s515
        %s517 = smul.u32 2, %s35
        %s518 = smul.u32 2, %s35
        %p519 = scmp.lt.s32.totalorder %s518, 3
        %s520 = scalar_select %p519, %s518, 3
        %s521 = smul.addr %s520, 10
        %s522 = smul.addr %s521, 8
        %s523 = scalar_lea.vmem %s2, %s522
        %s524 = smul.u32 2, %s35
        %s525 = smul.u32 2, %s35
        %p527 = scmp.eq.s32.totalorder %s35, 0
        %p528 = scmp.eq.s32.totalorder %s36, 0
        %p529 = pnand %p527, %p528
        %p530 = pneg %p529
        %s531 = smul.u32 %s36, 8
        %s532 = ssub.s32 8, %s531
        %p533 = scmp.lt.s32.totalorder %s532, 8
        %s534 = scalar_select %p533, %s532, 8
        %s535 = scvt.s32.f32 %s534
        %v536 = vlaneseq
        %v537 = vand.u32 %v536, 127
        %v538 = vstv %s532
        %vm539 = vcmp.lt.s32.totalorder %v537, %v538
        %s540 = smul.u32 %s534, 2
        %p541 = scmp.eq.s32.totalorder %s34, 0
        %p542 = pnand %p541, %p530
        %p543 = pneg %p542
        // Predicated region
        $region73: #{tpu_custom_call.1} parent=71 // pred_check
          _
        $region74: #{tpu_custom_call.1} parent=71 // pred_check_branch
          %545 = sbr.rel (%p542) target = $region76
        $region75: #{tpu_custom_call.1} parent=71 // pred_region
          %vm546 = vcmask 7168
          %547 = vst.msk [vmem:[#allocation2] sm:$0xff] %vm546, 0.0
          %548 = vst.msk [vmem:[#allocation2 + $0x8] sm:$0xff] %vm546, 0.0
          %549 = vst.msk [vmem:[#allocation2 + $0x10] sm:$0xff] %vm546, 0.0
          %550 = vst.msk [vmem:[#allocation2 + $0x18] sm:$0xff] %vm546, 0.0
          %551 = vst.msk [vmem:[#allocation2 + $0x20] sm:$0xff] %vm546, 0.0
          %552 = vst.msk [vmem:[#allocation2 + $0x28] sm:$0xff] %vm546, 0.0
          %553 = vst.msk [vmem:[#allocation2 + $0x30] sm:$0xff] %vm546, 0.0
          %554 = vst.msk [vmem:[#allocation2 + $0x38] sm:$0xff] %vm546, 0.0
          %555 = vst.msk [vmem:[#allocation2 + $0x40] sm:$0xff] %vm546, 0.0
          %556 = vst.msk [vmem:[#allocation2 + $0x48] sm:$0xff] %vm546, 0.0
          %557 = vst.msk [vmem:[#allocation3] sm:$0xff] %vm546, 0.0
          %558 = vst.msk [vmem:[#allocation3 + $0x8] sm:$0xff] %vm546, 0.0
          %559 = vst.msk [vmem:[#allocation3 + $0x10] sm:$0xff] %vm546, 0.0
          %560 = vst.msk [vmem:[#allocation3 + $0x18] sm:$0xff] %vm546, 0.0
          %561 = vst.msk [vmem:[#allocation3 + $0x20] sm:$0xff] %vm546, 0.0
          %562 = vst.msk [vmem:[#allocation3 + $0x28] sm:$0xff] %vm546, 0.0
          %563 = vst.msk [vmem:[#allocation3 + $0x30] sm:$0xff] %vm546, 0.0
          %564 = vst.msk [vmem:[#allocation3 + $0x38] sm:$0xff] %vm546, 0.0
          %565 = vst.msk [vmem:[#allocation3 + $0x40] sm:$0xff] %vm546, 0.0
          %566 = vst.msk [vmem:[#allocation3 + $0x48] sm:$0xff] %vm546, 0.0
          %567 = vst.msk [vmem:[#allocation4] sm:$0xff] %vm546, 0.0
          %568 = vst.msk [vmem:[#allocation4 + $0x8] sm:$0xff] %vm546, 0.0
          %569 = vst.msk [vmem:[#allocation4 + $0x10] sm:$0xff] %vm546, 0.0
          %570 = vst.msk [vmem:[#allocation4 + $0x18] sm:$0xff] %vm546, 0.0
          %571 = vst.msk [vmem:[#allocation4 + $0x20] sm:$0xff] %vm546, 0.0
          %572 = vst.msk [vmem:[#allocation5] sm:$0xff] %vm546, 0.0
          %573 = vst.msk [vmem:[#allocation5 + $0x8] sm:$0xff] %vm546, 0.0
          %574 = vst.msk [vmem:[#allocation5 + $0x10] sm:$0xff] %vm546, 0.0
          %575 = vst.msk [vmem:[#allocation5 + $0x18] sm:$0xff] %vm546, 0.0
          %576 = vst.msk [vmem:[#allocation5 + $0x20] sm:$0xff] %vm546, 0.0
          %s577 = scalar_lea.smem [#allocation6], 0
          %578 = sst [smem:[%s577]] 0
          %s579 = scalar_lea.smem [#allocation6], 1
          %580 = sst [smem:[%s579]] 0
        $region76: #{tpu_custom_call.1} parent=71 // pred_fallthru
          _
        // Predicated region
        $region77: #{tpu_custom_call.1} parent=71 // pred_check
          %p581 = pneg %p541
        $region78: #{tpu_custom_call.1} parent=71 // pred_check_branch
          %583 = sbr.rel (%p581) target = $region80
        $region79: #{tpu_custom_call.1} parent=71 // pred_region
          %v584 = vld [vmem:[%s509] sm:$0x3]
          %v585 = vld [vmem:[%s509 + $0x2] sm:$0x3]
          %v586 = vunpack.c.l.bf16 %v584
          %v587 = vunpack.c.l.bf16 %v585
          %v588 = vld [vmem:[%s516] sm:$0xf]
          %v589 = vld [vmem:[%s516 + $0x4] sm:$0xf]
          %v590 = vld [vmem:[%s516 + $0x8] sm:$0xf]
          %v591 = vld [vmem:[%s516 + $0xc] sm:$0xf]
          %v592 = vld [vmem:[%s516 + $0x10] sm:$0xf]
          %v593 = vld [vmem:[%s516 + $0x14] sm:$0xf]
          %v594 = vld [vmem:[%s516 + $0x18] sm:$0xf]
          %v595 = vld [vmem:[%s516 + $0x1c] sm:$0xf]
          %v596 = vld [vmem:[%s516 + $0x20] sm:$0xf]
          %v597 = vld [vmem:[%s516 + $0x24] sm:$0xf]
          %v598 = vld [vmem:[%s516 + $0x28] sm:$0xf]
          %v599 = vld [vmem:[%s516 + $0x2c] sm:$0xf]
          %v600 = vld [vmem:[%s516 + $0x30] sm:$0xf]
          %v601 = vld [vmem:[%s516 + $0x34] sm:$0xf]
          %v602 = vld [vmem:[%s516 + $0x38] sm:$0xf]
          %v603 = vld [vmem:[%s516 + $0x3c] sm:$0xf]
          %v604 = vld [vmem:[%s516 + $0x40] sm:$0xf]
          %v605 = vld [vmem:[%s516 + $0x44] sm:$0xf]
          %v606 = vld [vmem:[%s516 + $0x48] sm:$0xf]
          %v607 = vld [vmem:[%s516 + $0x4c] sm:$0xf]
          %v608 = vunpack.c.l.bf16 %v588
          %v609 = vunpack.c.l.bf16 %v589
          %v610 = vunpack.c.l.bf16 %v590
          %v611 = vunpack.c.l.bf16 %v591
          %v612 = vunpack.c.l.bf16 %v592
          %v613 = vunpack.c.l.bf16 %v593
          %v614 = vunpack.c.l.bf16 %v594
          %v615 = vunpack.c.l.bf16 %v595
          %v616 = vunpack.c.l.bf16 %v596
          %v617 = vunpack.c.l.bf16 %v597
          %v618 = vunpack.c.l.bf16 %v598
          %v619 = vunpack.c.l.bf16 %v599
          %v620 = vunpack.c.l.bf16 %v600
          %v621 = vunpack.c.l.bf16 %v601
          %v622 = vunpack.c.l.bf16 %v602
          %v623 = vunpack.c.l.bf16 %v603
          %v624 = vunpack.c.l.bf16 %v604
          %v625 = vunpack.c.l.bf16 %v605
          %v626 = vunpack.c.l.bf16 %v606
          %v627 = vunpack.c.l.bf16 %v607
          %v628 = vld [vmem:[%s523] sm:$0xff]
          %v629 = vld [vmem:[%s523 + $0x8] sm:$0xff]
          %v630 = vld [vmem:[%s523 + $0x10] sm:$0xff]
          %v631 = vld [vmem:[%s523 + $0x18] sm:$0xff]
          %v632 = vld [vmem:[%s523 + $0x20] sm:$0xff]
          %v633 = vld [vmem:[%s523 + $0x28] sm:$0xff]
          %v634 = vld [vmem:[%s523 + $0x30] sm:$0xff]
          %v635 = vld [vmem:[%s523 + $0x38] sm:$0xff]
          %v636 = vld [vmem:[%s523 + $0x40] sm:$0xff]
          %v637 = vld [vmem:[%s523 + $0x48] sm:$0xff]
          %v638 = vld [vmem:[%s523 + $0x50] sm:$0xff]
          %v639 = vld [vmem:[%s523 + $0x58] sm:$0xff]
          %v640 = vld [vmem:[%s523 + $0x60] sm:$0xff]
          %v641 = vld [vmem:[%s523 + $0x68] sm:$0xff]
          %v642 = vld [vmem:[%s523 + $0x70] sm:$0xff]
          %v643 = vld [vmem:[%s523 + $0x78] sm:$0xff]
          %v644 = vld [vmem:[%s523 + $0x80] sm:$0xff]
          %v645 = vld [vmem:[%s523 + $0x88] sm:$0xff]
          %v646 = vld [vmem:[%s523 + $0x90] sm:$0xff]
          %v647 = vld [vmem:[%s523 + $0x98] sm:$0xff]
          %v648 = vsel %vm539, 1, 0
          %vm649 = vcmp.eq.s32.totalorder %v648, 1
          %v650 = vsel %vm649, %v586, 0.0
          %v651 = vsel %vm649, %v587, 0.0
          %vm652 = vcmask 60416
          %v653 = vsel %vm652, %v650, 0.0
          %654 = vadd.xlane.f32.xlu0 %v653
          %v655 = vpop.xlane.xlu0 %654
          %v656 = vsel %vm652, %v651, 0.0
          %657 = vadd.xlane.f32.xlu0 %v656
          %v658 = vpop.xlane.xlu0 %657
          %v659 = vstv %s535
          %v660 = vrcp.pop %v659
          %v661 = vmul.f32 %v655, %v660
          %v662 = vmul.f32 %v658, %v660
          %v663 = vsub.f32 %v586, %v661
          %v664 = vsub.f32 %v587, %v662
          %v665 = vsel %vm649, %v663, 0.0
          %v666 = vsel %vm649, %v664, 0.0
          %v667 = vpack.c.bf16 %v665, %v665
          %v668 = vpack.c.bf16 %v666, %v666
          %vm669 = vcmask 64512
          %v671 = vsel %vm669, %v667, 0
          %673 = vmatprep.subr.bf16.mxu0 0
          %674 = vmatpush1.bf16.xpose.msra.mxu0 0
          %675 = vmatprep.subr.bf16.mxu0 0
          %676 = vmatpush1.bf16.xpose.msra.mxu0 0
          %677 = vmatprep.subr.bf16.mxu0 0
          %678 = vmatpush1.bf16.xpose.msra.mxu0 0
          %679 = vmatprep.subr.bf16.mxu0 0
          %680 = vmatpush1.bf16.xpose.msra.mxu0 0
          %681 = vmatprep.subr.bf16.mxu0 0
          %682 = vmatpush1.bf16.xpose.msra.mxu0 0
          %683 = vmatprep.subr.bf16.mxu0 0
          %684 = vmatpush1.bf16.xpose.msra.mxu0 0
          %685 = vmatprep.subr.bf16.mxu0 0
          %686 = vmatpush1.bf16.xpose.msra.mxu0 0
          %687 = vmatprep.subr.bf16.mxu0 0
          %688 = vmatpush1.bf16.xpose.msra.mxu0 %v671
          %689 = vmatprep.subr.bf16.mxu0 0
          %690 = vmatpush2.bf16.xpose.msra.mxu0 0
          %691 = vmatprep.subr.bf16.mxu0 0
          %692 = vmatpush2.bf16.xpose.msra.mxu0 0
          %693 = vmatprep.subr.bf16.mxu0 0
          %694 = vmatpush2.bf16.xpose.msra.mxu0 0
          %695 = vmatprep.subr.bf16.mxu0 0
          %696 = vmatpush2.bf16.xpose.msra.mxu0 0
          %697 = vmatprep.subr.bf16.mxu0 0
          %698 = vmatpush2.bf16.xpose.msra.mxu0 0
          %699 = vmatprep.subr.bf16.mxu0 0
          %700 = vmatpush2.bf16.xpose.msra.mxu0 0
          %701 = vmatprep.subr.bf16.mxu0 0
          %702 = vmatpush2.bf16.xpose.msra.mxu0 0
          %703 = vmatprep.subr.bf16.mxu0 0
          %704 = vmatpush2.bf16.xpose.msra.mxu0 0
          %705 = vmatprep.mubr.bf16.mxu0 0
          %706 = vmatmul.mubr.bf16.gmra.mxu0 %v671
          %v707 = vpop.f32.mrf.mxu0
          %v708 = vadd.f32 0.0, %v707
          %v709 = vpop.f32.mrf.mxu0
          %v710 = vpop.f32.mrf.mxu0
          %v711 = vpop.f32.mrf.mxu0
          %712 = vdwg.mxu0
          %v714 = vsel %vm669, %v668, 0
          %716 = vmatprep.subr.bf16.mxu0 0
          %717 = vmatpush1.bf16.xpose.msra.mxu0 0
          %718 = vmatprep.subr.bf16.mxu0 0
          %719 = vmatpush1.bf16.xpose.msra.mxu0 0
          %720 = vmatprep.subr.bf16.mxu0 0
          %721 = vmatpush1.bf16.xpose.msra.mxu0 0
          %722 = vmatprep.subr.bf16.mxu0 0
          %723 = vmatpush1.bf16.xpose.msra.mxu0 0
          %724 = vmatprep.subr.bf16.mxu0 0
          %725 = vmatpush1.bf16.xpose.msra.mxu0 0
          %726 = vmatprep.subr.bf16.mxu0 0
          %727 = vmatpush1.bf16.xpose.msra.mxu0 0
          %728 = vmatprep.subr.bf16.mxu0 0
          %729 = vmatpush1.bf16.xpose.msra.mxu0 0
          %730 = vmatprep.subr.bf16.mxu0 0
          %731 = vmatpush1.bf16.xpose.msra.mxu0 %v714
          %732 = vmatprep.subr.bf16.mxu0 0
          %733 = vmatpush2.bf16.xpose.msra.mxu0 0
          %734 = vmatprep.subr.bf16.mxu0 0
          %735 = vmatpush2.bf16.xpose.msra.mxu0 0
          %736 = vmatprep.subr.bf16.mxu0 0
          %737 = vmatpush2.bf16.xpose.msra.mxu0 0
          %738 = vmatprep.subr.bf16.mxu0 0
          %739 = vmatpush2.bf16.xpose.msra.mxu0 0
          %740 = vmatprep.subr.bf16.mxu0 0
          %741 = vmatpush2.bf16.xpose.msra.mxu0 0
          %742 = vmatprep.subr.bf16.mxu0 0
          %743 = vmatpush2.bf16.xpose.msra.mxu0 0
          %744 = vmatprep.subr.bf16.mxu0 0
          %745 = vmatpush2.bf16.xpose.msra.mxu0 0
          %746 = vmatprep.subr.bf16.mxu0 0
          %747 = vmatpush2.bf16.xpose.msra.mxu0 0
          %748 = vmatprep.mubr.bf16.mxu0 0
          %749 = vmatmul.mubr.bf16.gmra.mxu0 %v714
          %v750 = vpop.f32.mrf.mxu0
          %v751 = vadd.f32 0.0, %v750
          %v752 = vpop.f32.mrf.mxu0
          %v753 = vpop.f32.mrf.mxu0
          %v754 = vpop.f32.mrf.mxu0
          %755 = vdwg.mxu0
          %vm756 = vcmask 31744
          %v758 = vsel %vm756, %v608, 0
          %v761 = vsel %vm756, %v609, 0
          %v764 = vsel %vm756, %v610, 0
          %v767 = vsel %vm756, %v611, 0
          %v770 = vsel %vm756, %v612, 0
          %v773 = vsel %vm756, %v613, 0
          %v776 = vsel %vm756, %v614, 0
          %v779 = vsel %vm756, %v615, 0
          %v782 = vsel %vm756, %v616, 0
          %v785 = vsel %vm756, %v617, 0
          %vm787 = vcmask 1043456
          %v789 = vsel %vm787, %v661, 0
          %791 = vmatprep.subr.mxu0 0.0
          %792 = vmatpush1.msra.mxu0 0.0
          %793 = vmatprep.subr.mxu0 0.0
          %794 = vmatpush1.msra.mxu0 0.0
          %795 = vmatprep.subr.mxu0 0.0
          %796 = vmatpush1.msra.mxu0 0.0
          %797 = vmatprep.subr.mxu0 0.0
          %798 = vmatpush1.msra.mxu0 0.0
          %799 = vmatprep.subr.mxu0 0.0
          %800 = vmatpush1.msra.mxu0 0.0
          %801 = vmatprep.subr.mxu0 0.0
          %802 = vmatpush1.msra.mxu0 0.0
          %803 = vmatprep.subr.mxu0 0.0
          %804 = vmatpush1.msra.mxu0 0.0
          %805 = vmatprep.subr.mxu0 0.0
          %806 = vmatpush1.msra.mxu0 0.0
          %807 = vmatprep.subr.mxu0 0.0
          %808 = vmatpush1.msra.mxu0 0.0
          %809 = vmatprep.subr.mxu0 0.0
          %810 = vmatpush1.msra.mxu0 0.0
          %811 = vmatprep.subr.mxu0 0.0
          %812 = vmatpush1.msra.mxu0 0.0
          %813 = vmatprep.subr.mxu0 0.0
          %814 = vmatpush1.msra.mxu0 0.0
          %815 = vmatprep.subr.mxu0 0.0
          %816 = vmatpush1.msra.mxu0 0.0
          %817 = vmatprep.subr.mxu0 0.0
          %818 = vmatpush1.msra.mxu0 0.0
          %819 = vmatprep.subr.mxu0 0.0
          %820 = vmatpush1.msra.mxu0 0.0
          %821 = vmatprep.subr.mxu0 0.0
          %822 = vmatpush1.msra.mxu0 %v789
          %823 = vmatprep.subr.mxu0 0.0
          %824 = vmatpush2.msra.mxu0 0.0
          %825 = vmatprep.subr.mxu0 0.0
          %826 = vmatpush2.msra.mxu0 0.0
          %827 = vmatprep.subr.mxu0 0.0
          %828 = vmatpush2.msra.mxu0 0.0
          %829 = vmatprep.subr.mxu0 0.0
          %830 = vmatpush2.msra.mxu0 0.0
          %831 = vmatprep.subr.mxu0 0.0
          %832 = vmatpush2.msra.mxu0 0.0
          %833 = vmatprep.subr.mxu0 0.0
          %834 = vmatpush2.msra.mxu0 0.0
          %835 = vmatprep.subr.mxu0 0.0
          %836 = vmatpush2.msra.mxu0 0.0
          %837 = vmatprep.subr.mxu0 0.0
          %838 = vmatpush2.msra.mxu0 0.0
          %839 = vmatprep.subr.mxu0 0.0
          %840 = vmatpush2.msra.mxu0 0.0
          %841 = vmatprep.subr.mxu0 0.0
          %842 = vmatpush2.msra.mxu0 0.0
          %843 = vmatprep.subr.mxu0 0.0
          %844 = vmatpush2.msra.mxu0 0.0
          %845 = vmatprep.subr.mxu0 0.0
          %846 = vmatpush2.msra.mxu0 0.0
          %847 = vmatprep.subr.mxu0 0.0
          %848 = vmatpush2.msra.mxu0 0.0
          %849 = vmatprep.subr.mxu0 0.0
          %850 = vmatpush2.msra.mxu0 0.0
          %851 = vmatprep.subr.mxu0 0.0
          %852 = vmatpush2.msra.mxu0 0.0
          %853 = vmatprep.subr.mxu0 0.0
          %854 = vmatpush2.msra.mxu0 0.0
          %855 = vmatprep.mubr.f32.mxu0 0.0
          %856 = vmatmul.mubr.f32.gmra.mxu0 %v758
          %v857 = vpop.f32.mrf.mxu0
          %v858 = vadd.f32 %v628, %v857
          %v859 = vpop.f32.mrf.mxu0
          %860 = vmatprep.mubr.f32.mxu0 0.0
          %861 = vmatmul.mubr.f32.gmra.mxu0 %v761
          %v862 = vpop.f32.mrf.mxu0
          %v863 = vadd.f32 %v629, %v862
          %v864 = vpop.f32.mrf.mxu0
          %865 = vmatprep.mubr.f32.mxu0 0.0
          %866 = vmatmul.mubr.f32.gmra.mxu0 %v764
          %v867 = vpop.f32.mrf.mxu0
          %v868 = vadd.f32 %v630, %v867
          %v869 = vpop.f32.mrf.mxu0
          %870 = vmatprep.mubr.f32.mxu0 0.0
          %871 = vmatmul.mubr.f32.gmra.mxu0 %v767
          %v872 = vpop.f32.mrf.mxu0
          %v873 = vadd.f32 %v631, %v872
          %v874 = vpop.f32.mrf.mxu0
          %875 = vmatprep.mubr.f32.mxu0 0.0
          %876 = vmatmul.mubr.f32.gmra.mxu0 %v770
          %v877 = vpop.f32.mrf.mxu0
          %v878 = vadd.f32 %v632, %v877
          %v879 = vpop.f32.mrf.mxu0
          %880 = vmatprep.mubr.f32.mxu0 0.0
          %881 = vmatmul.mubr.f32.gmra.mxu0 %v773
          %v882 = vpop.f32.mrf.mxu0
          %v883 = vadd.f32 %v633, %v882
          %v884 = vpop.f32.mrf.mxu0
          %885 = vmatprep.mubr.f32.mxu0 0.0
          %886 = vmatmul.mubr.f32.gmra.mxu0 %v776
          %v887 = vpop.f32.mrf.mxu0
          %v888 = vadd.f32 %v634, %v887
          %v889 = vpop.f32.mrf.mxu0
          %890 = vmatprep.mubr.f32.mxu0 0.0
          %891 = vmatmul.mubr.f32.gmra.mxu0 %v779
          %v892 = vpop.f32.mrf.mxu0
          %v893 = vadd.f32 %v635, %v892
          %v894 = vpop.f32.mrf.mxu0
          %895 = vmatprep.mubr.f32.mxu0 0.0
          %896 = vmatmul.mubr.f32.gmra.mxu0 %v782
          %v897 = vpop.f32.mrf.mxu0
          %v898 = vadd.f32 %v636, %v897
          %v899 = vpop.f32.mrf.mxu0
          %900 = vmatprep.mubr.f32.mxu0 0.0
          %901 = vmatmul.mubr.f32.gmra.mxu0 %v785
          %v902 = vpop.f32.mrf.mxu0
          %v903 = vadd.f32 %v637, %v902
          %v904 = vpop.f32.mrf.mxu0
          %905 = vdwg.mxu0
          %v907 = vsel %vm756, %v618, 0
          %v910 = vsel %vm756, %v619, 0
          %v913 = vsel %vm756, %v620, 0
          %v916 = vsel %vm756, %v621, 0
          %v919 = vsel %vm756, %v622, 0
          %v922 = vsel %vm756, %v623, 0
          %v925 = vsel %vm756, %v624, 0
          %v928 = vsel %vm756, %v625, 0
          %v931 = vsel %vm756, %v626, 0
          %v934 = vsel %vm756, %v627, 0
          %v937 = vsel %vm787, %v662, 0
          %939 = vmatprep.subr.mxu0 0.0
          %940 = vmatpush1.msra.mxu0 0.0
          %941 = vmatprep.subr.mxu0 0.0
          %942 = vmatpush1.msra.mxu0 0.0
          %943 = vmatprep.subr.mxu0 0.0
          %944 = vmatpush1.msra.mxu0 0.0
          %945 = vmatprep.subr.mxu0 0.0
          %946 = vmatpush1.msra.mxu0 0.0
          %947 = vmatprep.subr.mxu0 0.0
          %948 = vmatpush1.msra.mxu0 0.0
          %949 = vmatprep.subr.mxu0 0.0
          %950 = vmatpush1.msra.mxu0 0.0
          %951 = vmatprep.subr.mxu0 0.0
          %952 = vmatpush1.msra.mxu0 0.0
          %953 = vmatprep.subr.mxu0 0.0
          %954 = vmatpush1.msra.mxu0 0.0
          %955 = vmatprep.subr.mxu0 0.0
          %956 = vmatpush1.msra.mxu0 0.0
          %957 = vmatprep.subr.mxu0 0.0
          %958 = vmatpush1.msra.mxu0 0.0
          %959 = vmatprep.subr.mxu0 0.0
          %960 = vmatpush1.msra.mxu0 0.0
          %961 = vmatprep.subr.mxu0 0.0
          %962 = vmatpush1.msra.mxu0 0.0
          %963 = vmatprep.subr.mxu0 0.0
          %964 = vmatpush1.msra.mxu0 0.0
          %965 = vmatprep.subr.mxu0 0.0
          %966 = vmatpush1.msra.mxu0 0.0
          %967 = vmatprep.subr.mxu0 0.0
          %968 = vmatpush1.msra.mxu0 0.0
          %969 = vmatprep.subr.mxu0 0.0
          %970 = vmatpush1.msra.mxu0 %v937
          %971 = vmatprep.subr.mxu0 0.0
          %972 = vmatpush2.msra.mxu0 0.0
          %973 = vmatprep.subr.mxu0 0.0
          %974 = vmatpush2.msra.mxu0 0.0
          %975 = vmatprep.subr.mxu0 0.0
          %976 = vmatpush2.msra.mxu0 0.0
          %977 = vmatprep.subr.mxu0 0.0
          %978 = vmatpush2.msra.mxu0 0.0
          %979 = vmatprep.subr.mxu0 0.0
          %980 = vmatpush2.msra.mxu0 0.0
          %981 = vmatprep.subr.mxu0 0.0
          %982 = vmatpush2.msra.mxu0 0.0
          %983 = vmatprep.subr.mxu0 0.0
          %984 = vmatpush2.msra.mxu0 0.0
          %985 = vmatprep.subr.mxu0 0.0
          %986 = vmatpush2.msra.mxu0 0.0
          %987 = vmatprep.subr.mxu0 0.0
          %988 = vmatpush2.msra.mxu0 0.0
          %989 = vmatprep.subr.mxu0 0.0
          %990 = vmatpush2.msra.mxu0 0.0
          %991 = vmatprep.subr.mxu0 0.0
          %992 = vmatpush2.msra.mxu0 0.0
          %993 = vmatprep.subr.mxu0 0.0
          %994 = vmatpush2.msra.mxu0 0.0
          %995 = vmatprep.subr.mxu0 0.0
          %996 = vmatpush2.msra.mxu0 0.0
          %997 = vmatprep.subr.mxu0 0.0
          %998 = vmatpush2.msra.mxu0 0.0
          %999 = vmatprep.subr.mxu0 0.0
          %1000 = vmatpush2.msra.mxu0 0.0
          %1001 = vmatprep.subr.mxu0 0.0
          %1002 = vmatpush2.msra.mxu0 0.0
          %1003 = vmatprep.mubr.f32.mxu0 0.0
          %1004 = vmatmul.mubr.f32.gmra.mxu0 %v907
          %v1005 = vpop.f32.mrf.mxu0
          %v1006 = vadd.f32 %v638, %v1005
          %v1007 = vpop.f32.mrf.mxu0
          %1008 = vmatprep.mubr.f32.mxu0 0.0
          %1009 = vmatmul.mubr.f32.gmra.mxu0 %v910
          %v1010 = vpop.f32.mrf.mxu0
          %v1011 = vadd.f32 %v639, %v1010
          %v1012 = vpop.f32.mrf.mxu0
          %1013 = vmatprep.mubr.f32.mxu0 0.0
          %1014 = vmatmul.mubr.f32.gmra.mxu0 %v913
          %v1015 = vpop.f32.mrf.mxu0
          %v1016 = vadd.f32 %v640, %v1015
          %v1017 = vpop.f32.mrf.mxu0
          %1018 = vmatprep.mubr.f32.mxu0 0.0
          %1019 = vmatmul.mubr.f32.gmra.mxu0 %v916
          %v1020 = vpop.f32.mrf.mxu0
          %v1021 = vadd.f32 %v641, %v1020
          %v1022 = vpop.f32.mrf.mxu0
          %1023 = vmatprep.mubr.f32.mxu0 0.0
          %1024 = vmatmul.mubr.f32.gmra.mxu0 %v919
          %v1025 = vpop.f32.mrf.mxu0
          %v1026 = vadd.f32 %v642, %v1025
          %v1027 = vpop.f32.mrf.mxu0
          %1028 = vmatprep.mubr.f32.mxu0 0.0
          %1029 = vmatmul.mubr.f32.gmra.mxu0 %v922
          %v1030 = vpop.f32.mrf.mxu0
          %v1031 = vadd.f32 %v643, %v1030
          %v1032 = vpop.f32.mrf.mxu0
          %1033 = vmatprep.mubr.f32.mxu0 0.0
          %1034 = vmatmul.mubr.f32.gmra.mxu0 %v925
          %v1035 = vpop.f32.mrf.mxu0
          %v1036 = vadd.f32 %v644, %v1035
          %v1037 = vpop.f32.mrf.mxu0
          %1038 = vmatprep.mubr.f32.mxu0 0.0
          %1039 = vmatmul.mubr.f32.gmra.mxu0 %v928
          %v1040 = vpop.f32.mrf.mxu0
          %v1041 = vadd.f32 %v645, %v1040
          %v1042 = vpop.f32.mrf.mxu0
          %1043 = vmatprep.mubr.f32.mxu0 0.0
          %1044 = vmatmul.mubr.f32.gmra.mxu0 %v931
          %v1045 = vpop.f32.mrf.mxu0
          %v1046 = vadd.f32 %v646, %v1045
          %v1047 = vpop.f32.mrf.mxu0
          %1048 = vmatprep.mubr.f32.mxu0 0.0
          %1049 = vmatmul.mubr.f32.gmra.mxu0 %v934
          %v1050 = vpop.f32.mrf.mxu0
          %v1051 = vadd.f32 %v647, %v1050
          %v1052 = vpop.f32.mrf.mxu0
          %1053 = vdwg.mxu0
          %v1055 = vsel %vm787, %v708, 0
          %1057 = vmatprep.subr.mxu0 0.0
          %1058 = vmatpush1.msra.mxu0 0.0
          %1059 = vmatprep.subr.mxu0 0.0
          %1060 = vmatpush1.msra.mxu0 0.0
          %1061 = vmatprep.subr.mxu0 0.0
          %1062 = vmatpush1.msra.mxu0 0.0
          %1063 = vmatprep.subr.mxu0 0.0
          %1064 = vmatpush1.msra.mxu0 0.0
          %1065 = vmatprep.subr.mxu0 0.0
          %1066 = vmatpush1.msra.mxu0 0.0
          %1067 = vmatprep.subr.mxu0 0.0
          %1068 = vmatpush1.msra.mxu0 0.0
          %1069 = vmatprep.subr.mxu0 0.0
          %1070 = vmatpush1.msra.mxu0 0.0
          %1071 = vmatprep.subr.mxu0 0.0
          %1072 = vmatpush1.msra.mxu0 0.0
          %1073 = vmatprep.subr.mxu0 0.0
          %1074 = vmatpush1.msra.mxu0 0.0
          %1075 = vmatprep.subr.mxu0 0.0
          %1076 = vmatpush1.msra.mxu0 0.0
          %1077 = vmatprep.subr.mxu0 0.0
          %1078 = vmatpush1.msra.mxu0 0.0
          %1079 = vmatprep.subr.mxu0 0.0
          %1080 = vmatpush1.msra.mxu0 0.0
          %1081 = vmatprep.subr.mxu0 0.0
          %1082 = vmatpush1.msra.mxu0 0.0
          %1083 = vmatprep.subr.mxu0 0.0
          %1084 = vmatpush1.msra.mxu0 0.0
          %1085 = vmatprep.subr.mxu0 0.0
          %1086 = vmatpush1.msra.mxu0 0.0
          %1087 = vmatprep.subr.mxu0 0.0
          %1088 = vmatpush1.msra.mxu0 %v1055
          %1089 = vmatprep.subr.mxu0 0.0
          %1090 = vmatpush2.msra.mxu0 0.0
          %1091 = vmatprep.subr.mxu0 0.0
          %1092 = vmatpush2.msra.mxu0 0.0
          %1093 = vmatprep.subr.mxu0 0.0
          %1094 = vmatpush2.msra.mxu0 0.0
          %1095 = vmatprep.subr.mxu0 0.0
          %1096 = vmatpush2.msra.mxu0 0.0
          %1097 = vmatprep.subr.mxu0 0.0
          %1098 = vmatpush2.msra.mxu0 0.0
          %1099 = vmatprep.subr.mxu0 0.0
          %1100 = vmatpush2.msra.mxu0 0.0
          %1101 = vmatprep.subr.mxu0 0.0
          %1102 = vmatpush2.msra.mxu0 0.0
          %1103 = vmatprep.subr.mxu0 0.0
          %1104 = vmatpush2.msra.mxu0 0.0
          %1105 = vmatprep.subr.mxu0 0.0
          %1106 = vmatpush2.msra.mxu0 0.0
          %1107 = vmatprep.subr.mxu0 0.0
          %1108 = vmatpush2.msra.mxu0 0.0
          %1109 = vmatprep.subr.mxu0 0.0
          %1110 = vmatpush2.msra.mxu0 0.0
          %1111 = vmatprep.subr.mxu0 0.0
          %1112 = vmatpush2.msra.mxu0 0.0
          %1113 = vmatprep.subr.mxu0 0.0
          %1114 = vmatpush2.msra.mxu0 0.0
          %1115 = vmatprep.subr.mxu0 0.0
          %1116 = vmatpush2.msra.mxu0 0.0
          %1117 = vmatprep.subr.mxu0 0.0
          %1118 = vmatpush2.msra.mxu0 0.0
          %1119 = vmatprep.subr.mxu0 0.0
          %1120 = vmatpush2.msra.mxu0 0.0
          %1121 = vmatprep.mubr.f32.mxu0 0.0
          %1122 = vmatmul.mubr.f32.gmra.mxu0 %v758
          %v1123 = vpop.f32.mrf.mxu0
          %v1124 = vadd.f32 0.0, %v1123
          %v1125 = vpop.f32.mrf.mxu0
          %1126 = vmatprep.mubr.f32.mxu0 0.0
          %1127 = vmatmul.mubr.f32.gmra.mxu0 %v761
          %v1128 = vpop.f32.mrf.mxu0
          %v1129 = vadd.f32 0.0, %v1128
          %v1130 = vpop.f32.mrf.mxu0
          %1131 = vmatprep.mubr.f32.mxu0 0.0
          %1132 = vmatmul.mubr.f32.gmra.mxu0 %v764
          %v1133 = vpop.f32.mrf.mxu0
          %v1134 = vadd.f32 0.0, %v1133
          %v1135 = vpop.f32.mrf.mxu0
          %1136 = vmatprep.mubr.f32.mxu0 0.0
          %1137 = vmatmul.mubr.f32.gmra.mxu0 %v767
          %v1138 = vpop.f32.mrf.mxu0
          %v1139 = vadd.f32 0.0, %v1138
          %v1140 = vpop.f32.mrf.mxu0
          %1141 = vmatprep.mubr.f32.mxu0 0.0
          %1142 = vmatmul.mubr.f32.gmra.mxu0 %v770
          %v1143 = vpop.f32.mrf.mxu0
          %v1144 = vadd.f32 0.0, %v1143
          %v1145 = vpop.f32.mrf.mxu0
          %1146 = vmatprep.mubr.f32.mxu0 0.0
          %1147 = vmatmul.mubr.f32.gmra.mxu0 %v773
          %v1148 = vpop.f32.mrf.mxu0
          %v1149 = vadd.f32 0.0, %v1148
          %v1150 = vpop.f32.mrf.mxu0
          %1151 = vmatprep.mubr.f32.mxu0 0.0
          %1152 = vmatmul.mubr.f32.gmra.mxu0 %v776
          %v1153 = vpop.f32.mrf.mxu0
          %v1154 = vadd.f32 0.0, %v1153
          %v1155 = vpop.f32.mrf.mxu0
          %1156 = vmatprep.mubr.f32.mxu0 0.0
          %1157 = vmatmul.mubr.f32.gmra.mxu0 %v779
          %v1158 = vpop.f32.mrf.mxu0
          %v1159 = vadd.f32 0.0, %v1158
          %v1160 = vpop.f32.mrf.mxu0
          %1161 = vmatprep.mubr.f32.mxu0 0.0
          %1162 = vmatmul.mubr.f32.gmra.mxu0 %v782
          %v1163 = vpop.f32.mrf.mxu0
          %v1164 = vadd.f32 0.0, %v1163
          %v1165 = vpop.f32.mrf.mxu0
          %1166 = vmatprep.mubr.f32.mxu0 0.0
          %1167 = vmatmul.mubr.f32.gmra.mxu0 %v785
          %v1168 = vpop.f32.mrf.mxu0
          %v1169 = vadd.f32 0.0, %v1168
          %v1170 = vpop.f32.mrf.mxu0
          %1171 = vdwg.mxu0
          %v1173 = vsel %vm787, %v751, 0
          %1175 = vmatprep.subr.mxu0 0.0
          %1176 = vmatpush1.msra.mxu0 0.0
          %1177 = vmatprep.subr.mxu0 0.0
          %1178 = vmatpush1.msra.mxu0 0.0
          %1179 = vmatprep.subr.mxu0 0.0
          %1180 = vmatpush1.msra.mxu0 0.0
          %1181 = vmatprep.subr.mxu0 0.0
          %1182 = vmatpush1.msra.mxu0 0.0
          %1183 = vmatprep.subr.mxu0 0.0
          %1184 = vmatpush1.msra.mxu0 0.0
          %1185 = vmatprep.subr.mxu0 0.0
          %1186 = vmatpush1.msra.mxu0 0.0
          %1187 = vmatprep.subr.mxu0 0.0
          %1188 = vmatpush1.msra.mxu0 0.0
          %1189 = vmatprep.subr.mxu0 0.0
          %1190 = vmatpush1.msra.mxu0 0.0
          %1191 = vmatprep.subr.mxu0 0.0
          %1192 = vmatpush1.msra.mxu0 0.0
          %1193 = vmatprep.subr.mxu0 0.0
          %1194 = vmatpush1.msra.mxu0 0.0
          %1195 = vmatprep.subr.mxu0 0.0
          %1196 = vmatpush1.msra.mxu0 0.0
          %1197 = vmatprep.subr.mxu0 0.0
          %1198 = vmatpush1.msra.mxu0 0.0
          %1199 = vmatprep.subr.mxu0 0.0
          %1200 = vmatpush1.msra.mxu0 0.0
          %1201 = vmatprep.subr.mxu0 0.0
          %1202 = vmatpush1.msra.mxu0 0.0
          %1203 = vmatprep.subr.mxu0 0.0
          %1204 = vmatpush1.msra.mxu0 0.0
          %1205 = vmatprep.subr.mxu0 0.0
          %1206 = vmatpush1.msra.mxu0 %v1173
          %1207 = vmatprep.subr.mxu0 0.0
          %1208 = vmatpush2.msra.mxu0 0.0
          %1209 = vmatprep.subr.mxu0 0.0
          %1210 = vmatpush2.msra.mxu0 0.0
          %1211 = vmatprep.subr.mxu0 0.0
          %1212 = vmatpush2.msra.mxu0 0.0
          %1213 = vmatprep.subr.mxu0 0.0
          %1214 = vmatpush2.msra.mxu0 0.0
          %1215 = vmatprep.subr.mxu0 0.0
          %1216 = vmatpush2.msra.mxu0 0.0
          %1217 = vmatprep.subr.mxu0 0.0
          %1218 = vmatpush2.msra.mxu0 0.0
          %1219 = vmatprep.subr.mxu0 0.0
          %1220 = vmatpush2.msra.mxu0 0.0
          %1221 = vmatprep.subr.mxu0 0.0
          %1222 = vmatpush2.msra.mxu0 0.0
          %1223 = vmatprep.subr.mxu0 0.0
          %1224 = vmatpush2.msra.mxu0 0.0
          %1225 = vmatprep.subr.mxu0 0.0
          %1226 = vmatpush2.msra.mxu0 0.0
          %1227 = vmatprep.subr.mxu0 0.0
          %1228 = vmatpush2.msra.mxu0 0.0
          %1229 = vmatprep.subr.mxu0 0.0
          %1230 = vmatpush2.msra.mxu0 0.0
          %1231 = vmatprep.subr.mxu0 0.0
          %1232 = vmatpush2.msra.mxu0 0.0
          %1233 = vmatprep.subr.mxu0 0.0
          %1234 = vmatpush2.msra.mxu0 0.0
          %1235 = vmatprep.subr.mxu0 0.0
          %1236 = vmatpush2.msra.mxu0 0.0
          %1237 = vmatprep.subr.mxu0 0.0
          %1238 = vmatpush2.msra.mxu0 0.0
          %1239 = vmatprep.mubr.f32.mxu0 0.0
          %1240 = vmatmul.mubr.f32.gmra.mxu0 %v907
          %v1241 = vpop.f32.mrf.mxu0
          %v1242 = vadd.f32 0.0, %v1241
          %v1243 = vpop.f32.mrf.mxu0
          %1244 = vmatprep.mubr.f32.mxu0 0.0
          %1245 = vmatmul.mubr.f32.gmra.mxu0 %v910
          %v1246 = vpop.f32.mrf.mxu0
          %v1247 = vadd.f32 0.0, %v1246
          %v1248 = vpop.f32.mrf.mxu0
          %1249 = vmatprep.mubr.f32.mxu0 0.0
          %1250 = vmatmul.mubr.f32.gmra.mxu0 %v913
          %v1251 = vpop.f32.mrf.mxu0
          %v1252 = vadd.f32 0.0, %v1251
          %v1253 = vpop.f32.mrf.mxu0
          %1254 = vmatprep.mubr.f32.mxu0 0.0
          %1255 = vmatmul.mubr.f32.gmra.mxu0 %v916
          %v1256 = vpop.f32.mrf.mxu0
          %v1257 = vadd.f32 0.0, %v1256
          %v1258 = vpop.f32.mrf.mxu0
          %1259 = vmatprep.mubr.f32.mxu0 0.0
          %1260 = vmatmul.mubr.f32.gmra.mxu0 %v919
          %v1261 = vpop.f32.mrf.mxu0
          %v1262 = vadd.f32 0.0, %v1261
          %v1263 = vpop.f32.mrf.mxu0
          %1264 = vmatprep.mubr.f32.mxu0 0.0
          %1265 = vmatmul.mubr.f32.gmra.mxu0 %v922
          %v1266 = vpop.f32.mrf.mxu0
          %v1267 = vadd.f32 0.0, %v1266
          %v1268 = vpop.f32.mrf.mxu0
          %1269 = vmatprep.mubr.f32.mxu0 0.0
          %1270 = vmatmul.mubr.f32.gmra.mxu0 %v925
          %v1271 = vpop.f32.mrf.mxu0
          %v1272 = vadd.f32 0.0, %v1271
          %v1273 = vpop.f32.mrf.mxu0
          %1274 = vmatprep.mubr.f32.mxu0 0.0
          %1275 = vmatmul.mubr.f32.gmra.mxu0 %v928
          %v1276 = vpop.f32.mrf.mxu0
          %v1277 = vadd.f32 0.0, %v1276
          %v1278 = vpop.f32.mrf.mxu0
          %1279 = vmatprep.mubr.f32.mxu0 0.0
          %1280 = vmatmul.mubr.f32.gmra.mxu0 %v931
          %v1281 = vpop.f32.mrf.mxu0
          %v1282 = vadd.f32 0.0, %v1281
          %v1283 = vpop.f32.mrf.mxu0
          %1284 = vmatprep.mubr.f32.mxu0 0.0
          %1285 = vmatmul.mubr.f32.gmra.mxu0 %v934
          %v1286 = vpop.f32.mrf.mxu0
          %v1287 = vadd.f32 0.0, %v1286
          %v1288 = vpop.f32.mrf.mxu0
          %1289 = vdwg.mxu0
          %v1290 = vmul.f32 %v1124, %v608
          %v1291 = vmul.f32 %v1129, %v609
          %v1292 = vmul.f32 %v1134, %v610
          %v1293 = vmul.f32 %v1139, %v611
          %v1294 = vmul.f32 %v1144, %v612
          %v1295 = vmul.f32 %v1149, %v613
          %v1296 = vmul.f32 %v1154, %v614
          %v1297 = vmul.f32 %v1159, %v615
          %v1298 = vmul.f32 %v1164, %v616
          %v1299 = vmul.f32 %v1169, %v617
          %v1300 = vmul.f32 %v1242, %v618
          %v1301 = vmul.f32 %v1247, %v619
          %v1302 = vmul.f32 %v1252, %v620
          %v1303 = vmul.f32 %v1257, %v621
          %v1304 = vmul.f32 %v1262, %v622
          %v1305 = vmul.f32 %v1267, %v623
          %v1306 = vmul.f32 %v1272, %v624
          %v1307 = vmul.f32 %v1277, %v625
          %v1308 = vmul.f32 %v1282, %v626
          %v1309 = vmul.f32 %v1287, %v627
          %v1310 = vsel %vm756, %v1290, 0.0
          %1311 = vadd.xlane.f32.xlu0 %v1310
          %v1312 = vpop.xlane.xlu0 %1311
          %v1313 = vsel %vm756, %v1291, 0.0
          %1314 = vadd.xlane.f32.xlu0 %v1313
          %v1315 = vpop.xlane.xlu0 %1314
          %v1316 = vsel %vm756, %v1292, 0.0
          %1317 = vadd.xlane.f32.xlu0 %v1316
          %v1318 = vpop.xlane.xlu0 %1317
          %v1319 = vsel %vm756, %v1293, 0.0
          %1320 = vadd.xlane.f32.xlu0 %v1319
          %v1321 = vpop.xlane.xlu0 %1320
          %v1322 = vsel %vm756, %v1294, 0.0
          %1323 = vadd.xlane.f32.xlu0 %v1322
          %v1324 = vpop.xlane.xlu0 %1323
          %v1325 = vsel %vm756, %v1295, 0.0
          %1326 = vadd.xlane.f32.xlu0 %v1325
          %v1327 = vpop.xlane.xlu0 %1326
          %v1328 = vsel %vm756, %v1296, 0.0
          %1329 = vadd.xlane.f32.xlu0 %v1328
          %v1330 = vpop.xlane.xlu0 %1329
          %v1331 = vsel %vm756, %v1297, 0.0
          %1332 = vadd.xlane.f32.xlu0 %v1331
          %v1333 = vpop.xlane.xlu0 %1332
          %v1334 = vsel %vm756, %v1298, 0.0
          %1335 = vadd.xlane.f32.xlu0 %v1334
          %v1336 = vpop.xlane.xlu0 %1335
          %v1337 = vsel %vm756, %v1299, 0.0
          %1338 = vadd.xlane.f32.xlu0 %v1337
          %v1339 = vpop.xlane.xlu0 %1338
          %v1340 = vsel %vm756, %v1300, 0.0
          %1341 = vadd.xlane.f32.xlu0 %v1340
          %v1342 = vpop.xlane.xlu0 %1341
          %v1343 = vsel %vm756, %v1301, 0.0
          %1344 = vadd.xlane.f32.xlu0 %v1343
          %v1345 = vpop.xlane.xlu0 %1344
          %v1346 = vsel %vm756, %v1302, 0.0
          %1347 = vadd.xlane.f32.xlu0 %v1346
          %v1348 = vpop.xlane.xlu0 %1347
          %v1349 = vsel %vm756, %v1303, 0.0
          %1350 = vadd.xlane.f32.xlu0 %v1349
          %v1351 = vpop.xlane.xlu0 %1350
          %v1352 = vsel %vm756, %v1304, 0.0
          %1353 = vadd.xlane.f32.xlu0 %v1352
          %v1354 = vpop.xlane.xlu0 %1353
          %v1355 = vsel %vm756, %v1305, 0.0
          %1356 = vadd.xlane.f32.xlu0 %v1355
          %v1357 = vpop.xlane.xlu0 %1356
          %v1358 = vsel %vm756, %v1306, 0.0
          %1359 = vadd.xlane.f32.xlu0 %v1358
          %v1360 = vpop.xlane.xlu0 %1359
          %v1361 = vsel %vm756, %v1307, 0.0
          %1362 = vadd.xlane.f32.xlu0 %v1361
          %v1363 = vpop.xlane.xlu0 %1362
          %v1364 = vsel %vm756, %v1308, 0.0
          %1365 = vadd.xlane.f32.xlu0 %v1364
          %v1366 = vpop.xlane.xlu0 %1365
          %v1367 = vsel %vm756, %v1309, 0.0
          %1368 = vadd.xlane.f32.xlu0 %v1367
          %v1369 = vpop.xlane.xlu0 %1368
          %vm1370 = vcmask 7168
          %v1371 = vsel %vm1370, %v858, 0.0
          %v1372 = vsel %vm1370, %v1006, 0.0
          %v1373 = vadd.f32 %v1371, %v1372
          %v1374 = vsel %vm1370, %v863, 0.0
          %v1375 = vsel %vm1370, %v1011, 0.0
          %v1376 = vadd.f32 %v1374, %v1375
          %v1377 = vsel %vm1370, %v868, 0.0
          %v1378 = vsel %vm1370, %v1016, 0.0
          %v1379 = vadd.f32 %v1377, %v1378
          %v1380 = vsel %vm1370, %v873, 0.0
          %v1381 = vsel %vm1370, %v1021, 0.0
          %v1382 = vadd.f32 %v1380, %v1381
          %v1383 = vsel %vm1370, %v878, 0.0
          %v1384 = vsel %vm1370, %v1026, 0.0
          %v1385 = vadd.f32 %v1383, %v1384
          %v1386 = vsel %vm1370, %v883, 0.0
          %v1387 = vsel %vm1370, %v1031, 0.0
          %v1388 = vadd.f32 %v1386, %v1387
          %v1389 = vsel %vm1370, %v888, 0.0
          %v1390 = vsel %vm1370, %v1036, 0.0
          %v1391 = vadd.f32 %v1389, %v1390
          %v1392 = vsel %vm1370, %v893, 0.0
          %v1393 = vsel %vm1370, %v1041, 0.0
          %v1394 = vadd.f32 %v1392, %v1393
          %v1395 = vsel %vm1370, %v898, 0.0
          %v1396 = vsel %vm1370, %v1046, 0.0
          %v1397 = vadd.f32 %v1395, %v1396
          %v1398 = vsel %vm1370, %v903, 0.0
          %v1399 = vsel %vm1370, %v1051, 0.0
          %v1400 = vadd.f32 %v1398, %v1399
          %v1401 = vrcp.pop 2.0
          %v1402 = vmul.f32 %v1373, %v1401
          %v1403 = vmul.f32 %v1376, %v1401
          %v1404 = vmul.f32 %v1379, %v1401
          %v1405 = vmul.f32 %v1382, %v1401
          %v1406 = vmul.f32 %v1385, %v1401
          %v1407 = vmul.f32 %v1388, %v1401
          %v1408 = vmul.f32 %v1391, %v1401
          %v1409 = vmul.f32 %v1394, %v1401
          %v1410 = vmul.f32 %v1397, %v1401
          %v1411 = vmul.f32 %v1400, %v1401
          %v1412 = vsub.f32 %v858, %v1402
          %v1413 = vsub.f32 %v863, %v1403
          %v1414 = vsub.f32 %v868, %v1404
          %v1415 = vsub.f32 %v873, %v1405
          %v1416 = vsub.f32 %v878, %v1406
          %v1417 = vsub.f32 %v883, %v1407
          %v1418 = vsub.f32 %v888, %v1408
          %v1419 = vsub.f32 %v893, %v1409
          %v1420 = vsub.f32 %v898, %v1410
          %v1421 = vsub.f32 %v903, %v1411
          %v1422 = vsub.f32 %v1006, %v1402
          %v1423 = vsub.f32 %v1011, %v1403
          %v1424 = vsub.f32 %v1016, %v1404
          %v1425 = vsub.f32 %v1021, %v1405
          %v1426 = vsub.f32 %v1026, %v1406
          %v1427 = vsub.f32 %v1031, %v1407
          %v1428 = vsub.f32 %v1036, %v1408
          %v1429 = vsub.f32 %v1041, %v1409
          %v1430 = vsub.f32 %v1046, %v1410
          %v1431 = vsub.f32 %v1051, %v1411
          %v1432 = vmul.f32 %v1412, %v1412
          %v1433 = vmul.f32 %v1413, %v1413
          %v1434 = vmul.f32 %v1414, %v1414
          %v1435 = vmul.f32 %v1415, %v1415
          %v1436 = vmul.f32 %v1416, %v1416
          %v1437 = vmul.f32 %v1417, %v1417
          %v1438 = vmul.f32 %v1418, %v1418
          %v1439 = vmul.f32 %v1419, %v1419
          %v1440 = vmul.f32 %v1420, %v1420
          %v1441 = vmul.f32 %v1421, %v1421
          %v1442 = vmul.f32 %v1422, %v1422
          %v1443 = vmul.f32 %v1423, %v1423
          %v1444 = vmul.f32 %v1424, %v1424
          %v1445 = vmul.f32 %v1425, %v1425
          %v1446 = vmul.f32 %v1426, %v1426
          %v1447 = vmul.f32 %v1427, %v1427
          %v1448 = vmul.f32 %v1428, %v1428
          %v1449 = vmul.f32 %v1429, %v1429
          %v1450 = vmul.f32 %v1430, %v1430
          %v1451 = vmul.f32 %v1431, %v1431
          %v1452 = vmul.f32 %v659, %v1432
          %v1453 = vmul.f32 %v659, %v1433
          %v1454 = vmul.f32 %v659, %v1434
          %v1455 = vmul.f32 %v659, %v1435
          %v1456 = vmul.f32 %v659, %v1436
          %v1457 = vmul.f32 %v659, %v1437
          %v1458 = vmul.f32 %v659, %v1438
          %v1459 = vmul.f32 %v659, %v1439
          %v1460 = vmul.f32 %v659, %v1440
          %v1461 = vmul.f32 %v659, %v1441
          %v1462 = vmul.f32 %v659, %v1442
          %v1463 = vmul.f32 %v659, %v1443
          %v1464 = vmul.f32 %v659, %v1444
          %v1465 = vmul.f32 %v659, %v1445
          %v1466 = vmul.f32 %v659, %v1446
          %v1467 = vmul.f32 %v659, %v1447
          %v1468 = vmul.f32 %v659, %v1448
          %v1469 = vmul.f32 %v659, %v1449
          %v1470 = vmul.f32 %v659, %v1450
          %v1471 = vmul.f32 %v659, %v1451
          %v1472 = vadd.f32 %v1312, %v1452
          %v1473 = vadd.f32 %v1315, %v1453
          %v1474 = vadd.f32 %v1318, %v1454
          %v1475 = vadd.f32 %v1321, %v1455
          %v1476 = vadd.f32 %v1324, %v1456
          %v1477 = vadd.f32 %v1327, %v1457
          %v1478 = vadd.f32 %v1330, %v1458
          %v1479 = vadd.f32 %v1333, %v1459
          %v1480 = vadd.f32 %v1336, %v1460
          %v1481 = vadd.f32 %v1339, %v1461
          %v1482 = vadd.f32 %v1342, %v1462
          %v1483 = vadd.f32 %v1345, %v1463
          %v1484 = vadd.f32 %v1348, %v1464
          %v1485 = vadd.f32 %v1351, %v1465
          %v1486 = vadd.f32 %v1354, %v1466
          %v1487 = vadd.f32 %v1357, %v1467
          %v1488 = vadd.f32 %v1360, %v1468
          %v1489 = vadd.f32 %v1363, %v1469
          %v1490 = vadd.f32 %v1366, %v1470
          %v1491 = vadd.f32 %v1369, %v1471
          %v1492 = vsel %vm1370, %v1472, 0.0
          %v1493 = vsel %vm1370, %v1482, 0.0
          %v1494 = vadd.f32 %v1492, %v1493
          %v1495 = vsel %vm1370, %v1473, 0.0
          %v1496 = vsel %vm1370, %v1483, 0.0
          %v1497 = vadd.f32 %v1495, %v1496
          %v1498 = vsel %vm1370, %v1474, 0.0
          %v1499 = vsel %vm1370, %v1484, 0.0
          %v1500 = vadd.f32 %v1498, %v1499
          %v1501 = vsel %vm1370, %v1475, 0.0
          %v1502 = vsel %vm1370, %v1485, 0.0
          %v1503 = vadd.f32 %v1501, %v1502
          %v1504 = vsel %vm1370, %v1476, 0.0
          %v1505 = vsel %vm1370, %v1486, 0.0
          %v1506 = vadd.f32 %v1504, %v1505
          %v1507 = vsel %vm1370, %v1477, 0.0
          %v1508 = vsel %vm1370, %v1487, 0.0
          %v1509 = vadd.f32 %v1507, %v1508
          %v1510 = vsel %vm1370, %v1478, 0.0
          %v1511 = vsel %vm1370, %v1488, 0.0
          %v1512 = vadd.f32 %v1510, %v1511
          %v1513 = vsel %vm1370, %v1479, 0.0
          %v1514 = vsel %vm1370, %v1489, 0.0
          %v1515 = vadd.f32 %v1513, %v1514
          %v1516 = vsel %vm1370, %v1480, 0.0
          %v1517 = vsel %vm1370, %v1490, 0.0
          %v1518 = vadd.f32 %v1516, %v1517
          %v1519 = vsel %vm1370, %v1481, 0.0
          %v1520 = vsel %vm1370, %v1491, 0.0
          %v1521 = vadd.f32 %v1519, %v1520
          %s1522 = sld [smem:[#allocation6]]
          %s1523 = sadd.s32 %s1522, %s540
          %s1524 = scvt.s32.f32 %s1522
          %s1525 = scvt.s32.f32 %s540
          %s1526 = scvt.s32.f32 %s1523
          %v1527 = vld [vmem:[#allocation2] sm:$0xff]
          %v1528 = vld [vmem:[#allocation2 + $0x8] sm:$0xff]
          %v1529 = vld [vmem:[#allocation2 + $0x10] sm:$0xff]
          %v1530 = vld [vmem:[#allocation2 + $0x18] sm:$0xff]
          %v1531 = vld [vmem:[#allocation2 + $0x20] sm:$0xff]
          %v1532 = vld [vmem:[#allocation2 + $0x28] sm:$0xff]
          %v1533 = vld [vmem:[#allocation2 + $0x30] sm:$0xff]
          %v1534 = vld [vmem:[#allocation2 + $0x38] sm:$0xff]
          %v1535 = vld [vmem:[#allocation2 + $0x40] sm:$0xff]
          %v1536 = vld [vmem:[#allocation2 + $0x48] sm:$0xff]
          %v1537 = vsub.f32 %v1402, %v1527
          %v1538 = vsub.f32 %v1403, %v1528
          %v1539 = vsub.f32 %v1404, %v1529
          %v1540 = vsub.f32 %v1405, %v1530
          %v1541 = vsub.f32 %v1406, %v1531
          %v1542 = vsub.f32 %v1407, %v1532
          %v1543 = vsub.f32 %v1408, %v1533
          %v1544 = vsub.f32 %v1409, %v1534
          %v1545 = vsub.f32 %v1410, %v1535
          %v1546 = vsub.f32 %v1411, %v1536
          %v1547 = vstv %s1526
          %v1548 = vrcp.pop %v1547
          %s1549 = vtos %v1548
          %s1550 = smul.f32 %s1525, %s1549
          %v1551 = vstv %s1550
          %v1552 = vmul.f32 %v1537, %v1551
          %v1553 = vmul.f32 %v1538, %v1551
          %v1554 = vmul.f32 %v1539, %v1551
          %v1555 = vmul.f32 %v1540, %v1551
          %v1556 = vmul.f32 %v1541, %v1551
          %v1557 = vmul.f32 %v1542, %v1551
          %v1558 = vmul.f32 %v1543, %v1551
          %v1559 = vmul.f32 %v1544, %v1551
          %v1560 = vmul.f32 %v1545, %v1551
          %v1561 = vmul.f32 %v1546, %v1551
          %v1562 = vadd.f32 %v1527, %v1552
          %v1563 = vadd.f32 %v1528, %v1553
          %v1564 = vadd.f32 %v1529, %v1554
          %v1565 = vadd.f32 %v1530, %v1555
          %v1566 = vadd.f32 %v1531, %v1556
          %v1567 = vadd.f32 %v1532, %v1557
          %v1568 = vadd.f32 %v1533, %v1558
          %v1569 = vadd.f32 %v1534, %v1559
          %v1570 = vadd.f32 %v1535, %v1560
          %v1571 = vadd.f32 %v1536, %v1561
          %1572 = vst.msk [vmem:[#allocation2] sm:$0xff] %vm1370, %v1562
          %1573 = vst.msk [vmem:[#allocation2 + $0x8] sm:$0xff] %vm1370, %v1563
          %1574 = vst.msk [vmem:[#allocation2 + $0x10] sm:$0xff] %vm1370, %v1564
          %1575 = vst.msk [vmem:[#allocation2 + $0x18] sm:$0xff] %vm1370, %v1565
          %1576 = vst.msk [vmem:[#allocation2 + $0x20] sm:$0xff] %vm1370, %v1566
          %1577 = vst.msk [vmem:[#allocation2 + $0x28] sm:$0xff] %vm1370, %v1567
          %1578 = vst.msk [vmem:[#allocation2 + $0x30] sm:$0xff] %vm1370, %v1568
          %1579 = vst.msk [vmem:[#allocation2 + $0x38] sm:$0xff] %vm1370, %v1569
          %1580 = vst.msk [vmem:[#allocation2 + $0x40] sm:$0xff] %vm1370, %v1570
          %1581 = vst.msk [vmem:[#allocation2 + $0x48] sm:$0xff] %vm1370, %v1571
          %v1582 = vld [vmem:[#allocation3] sm:$0xff]
          %v1583 = vld [vmem:[#allocation3 + $0x8] sm:$0xff]
          %v1584 = vld [vmem:[#allocation3 + $0x10] sm:$0xff]
          %v1585 = vld [vmem:[#allocation3 + $0x18] sm:$0xff]
          %v1586 = vld [vmem:[#allocation3 + $0x20] sm:$0xff]
          %v1587 = vld [vmem:[#allocation3 + $0x28] sm:$0xff]
          %v1588 = vld [vmem:[#allocation3 + $0x30] sm:$0xff]
          %v1589 = vld [vmem:[#allocation3 + $0x38] sm:$0xff]
          %v1590 = vld [vmem:[#allocation3 + $0x40] sm:$0xff]
          %v1591 = vld [vmem:[#allocation3 + $0x48] sm:$0xff]
          %v1592 = vadd.f32 %v1582, %v1494
          %v1593 = vadd.f32 %v1583, %v1497
          %v1594 = vadd.f32 %v1584, %v1500
          %v1595 = vadd.f32 %v1585, %v1503
          %v1596 = vadd.f32 %v1586, %v1506
          %v1597 = vadd.f32 %v1587, %v1509
          %v1598 = vadd.f32 %v1588, %v1512
          %v1599 = vadd.f32 %v1589, %v1515
          %v1600 = vadd.f32 %v1590, %v1518
          %v1601 = vadd.f32 %v1591, %v1521
          %v1602 = vmul.f32 %v1537, %v1537
          %v1603 = vmul.f32 %v1538, %v1538
          %v1604 = vmul.f32 %v1539, %v1539
          %v1605 = vmul.f32 %v1540, %v1540
          %v1606 = vmul.f32 %v1541, %v1541
          %v1607 = vmul.f32 %v1542, %v1542
          %v1608 = vmul.f32 %v1543, %v1543
          %v1609 = vmul.f32 %v1544, %v1544
          %v1610 = vmul.f32 %v1545, %v1545
          %v1611 = vmul.f32 %v1546, %v1546
          %s1612 = smul.f32 %s1524, %s1525
          %v1613 = vstv %s1526
          %v1614 = vrcp.pop %v1613
          %s1615 = vtos %v1614
          %s1616 = smul.f32 %s1612, %s1615
          %v1617 = vstv %s1616
          %v1618 = vmul.f32 %v1602, %v1617
          %v1619 = vmul.f32 %v1603, %v1617
          %v1620 = vmul.f32 %v1604, %v1617
          %v1621 = vmul.f32 %v1605, %v1617
          %v1622 = vmul.f32 %v1606, %v1617
          %v1623 = vmul.f32 %v1607, %v1617
          %v1624 = vmul.f32 %v1608, %v1617
          %v1625 = vmul.f32 %v1609, %v1617
          %v1626 = vmul.f32 %v1610, %v1617
          %v1627 = vmul.f32 %v1611, %v1617
          %v1628 = vadd.f32 %v1592, %v1618
          %v1629 = vadd.f32 %v1593, %v1619
          %v1630 = vadd.f32 %v1594, %v1620
          %v1631 = vadd.f32 %v1595, %v1621
          %v1632 = vadd.f32 %v1596, %v1622
          %v1633 = vadd.f32 %v1597, %v1623
          %v1634 = vadd.f32 %v1598, %v1624
          %v1635 = vadd.f32 %v1599, %v1625
          %v1636 = vadd.f32 %v1600, %v1626
          %v1637 = vadd.f32 %v1601, %v1627
          %1638 = vst.msk [vmem:[#allocation3] sm:$0xff] %vm1370, %v1628
          %1639 = vst.msk [vmem:[#allocation3 + $0x8] sm:$0xff] %vm1370, %v1629
          %1640 = vst.msk [vmem:[#allocation3 + $0x10] sm:$0xff] %vm1370, %v1630
          %1641 = vst.msk [vmem:[#allocation3 + $0x18] sm:$0xff] %vm1370, %v1631
          %1642 = vst.msk [vmem:[#allocation3 + $0x20] sm:$0xff] %vm1370, %v1632
          %1643 = vst.msk [vmem:[#allocation3 + $0x28] sm:$0xff] %vm1370, %v1633
          %1644 = vst.msk [vmem:[#allocation3 + $0x30] sm:$0xff] %vm1370, %v1634
          %1645 = vst.msk [vmem:[#allocation3 + $0x38] sm:$0xff] %vm1370, %v1635
          %1646 = vst.msk [vmem:[#allocation3 + $0x40] sm:$0xff] %vm1370, %v1636
          %1647 = vst.msk [vmem:[#allocation3 + $0x48] sm:$0xff] %vm1370, %v1637
          %s1648 = scalar_lea.smem [#allocation6], 0
          %1649 = sst [smem:[%s1648]] %s1523
        $region80: #{tpu_custom_call.1} parent=71 // pred_fallthru
          _
        %p1650 = scmp.ge.s32.totalorder %s34, 1
        // Predicated region
        $region81: #{tpu_custom_call.1} parent=71 // pred_check
          %p1651 = pneg %p1650
        $region82: #{tpu_custom_call.1} parent=71 // pred_check_branch
          %1653 = sbr.rel (%p1651) target = $region84
        $region83: #{tpu_custom_call.1} parent=71 // pred_region
          %v1654 = vld [vmem:[%s523] sm:$0xff]
          %v1655 = vld [vmem:[%s523 + $0x8] sm:$0xff]
          %v1656 = vld [vmem:[%s523 + $0x10] sm:$0xff]
          %v1657 = vld [vmem:[%s523 + $0x18] sm:$0xff]
          %v1658 = vld [vmem:[%s523 + $0x20] sm:$0xff]
          %v1659 = vld [vmem:[%s523 + $0x28] sm:$0xff]
          %v1660 = vld [vmem:[%s523 + $0x30] sm:$0xff]
          %v1661 = vld [vmem:[%s523 + $0x38] sm:$0xff]
          %v1662 = vld [vmem:[%s523 + $0x40] sm:$0xff]
          %v1663 = vld [vmem:[%s523 + $0x48] sm:$0xff]
          %v1664 = vld [vmem:[%s523 + $0x50] sm:$0xff]
          %v1665 = vld [vmem:[%s523 + $0x58] sm:$0xff]
          %v1666 = vld [vmem:[%s523 + $0x60] sm:$0xff]
          %v1667 = vld [vmem:[%s523 + $0x68] sm:$0xff]
          %v1668 = vld [vmem:[%s523 + $0x70] sm:$0xff]
          %v1669 = vld [vmem:[%s523 + $0x78] sm:$0xff]
          %v1670 = vld [vmem:[%s523 + $0x80] sm:$0xff]
          %v1671 = vld [vmem:[%s523 + $0x88] sm:$0xff]
          %v1672 = vld [vmem:[%s523 + $0x90] sm:$0xff]
          %v1673 = vld [vmem:[%s523 + $0x98] sm:$0xff]
          %v1674 = vld [vmem:[%s516] sm:$0xf]
          %v1675 = vld [vmem:[%s516 + $0x4] sm:$0xf]
          %v1676 = vld [vmem:[%s516 + $0x8] sm:$0xf]
          %v1677 = vld [vmem:[%s516 + $0xc] sm:$0xf]
          %v1678 = vld [vmem:[%s516 + $0x10] sm:$0xf]
          %v1679 = vld [vmem:[%s516 + $0x14] sm:$0xf]
          %v1680 = vld [vmem:[%s516 + $0x18] sm:$0xf]
          %v1681 = vld [vmem:[%s516 + $0x1c] sm:$0xf]
          %v1682 = vld [vmem:[%s516 + $0x20] sm:$0xf]
          %v1683 = vld [vmem:[%s516 + $0x24] sm:$0xf]
          %v1684 = vld [vmem:[%s516 + $0x28] sm:$0xf]
          %v1685 = vld [vmem:[%s516 + $0x2c] sm:$0xf]
          %v1686 = vld [vmem:[%s516 + $0x30] sm:$0xf]
          %v1687 = vld [vmem:[%s516 + $0x34] sm:$0xf]
          %v1688 = vld [vmem:[%s516 + $0x38] sm:$0xf]
          %v1689 = vld [vmem:[%s516 + $0x3c] sm:$0xf]
          %v1690 = vld [vmem:[%s516 + $0x40] sm:$0xf]
          %v1691 = vld [vmem:[%s516 + $0x44] sm:$0xf]
          %v1692 = vld [vmem:[%s516 + $0x48] sm:$0xf]
          %v1693 = vld [vmem:[%s516 + $0x4c] sm:$0xf]
          %v1694 = vld [vmem:[%s509] sm:$0x3]
          %v1695 = vld [vmem:[%s509 + $0x2] sm:$0x3]
          %1697 = vset.pattern.permute.xlu0 0
          %1698 = vperm.xlu0 %1697, %v1654
          %v1699 = vpop.permute.xlu0 %1698
          %1702 = vset.pattern.permute.xlu0 0
          %1703 = vperm.xlu0 %1702, %v1655
          %v1704 = vpop.permute.xlu0 %1703
          %1707 = vset.pattern.permute.xlu0 0
          %1708 = vperm.xlu0 %1707, %v1656
          %v1709 = vpop.permute.xlu0 %1708
          %1712 = vset.pattern.permute.xlu0 0
          %1713 = vperm.xlu0 %1712, %v1657
          %v1714 = vpop.permute.xlu0 %1713
          %1717 = vset.pattern.permute.xlu0 0
          %1718 = vperm.xlu0 %1717, %v1658
          %v1719 = vpop.permute.xlu0 %1718
          %1722 = vset.pattern.permute.xlu0 0
          %1723 = vperm.xlu0 %1722, %v1659
          %v1724 = vpop.permute.xlu0 %1723
          %1727 = vset.pattern.permute.xlu0 0
          %1728 = vperm.xlu0 %1727, %v1660
          %v1729 = vpop.permute.xlu0 %1728
          %1732 = vset.pattern.permute.xlu0 0
          %1733 = vperm.xlu0 %1732, %v1661
          %v1734 = vpop.permute.xlu0 %1733
          %1737 = vset.pattern.permute.xlu0 0
          %1738 = vperm.xlu0 %1737, %v1662
          %v1739 = vpop.permute.xlu0 %1738
          %1742 = vset.pattern.permute.xlu0 0
          %1743 = vperm.xlu0 %1742, %v1663
          %v1744 = vpop.permute.xlu0 %1743
          %1747 = vset.pattern.permute.xlu0 0
          %1748 = vperm.xlu0 %1747, %v1664
          %v1749 = vpop.permute.xlu0 %1748
          %1752 = vset.pattern.permute.xlu0 0
          %1753 = vperm.xlu0 %1752, %v1665
          %v1754 = vpop.permute.xlu0 %1753
          %1757 = vset.pattern.permute.xlu0 0
          %1758 = vperm.xlu0 %1757, %v1666
          %v1759 = vpop.permute.xlu0 %1758
          %1762 = vset.pattern.permute.xlu0 0
          %1763 = vperm.xlu0 %1762, %v1667
          %v1764 = vpop.permute.xlu0 %1763
          %1767 = vset.pattern.permute.xlu0 0
          %1768 = vperm.xlu0 %1767, %v1668
          %v1769 = vpop.permute.xlu0 %1768
          %1772 = vset.pattern.permute.xlu0 0
          %1773 = vperm.xlu0 %1772, %v1669
          %v1774 = vpop.permute.xlu0 %1773
          %1777 = vset.pattern.permute.xlu0 0
          %1778 = vperm.xlu0 %1777, %v1670
          %v1779 = vpop.permute.xlu0 %1778
          %1782 = vset.pattern.permute.xlu0 0
          %1783 = vperm.xlu0 %1782, %v1671
          %v1784 = vpop.permute.xlu0 %1783
          %1787 = vset.pattern.permute.xlu0 0
          %1788 = vperm.xlu0 %1787, %v1672
          %v1789 = vpop.permute.xlu0 %1788
          %1792 = vset.pattern.permute.xlu0 0
          %1793 = vperm.xlu0 %1792, %v1673
          %v1794 = vpop.permute.xlu0 %1793
          %v1806 = vunpack.c.l.b16 %v1674
          %v1807 = vunpack.c.l.b16 %v1675
          %v1808 = vunpack.c.l.b16 %v1676
          %v1809 = vunpack.c.l.b16 %v1677
          %v1810 = vunpack.c.l.b16 %v1678
          %v1811 = vunpack.c.l.b16 %v1679
          %v1812 = vunpack.c.l.b16 %v1680
          %v1813 = vunpack.c.l.b16 %v1681
          %v1814 = vunpack.c.l.b16 %v1682
          %v1815 = vunpack.c.l.b16 %v1683
          %v1816 = vpack.c.b16 %v1807, %v1806
          %v1817 = vpack.c.b16 %v1809, %v1808
          %v1818 = vpack.c.b16 %v1811, %v1810
          %v1819 = vpack.c.b16 %v1813, %v1812
          %v1820 = vpack.c.b16 %v1815, %v1814
          %vm1821 = vcmask 31744
          %v1823 = vsel %vm1821, %v1816, 0
          %v1826 = vsel %vm1821, %v1817, 0
          %v1829 = vsel %vm1821, %v1818, 0
          %v1832 = vsel %vm1821, %v1819, 0
          %v1835 = vsel %vm1821, %v1820, 0
          %vm1837 = vcmask 1041408
          %v1839 = vsel %vm1837, %v1694, 0
          %1841 = vmatprep.subr.bf16.mxu0 0
          %1842 = vmatpush1.bf16.msra.mxu0 0
          %1843 = vmatprep.subr.bf16.mxu0 0
          %1844 = vmatpush1.bf16.msra.mxu0 0
          %1845 = vmatprep.subr.bf16.mxu0 0
          %1846 = vmatpush1.bf16.msra.mxu0 0
          %1847 = vmatprep.subr.bf16.mxu0 0
          %1848 = vmatpush1.bf16.msra.mxu0 0
          %1849 = vmatprep.subr.bf16.mxu0 0
          %1850 = vmatpush1.bf16.msra.mxu0 0
          %1851 = vmatprep.subr.bf16.mxu0 0
          %1852 = vmatpush1.bf16.msra.mxu0 0
          %1853 = vmatprep.subr.bf16.mxu0 0
          %1854 = vmatpush1.bf16.msra.mxu0 0
          %1855 = vmatprep.subr.bf16.mxu0 0
          %1856 = vmatpush1.bf16.msra.mxu0 %v1839
          %1857 = vmatprep.subr.bf16.mxu0 0
          %1858 = vmatpush2.bf16.msra.mxu0 0
          %1859 = vmatprep.subr.bf16.mxu0 0
          %1860 = vmatpush2.bf16.msra.mxu0 0
          %1861 = vmatprep.subr.bf16.mxu0 0
          %1862 = vmatpush2.bf16.msra.mxu0 0
          %1863 = vmatprep.subr.bf16.mxu0 0
          %1864 = vmatpush2.bf16.msra.mxu0 0
          %1865 = vmatprep.subr.bf16.mxu0 0
          %1866 = vmatpush2.bf16.msra.mxu0 0
          %1867 = vmatprep.subr.bf16.mxu0 0
          %1868 = vmatpush2.bf16.msra.mxu0 0
          %1869 = vmatprep.subr.bf16.mxu0 0
          %1870 = vmatpush2.bf16.msra.mxu0 0
          %1871 = vmatprep.subr.bf16.mxu0 0
          %1872 = vmatpush2.bf16.msra.mxu0 0
          %1873 = vmatprep.mubr.bf16.mxu0 0
          %1874 = vmatmul.mubr.bf16.gmra.mxu0 %v1823
          %v1875 = vpop.f32.mrf.mxu0
          %v1876 = vadd.f32 %v1699, %v1875
          %v1877 = vpop.f32.mrf.mxu0
          %v1878 = vpop.f32.mrf.mxu0
          %v1879 = vadd.f32 %v1704, %v1878
          %v1880 = vpop.f32.mrf.mxu0
          %1881 = vmatprep.mubr.bf16.mxu0 0
          %1882 = vmatmul.mubr.bf16.gmra.mxu0 %v1826
          %v1883 = vpop.f32.mrf.mxu0
          %v1884 = vadd.f32 %v1709, %v1883
          %v1885 = vpop.f32.mrf.mxu0
          %v1886 = vpop.f32.mrf.mxu0
          %v1887 = vadd.f32 %v1714, %v1886
          %v1888 = vpop.f32.mrf.mxu0
          %1889 = vmatprep.mubr.bf16.mxu0 0
          %1890 = vmatmul.mubr.bf16.gmra.mxu0 %v1829
          %v1891 = vpop.f32.mrf.mxu0
          %v1892 = vadd.f32 %v1719, %v1891
          %v1893 = vpop.f32.mrf.mxu0
          %v1894 = vpop.f32.mrf.mxu0
          %v1895 = vadd.f32 %v1724, %v1894
          %v1896 = vpop.f32.mrf.mxu0
          %1897 = vmatprep.mubr.bf16.mxu0 0
          %1898 = vmatmul.mubr.bf16.gmra.mxu0 %v1832
          %v1899 = vpop.f32.mrf.mxu0
          %v1900 = vadd.f32 %v1729, %v1899
          %v1901 = vpop.f32.mrf.mxu0
          %v1902 = vpop.f32.mrf.mxu0
          %v1903 = vadd.f32 %v1734, %v1902
          %v1904 = vpop.f32.mrf.mxu0
          %1905 = vmatprep.mubr.bf16.mxu0 0
          %1906 = vmatmul.mubr.bf16.gmra.mxu0 %v1835
          %v1907 = vpop.f32.mrf.mxu0
          %v1908 = vadd.f32 %v1739, %v1907
          %v1909 = vpop.f32.mrf.mxu0
          %v1910 = vpop.f32.mrf.mxu0
          %v1911 = vadd.f32 %v1744, %v1910
          %v1912 = vpop.f32.mrf.mxu0
          %1913 = vdwg.mxu0
          %v1924 = vunpack.c.l.b16 %v1684
          %v1925 = vunpack.c.l.b16 %v1685
          %v1926 = vunpack.c.l.b16 %v1686
          %v1927 = vunpack.c.l.b16 %v1687
          %v1928 = vunpack.c.l.b16 %v1688
          %v1929 = vunpack.c.l.b16 %v1689
          %v1930 = vunpack.c.l.b16 %v1690
          %v1931 = vunpack.c.l.b16 %v1691
          %v1932 = vunpack.c.l.b16 %v1692
          %v1933 = vunpack.c.l.b16 %v1693
          %v1934 = vpack.c.b16 %v1925, %v1924
          %v1935 = vpack.c.b16 %v1927, %v1926
          %v1936 = vpack.c.b16 %v1929, %v1928
          %v1937 = vpack.c.b16 %v1931, %v1930
          %v1938 = vpack.c.b16 %v1933, %v1932
          %v1940 = vsel %vm1821, %v1934, 0
          %v1943 = vsel %vm1821, %v1935, 0
          %v1946 = vsel %vm1821, %v1936, 0
          %v1949 = vsel %vm1821, %v1937, 0
          %v1952 = vsel %vm1821, %v1938, 0
          %v1955 = vsel %vm1837, %v1695, 0
          %1957 = vmatprep.subr.bf16.mxu0 0
          %1958 = vmatpush1.bf16.msra.mxu0 0
          %1959 = vmatprep.subr.bf16.mxu0 0
          %1960 = vmatpush1.bf16.msra.mxu0 0
          %1961 = vmatprep.subr.bf16.mxu0 0
          %1962 = vmatpush1.bf16.msra.mxu0 0
          %1963 = vmatprep.subr.bf16.mxu0 0
          %1964 = vmatpush1.bf16.msra.mxu0 0
          %1965 = vmatprep.subr.bf16.mxu0 0
          %1966 = vmatpush1.bf16.msra.mxu0 0
          %1967 = vmatprep.subr.bf16.mxu0 0
          %1968 = vmatpush1.bf16.msra.mxu0 0
          %1969 = vmatprep.subr.bf16.mxu0 0
          %1970 = vmatpush1.bf16.msra.mxu0 0
          %1971 = vmatprep.subr.bf16.mxu0 0
          %1972 = vmatpush1.bf16.msra.mxu0 %v1955
          %1973 = vmatprep.subr.bf16.mxu0 0
          %1974 = vmatpush2.bf16.msra.mxu0 0
          %1975 = vmatprep.subr.bf16.mxu0 0
          %1976 = vmatpush2.bf16.msra.mxu0 0
          %1977 = vmatprep.subr.bf16.mxu0 0
          %1978 = vmatpush2.bf16.msra.mxu0 0
          %1979 = vmatprep.subr.bf16.mxu0 0
          %1980 = vmatpush2.bf16.msra.mxu0 0
          %1981 = vmatprep.subr.bf16.mxu0 0
          %1982 = vmatpush2.bf16.msra.mxu0 0
          %1983 = vmatprep.subr.bf16.mxu0 0
          %1984 = vmatpush2.bf16.msra.mxu0 0
          %1985 = vmatprep.subr.bf16.mxu0 0
          %1986 = vmatpush2.bf16.msra.mxu0 0
          %1987 = vmatprep.subr.bf16.mxu0 0
          %1988 = vmatpush2.bf16.msra.mxu0 0
          %1989 = vmatprep.mubr.bf16.mxu0 0
          %1990 = vmatmul.mubr.bf16.gmra.mxu0 %v1940
          %v1991 = vpop.f32.mrf.mxu0
          %v1992 = vadd.f32 %v1749, %v1991
          %v1993 = vpop.f32.mrf.mxu0
          %v1994 = vpop.f32.mrf.mxu0
          %v1995 = vadd.f32 %v1754, %v1994
          %v1996 = vpop.f32.mrf.mxu0
          %1997 = vmatprep.mubr.bf16.mxu0 0
          %1998 = vmatmul.mubr.bf16.gmra.mxu0 %v1943
          %v1999 = vpop.f32.mrf.mxu0
          %v2000 = vadd.f32 %v1759, %v1999
          %v2001 = vpop.f32.mrf.mxu0
          %v2002 = vpop.f32.mrf.mxu0
          %v2003 = vadd.f32 %v1764, %v2002
          %v2004 = vpop.f32.mrf.mxu0
          %2005 = vmatprep.mubr.bf16.mxu0 0
          %2006 = vmatmul.mubr.bf16.gmra.mxu0 %v1946
          %v2007 = vpop.f32.mrf.mxu0
          %v2008 = vadd.f32 %v1769, %v2007
          %v2009 = vpop.f32.mrf.mxu0
          %v2010 = vpop.f32.mrf.mxu0
          %v2011 = vadd.f32 %v1774, %v2010
          %v2012 = vpop.f32.mrf.mxu0
          %2013 = vmatprep.mubr.bf16.mxu0 0
          %2014 = vmatmul.mubr.bf16.gmra.mxu0 %v1949
          %v2015 = vpop.f32.mrf.mxu0
          %v2016 = vadd.f32 %v1779, %v2015
          %v2017 = vpop.f32.mrf.mxu0
          %v2018 = vpop.f32.mrf.mxu0
          %v2019 = vadd.f32 %v1784, %v2018
          %v2020 = vpop.f32.mrf.mxu0
          %2021 = vmatprep.mubr.bf16.mxu0 0
          %2022 = vmatmul.mubr.bf16.gmra.mxu0 %v1952
          %v2023 = vpop.f32.mrf.mxu0
          %v2024 = vadd.f32 %v1789, %v2023
          %v2025 = vpop.f32.mrf.mxu0
          %v2026 = vpop.f32.mrf.mxu0
          %v2027 = vadd.f32 %v1794, %v2026
          %v2028 = vpop.f32.mrf.mxu0
          %2029 = vdwg.mxu0
          %v2030 = vld [vmem:[#allocation2] sm:$0xff]
          %v2031 = vld [vmem:[#allocation2 + $0x8] sm:$0xff]
          %v2032 = vld [vmem:[#allocation2 + $0x10] sm:$0xff]
          %v2033 = vld [vmem:[#allocation2 + $0x18] sm:$0xff]
          %v2034 = vld [vmem:[#allocation2 + $0x20] sm:$0xff]
          %v2035 = vld [vmem:[#allocation2 + $0x28] sm:$0xff]
          %v2036 = vld [vmem:[#allocation2 + $0x30] sm:$0xff]
          %v2037 = vld [vmem:[#allocation2 + $0x38] sm:$0xff]
          %v2038 = vld [vmem:[#allocation2 + $0x40] sm:$0xff]
          %v2039 = vld [vmem:[#allocation2 + $0x48] sm:$0xff]
          %v2040 = vld [vmem:[#allocation3] sm:$0xff]
          %v2041 = vld [vmem:[#allocation3 + $0x8] sm:$0xff]
          %v2042 = vld [vmem:[#allocation3 + $0x10] sm:$0xff]
          %v2043 = vld [vmem:[#allocation3 + $0x18] sm:$0xff]
          %v2044 = vld [vmem:[#allocation3 + $0x20] sm:$0xff]
          %v2045 = vld [vmem:[#allocation3 + $0x28] sm:$0xff]
          %v2046 = vld [vmem:[#allocation3 + $0x30] sm:$0xff]
          %v2047 = vld [vmem:[#allocation3 + $0x38] sm:$0xff]
          %v2048 = vld [vmem:[#allocation3 + $0x40] sm:$0xff]
          %v2049 = vld [vmem:[#allocation3 + $0x48] sm:$0xff]
          %s2050 = sld [smem:[#allocation6]]
          %s2051 = scvt.s32.f32 %s2050
          %v2052 = vld [vmem:[%s3] sm:$0xff]
          %v2053 = vld [vmem:[%s3 + $0x8] sm:$0xff]
          %v2054 = vld [vmem:[%s3 + $0x10] sm:$0xff]
          %v2055 = vld [vmem:[%s3 + $0x18] sm:$0xff]
          %v2056 = vld [vmem:[%s3 + $0x20] sm:$0xff]
          %v2057 = vld [vmem:[%s3 + $0x28] sm:$0xff]
          %v2058 = vld [vmem:[%s3 + $0x30] sm:$0xff]
          %v2059 = vld [vmem:[%s3 + $0x38] sm:$0xff]
          %v2060 = vld [vmem:[%s3 + $0x40] sm:$0xff]
          %v2061 = vld [vmem:[%s3 + $0x48] sm:$0xff]
          %v2062 = vld [vmem:[%s4] sm:$0xff]
          %v2063 = vld [vmem:[%s4 + $0x8] sm:$0xff]
          %v2064 = vld [vmem:[%s4 + $0x10] sm:$0xff]
          %v2065 = vld [vmem:[%s4 + $0x18] sm:$0xff]
          %v2066 = vld [vmem:[%s4 + $0x20] sm:$0xff]
          %v2067 = vld [vmem:[%s4 + $0x28] sm:$0xff]
          %v2068 = vld [vmem:[%s4 + $0x30] sm:$0xff]
          %v2069 = vld [vmem:[%s4 + $0x38] sm:$0xff]
          %v2070 = vld [vmem:[%s4 + $0x40] sm:$0xff]
          %v2071 = vld [vmem:[%s4 + $0x48] sm:$0xff]
          %v2072 = vld [vmem:[%s5] sm:$0xff]
          %v2073 = vld [vmem:[%s5 + $0x8] sm:$0xff]
          %v2074 = vld [vmem:[%s5 + $0x10] sm:$0xff]
          %v2075 = vld [vmem:[%s5 + $0x18] sm:$0xff]
          %v2076 = vld [vmem:[%s5 + $0x20] sm:$0xff]
          %v2077 = vld [vmem:[%s5 + $0x28] sm:$0xff]
          %v2078 = vld [vmem:[%s5 + $0x30] sm:$0xff]
          %v2079 = vld [vmem:[%s5 + $0x38] sm:$0xff]
          %v2080 = vld [vmem:[%s5 + $0x40] sm:$0xff]
          %v2081 = vld [vmem:[%s5 + $0x48] sm:$0xff]
          %v2082 = vstv %s2051
          %v2083 = vrcp.pop %v2082
          %v2084 = vmul.f32 %v2040, %v2083
          %v2085 = vmul.f32 %v2041, %v2083
          %v2086 = vmul.f32 %v2042, %v2083
          %v2087 = vmul.f32 %v2043, %v2083
          %v2088 = vmul.f32 %v2044, %v2083
          %v2089 = vmul.f32 %v2045, %v2083
          %v2090 = vmul.f32 %v2046, %v2083
          %v2091 = vmul.f32 %v2047, %v2083
          %v2092 = vmul.f32 %v2048, %v2083
          %v2093 = vmul.f32 %v2049, %v2083
          %v2094 = vmax.f32 %v2084, 0.0
          %v2095 = vmax.f32 %v2085, 0.0
          %v2096 = vmax.f32 %v2086, 0.0
          %v2097 = vmax.f32 %v2087, 0.0
          %v2098 = vmax.f32 %v2088, 0.0
          %v2099 = vmax.f32 %v2089, 0.0
          %v2100 = vmax.f32 %v2090, 0.0
          %v2101 = vmax.f32 %v2091, 0.0
          %v2102 = vmax.f32 %v2092, 0.0
          %v2103 = vmax.f32 %v2093, 0.0
          %2105 = vset.pattern.permute.xlu0 0
          %2106 = vperm.xlu0 %2105, %v2030
          %v2107 = vpop.permute.xlu0 %2106
          %2110 = vset.pattern.permute.xlu0 0
          %2111 = vperm.xlu0 %2110, %v2031
          %v2112 = vpop.permute.xlu0 %2111
          %2115 = vset.pattern.permute.xlu0 0
          %2116 = vperm.xlu0 %2115, %v2032
          %v2117 = vpop.permute.xlu0 %2116
          %2120 = vset.pattern.permute.xlu0 0
          %2121 = vperm.xlu0 %2120, %v2033
          %v2122 = vpop.permute.xlu0 %2121
          %2125 = vset.pattern.permute.xlu0 0
          %2126 = vperm.xlu0 %2125, %v2034
          %v2127 = vpop.permute.xlu0 %2126
          %2130 = vset.pattern.permute.xlu0 0
          %2131 = vperm.xlu0 %2130, %v2035
          %v2132 = vpop.permute.xlu0 %2131
          %2135 = vset.pattern.permute.xlu0 0
          %2136 = vperm.xlu0 %2135, %v2036
          %v2137 = vpop.permute.xlu0 %2136
          %2140 = vset.pattern.permute.xlu0 0
          %2141 = vperm.xlu0 %2140, %v2037
          %v2142 = vpop.permute.xlu0 %2141
          %2145 = vset.pattern.permute.xlu0 0
          %2146 = vperm.xlu0 %2145, %v2038
          %v2147 = vpop.permute.xlu0 %2146
          %2150 = vset.pattern.permute.xlu0 0
          %2151 = vperm.xlu0 %2150, %v2039
          %v2152 = vpop.permute.xlu0 %2151
          %v2154 = vsub.f32 %v1876, %v2107
          %v2155 = vsub.f32 %v1879, %v2112
          %v2156 = vsub.f32 %v1884, %v2117
          %v2157 = vsub.f32 %v1887, %v2122
          %v2158 = vsub.f32 %v1892, %v2127
          %v2159 = vsub.f32 %v1895, %v2132
          %v2160 = vsub.f32 %v1900, %v2137
          %v2161 = vsub.f32 %v1903, %v2142
          %v2162 = vsub.f32 %v1908, %v2147
          %v2163 = vsub.f32 %v1911, %v2152
          %v2164 = vsub.f32 %v1992, %v2107
          %v2165 = vsub.f32 %v1995, %v2112
          %v2166 = vsub.f32 %v2000, %v2117
          %v2167 = vsub.f32 %v2003, %v2122
          %v2168 = vsub.f32 %v2008, %v2127
          %v2169 = vsub.f32 %v2011, %v2132
          %v2170 = vsub.f32 %v2016, %v2137
          %v2171 = vsub.f32 %v2019, %v2142
          %v2172 = vsub.f32 %v2024, %v2147
          %v2173 = vsub.f32 %v2027, %v2152
          %v2174 = vadd.f32 %v2094, 1e-08
          %v2175 = vadd.f32 %v2095, 1e-08
          %v2176 = vadd.f32 %v2096, 1e-08
          %v2177 = vadd.f32 %v2097, 1e-08
          %v2178 = vadd.f32 %v2098, 1e-08
          %v2179 = vadd.f32 %v2099, 1e-08
          %v2180 = vadd.f32 %v2100, 1e-08
          %v2181 = vadd.f32 %v2101, 1e-08
          %v2182 = vadd.f32 %v2102, 1e-08
          %v2183 = vadd.f32 %v2103, 1e-08
          %v2184 = vrsqrt.pop %v2174
          %v2185 = vrsqrt.pop %v2175
          %v2186 = vrsqrt.pop %v2176
          %v2187 = vrsqrt.pop %v2177
          %v2188 = vrsqrt.pop %v2178
          %v2189 = vrsqrt.pop %v2179
          %v2190 = vrsqrt.pop %v2180
          %v2191 = vrsqrt.pop %v2181
          %v2192 = vrsqrt.pop %v2182
          %v2193 = vrsqrt.pop %v2183
          %2195 = vset.pattern.permute.xlu0 0
          %2196 = vperm.xlu0 %2195, %v2184
          %v2197 = vpop.permute.xlu0 %2196
          %2200 = vset.pattern.permute.xlu0 0
          %2201 = vperm.xlu0 %2200, %v2185
          %v2202 = vpop.permute.xlu0 %2201
          %2205 = vset.pattern.permute.xlu0 0
          %2206 = vperm.xlu0 %2205, %v2186
          %v2207 = vpop.permute.xlu0 %2206
          %2210 = vset.pattern.permute.xlu0 0
          %2211 = vperm.xlu0 %2210, %v2187
          %v2212 = vpop.permute.xlu0 %2211
          %2215 = vset.pattern.permute.xlu0 0
          %2216 = vperm.xlu0 %2215, %v2188
          %v2217 = vpop.permute.xlu0 %2216
          %2220 = vset.pattern.permute.xlu0 0
          %2221 = vperm.xlu0 %2220, %v2189
          %v2222 = vpop.permute.xlu0 %2221
          %2225 = vset.pattern.permute.xlu0 0
          %2226 = vperm.xlu0 %2225, %v2190
          %v2227 = vpop.permute.xlu0 %2226
          %2230 = vset.pattern.permute.xlu0 0
          %2231 = vperm.xlu0 %2230, %v2191
          %v2232 = vpop.permute.xlu0 %2231
          %2235 = vset.pattern.permute.xlu0 0
          %2236 = vperm.xlu0 %2235, %v2192
          %v2237 = vpop.permute.xlu0 %2236
          %2240 = vset.pattern.permute.xlu0 0
          %2241 = vperm.xlu0 %2240, %v2193
          %v2242 = vpop.permute.xlu0 %2241
          %v2244 = vmul.f32 %v2154, %v2197
          %v2245 = vmul.f32 %v2155, %v2202
          %v2246 = vmul.f32 %v2156, %v2207
          %v2247 = vmul.f32 %v2157, %v2212
          %v2248 = vmul.f32 %v2158, %v2217
          %v2249 = vmul.f32 %v2159, %v2222
          %v2250 = vmul.f32 %v2160, %v2227
          %v2251 = vmul.f32 %v2161, %v2232
          %v2252 = vmul.f32 %v2162, %v2237
          %v2253 = vmul.f32 %v2163, %v2242
          %v2254 = vmul.f32 %v2164, %v2197
          %v2255 = vmul.f32 %v2165, %v2202
          %v2256 = vmul.f32 %v2166, %v2207
          %v2257 = vmul.f32 %v2167, %v2212
          %v2258 = vmul.f32 %v2168, %v2217
          %v2259 = vmul.f32 %v2169, %v2222
          %v2260 = vmul.f32 %v2170, %v2227
          %v2261 = vmul.f32 %v2171, %v2232
          %v2262 = vmul.f32 %v2172, %v2237
          %v2263 = vmul.f32 %v2173, %v2242
          %2265 = vset.pattern.permute.xlu0 0
          %2266 = vperm.xlu0 %2265, %v2052
          %v2267 = vpop.permute.xlu0 %2266
          %2270 = vset.pattern.permute.xlu0 0
          %2271 = vperm.xlu0 %2270, %v2053
          %v2272 = vpop.permute.xlu0 %2271
          %2275 = vset.pattern.permute.xlu0 0
          %2276 = vperm.xlu0 %2275, %v2054
          %v2277 = vpop.permute.xlu0 %2276
          %2280 = vset.pattern.permute.xlu0 0
          %2281 = vperm.xlu0 %2280, %v2055
          %v2282 = vpop.permute.xlu0 %2281
          %2285 = vset.pattern.permute.xlu0 0
          %2286 = vperm.xlu0 %2285, %v2056
          %v2287 = vpop.permute.xlu0 %2286
          %2290 = vset.pattern.permute.xlu0 0
          %2291 = vperm.xlu0 %2290, %v2057
          %v2292 = vpop.permute.xlu0 %2291
          %2295 = vset.pattern.permute.xlu0 0
          %2296 = vperm.xlu0 %2295, %v2058
          %v2297 = vpop.permute.xlu0 %2296
          %2300 = vset.pattern.permute.xlu0 0
          %2301 = vperm.xlu0 %2300, %v2059
          %v2302 = vpop.permute.xlu0 %2301
          %2305 = vset.pattern.permute.xlu0 0
          %2306 = vperm.xlu0 %2305, %v2060
          %v2307 = vpop.permute.xlu0 %2306
          %2310 = vset.pattern.permute.xlu0 0
          %2311 = vperm.xlu0 %2310, %v2061
          %v2312 = vpop.permute.xlu0 %2311
          %v2314 = vmul.f32 %v2244, %v2267
          %v2315 = vmul.f32 %v2245, %v2272
          %v2316 = vmul.f32 %v2246, %v2277
          %v2317 = vmul.f32 %v2247, %v2282
          %v2318 = vmul.f32 %v2248, %v2287
          %v2319 = vmul.f32 %v2249, %v2292
          %v2320 = vmul.f32 %v2250, %v2297
          %v2321 = vmul.f32 %v2251, %v2302
          %v2322 = vmul.f32 %v2252, %v2307
          %v2323 = vmul.f32 %v2253, %v2312
          %v2324 = vmul.f32 %v2254, %v2267
          %v2325 = vmul.f32 %v2255, %v2272
          %v2326 = vmul.f32 %v2256, %v2277
          %v2327 = vmul.f32 %v2257, %v2282
          %v2328 = vmul.f32 %v2258, %v2287
          %v2329 = vmul.f32 %v2259, %v2292
          %v2330 = vmul.f32 %v2260, %v2297
          %v2331 = vmul.f32 %v2261, %v2302
          %v2332 = vmul.f32 %v2262, %v2307
          %v2333 = vmul.f32 %v2263, %v2312
          %2335 = vset.pattern.permute.xlu0 0
          %2336 = vperm.xlu0 %2335, %v2062
          %v2337 = vpop.permute.xlu0 %2336
          %2340 = vset.pattern.permute.xlu0 0
          %2341 = vperm.xlu0 %2340, %v2063
          %v2342 = vpop.permute.xlu0 %2341
          %2345 = vset.pattern.permute.xlu0 0
          %2346 = vperm.xlu0 %2345, %v2064
          %v2347 = vpop.permute.xlu0 %2346
          %2350 = vset.pattern.permute.xlu0 0
          %2351 = vperm.xlu0 %2350, %v2065
          %v2352 = vpop.permute.xlu0 %2351
          %2355 = vset.pattern.permute.xlu0 0
          %2356 = vperm.xlu0 %2355, %v2066
          %v2357 = vpop.permute.xlu0 %2356
          %2360 = vset.pattern.permute.xlu0 0
          %2361 = vperm.xlu0 %2360, %v2067
          %v2362 = vpop.permute.xlu0 %2361
          %2365 = vset.pattern.permute.xlu0 0
          %2366 = vperm.xlu0 %2365, %v2068
          %v2367 = vpop.permute.xlu0 %2366
          %2370 = vset.pattern.permute.xlu0 0
          %2371 = vperm.xlu0 %2370, %v2069
          %v2372 = vpop.permute.xlu0 %2371
          %2375 = vset.pattern.permute.xlu0 0
          %2376 = vperm.xlu0 %2375, %v2070
          %v2377 = vpop.permute.xlu0 %2376
          %2380 = vset.pattern.permute.xlu0 0
          %2381 = vperm.xlu0 %2380, %v2071
          %v2382 = vpop.permute.xlu0 %2381
          %v2384 = vadd.f32 %v2314, %v2337
          %v2385 = vadd.f32 %v2315, %v2342
          %v2386 = vadd.f32 %v2316, %v2347
          %v2387 = vadd.f32 %v2317, %v2352
          %v2388 = vadd.f32 %v2318, %v2357
          %v2389 = vadd.f32 %v2319, %v2362
          %v2390 = vadd.f32 %v2320, %v2367
          %v2391 = vadd.f32 %v2321, %v2372
          %v2392 = vadd.f32 %v2322, %v2377
          %v2393 = vadd.f32 %v2323, %v2382
          %v2394 = vadd.f32 %v2324, %v2337
          %v2395 = vadd.f32 %v2325, %v2342
          %v2396 = vadd.f32 %v2326, %v2347
          %v2397 = vadd.f32 %v2327, %v2352
          %v2398 = vadd.f32 %v2328, %v2357
          %v2399 = vadd.f32 %v2329, %v2362
          %v2400 = vadd.f32 %v2330, %v2367
          %v2401 = vadd.f32 %v2331, %v2372
          %v2402 = vadd.f32 %v2332, %v2377
          %v2403 = vadd.f32 %v2333, %v2382
          %v2404 = vxor.u32 %v2384, 2147483648
          %v2405 = vxor.u32 %v2385, 2147483648
          %v2406 = vxor.u32 %v2386, 2147483648
          %v2407 = vxor.u32 %v2387, 2147483648
          %v2408 = vxor.u32 %v2388, 2147483648
          %v2409 = vxor.u32 %v2389, 2147483648
          %v2410 = vxor.u32 %v2390, 2147483648
          %v2411 = vxor.u32 %v2391, 2147483648
          %v2412 = vxor.u32 %v2392, 2147483648
          %v2413 = vxor.u32 %v2393, 2147483648
          %v2414 = vxor.u32 %v2394, 2147483648
          %v2415 = vxor.u32 %v2395, 2147483648
          %v2416 = vxor.u32 %v2396, 2147483648
          %v2417 = vxor.u32 %v2397, 2147483648
          %v2418 = vxor.u32 %v2398, 2147483648
          %v2419 = vxor.u32 %v2399, 2147483648
          %v2420 = vxor.u32 %v2400, 2147483648
          %v2421 = vxor.u32 %v2401, 2147483648
          %v2422 = vxor.u32 %v2402, 2147483648
          %v2423 = vxor.u32 %v2403, 2147483648
          %v2424 = vmul.f32 %v2404, 1.442695
          %v2425 = vpow.pop %v2424
          %v2426 = vmul.f32 %v2405, 1.442695
          %v2427 = vpow.pop %v2426
          %v2428 = vmul.f32 %v2406, 1.442695
          %v2429 = vpow.pop %v2428
          %v2430 = vmul.f32 %v2407, 1.442695
          %v2431 = vpow.pop %v2430
          %v2432 = vmul.f32 %v2408, 1.442695
          %v2433 = vpow.pop %v2432
          %v2434 = vmul.f32 %v2409, 1.442695
          %v2435 = vpow.pop %v2434
          %v2436 = vmul.f32 %v2410, 1.442695
          %v2437 = vpow.pop %v2436
          %v2438 = vmul.f32 %v2411, 1.442695
          %v2439 = vpow.pop %v2438
          %v2440 = vmul.f32 %v2412, 1.442695
          %v2441 = vpow.pop %v2440
          %v2442 = vmul.f32 %v2413, 1.442695
          %v2443 = vpow.pop %v2442
          %v2444 = vmul.f32 %v2414, 1.442695
          %v2445 = vpow.pop %v2444
          %v2446 = vmul.f32 %v2415, 1.442695
          %v2447 = vpow.pop %v2446
          %v2448 = vmul.f32 %v2416, 1.442695
          %v2449 = vpow.pop %v2448
          %v2450 = vmul.f32 %v2417, 1.442695
          %v2451 = vpow.pop %v2450
          %v2452 = vmul.f32 %v2418, 1.442695
          %v2453 = vpow.pop %v2452
          %v2454 = vmul.f32 %v2419, 1.442695
          %v2455 = vpow.pop %v2454
          %v2456 = vmul.f32 %v2420, 1.442695
          %v2457 = vpow.pop %v2456
          %v2458 = vmul.f32 %v2421, 1.442695
          %v2459 = vpow.pop %v2458
          %v2460 = vmul.f32 %v2422, 1.442695
          %v2461 = vpow.pop %v2460
          %v2462 = vmul.f32 %v2423, 1.442695
          %v2463 = vpow.pop %v2462
          %v2464 = vadd.f32 %v2425, 1.0
          %v2465 = vadd.f32 %v2427, 1.0
          %v2466 = vadd.f32 %v2429, 1.0
          %v2467 = vadd.f32 %v2431, 1.0
          %v2468 = vadd.f32 %v2433, 1.0
          %v2469 = vadd.f32 %v2435, 1.0
          %v2470 = vadd.f32 %v2437, 1.0
          %v2471 = vadd.f32 %v2439, 1.0
          %v2472 = vadd.f32 %v2441, 1.0
          %v2473 = vadd.f32 %v2443, 1.0
          %v2474 = vadd.f32 %v2445, 1.0
          %v2475 = vadd.f32 %v2447, 1.0
          %v2476 = vadd.f32 %v2449, 1.0
          %v2477 = vadd.f32 %v2451, 1.0
          %v2478 = vadd.f32 %v2453, 1.0
          %v2479 = vadd.f32 %v2455, 1.0
          %v2480 = vadd.f32 %v2457, 1.0
          %v2481 = vadd.f32 %v2459, 1.0
          %v2482 = vadd.f32 %v2461, 1.0
          %v2483 = vadd.f32 %v2463, 1.0
          %v2484 = vrcp.pop %v2464
          %v2485 = vmul.f32 1.0, %v2484
          %v2486 = vrcp.pop %v2465
          %v2487 = vmul.f32 1.0, %v2486
          %v2488 = vrcp.pop %v2466
          %v2489 = vmul.f32 1.0, %v2488
          %v2490 = vrcp.pop %v2467
          %v2491 = vmul.f32 1.0, %v2490
          %v2492 = vrcp.pop %v2468
          %v2493 = vmul.f32 1.0, %v2492
          %v2494 = vrcp.pop %v2469
          %v2495 = vmul.f32 1.0, %v2494
          %v2496 = vrcp.pop %v2470
          %v2497 = vmul.f32 1.0, %v2496
          %v2498 = vrcp.pop %v2471
          %v2499 = vmul.f32 1.0, %v2498
          %v2500 = vrcp.pop %v2472
          %v2501 = vmul.f32 1.0, %v2500
          %v2502 = vrcp.pop %v2473
          %v2503 = vmul.f32 1.0, %v2502
          %v2504 = vrcp.pop %v2474
          %v2505 = vmul.f32 1.0, %v2504
          %v2506 = vrcp.pop %v2475
          %v2507 = vmul.f32 1.0, %v2506
          %v2508 = vrcp.pop %v2476
          %v2509 = vmul.f32 1.0, %v2508
          %v2510 = vrcp.pop %v2477
          %v2511 = vmul.f32 1.0, %v2510
          %v2512 = vrcp.pop %v2478
          %v2513 = vmul.f32 1.0, %v2512
          %v2514 = vrcp.pop %v2479
          %v2515 = vmul.f32 1.0, %v2514
          %v2516 = vrcp.pop %v2480
          %v2517 = vmul.f32 1.0, %v2516
          %v2518 = vrcp.pop %v2481
          %v2519 = vmul.f32 1.0, %v2518
          %v2520 = vrcp.pop %v2482
          %v2521 = vmul.f32 1.0, %v2520
          %v2522 = vrcp.pop %v2483
          %v2523 = vmul.f32 1.0, %v2522
          %v2524 = vsub.f32 1.0, %v2485
          %v2525 = vsub.f32 1.0, %v2487
          %v2526 = vsub.f32 1.0, %v2489
          %v2527 = vsub.f32 1.0, %v2491
          %v2528 = vsub.f32 1.0, %v2493
          %v2529 = vsub.f32 1.0, %v2495
          %v2530 = vsub.f32 1.0, %v2497
          %v2531 = vsub.f32 1.0, %v2499
          %v2532 = vsub.f32 1.0, %v2501
          %v2533 = vsub.f32 1.0, %v2503
          %v2534 = vsub.f32 1.0, %v2505
          %v2535 = vsub.f32 1.0, %v2507
          %v2536 = vsub.f32 1.0, %v2509
          %v2537 = vsub.f32 1.0, %v2511
          %v2538 = vsub.f32 1.0, %v2513
          %v2539 = vsub.f32 1.0, %v2515
          %v2540 = vsub.f32 1.0, %v2517
          %v2541 = vsub.f32 1.0, %v2519
          %v2542 = vsub.f32 1.0, %v2521
          %v2543 = vsub.f32 1.0, %v2523
          %2545 = vset.pattern.permute.xlu0 0
          %2546 = vperm.xlu0 %2545, %v2072
          %v2547 = vpop.permute.xlu0 %2546
          %2550 = vset.pattern.permute.xlu0 0
          %2551 = vperm.xlu0 %2550, %v2073
          %v2552 = vpop.permute.xlu0 %2551
          %2555 = vset.pattern.permute.xlu0 0
          %2556 = vperm.xlu0 %2555, %v2074
          %v2557 = vpop.permute.xlu0 %2556
          %2560 = vset.pattern.permute.xlu0 0
          %2561 = vperm.xlu0 %2560, %v2075
          %v2562 = vpop.permute.xlu0 %2561
          %2565 = vset.pattern.permute.xlu0 0
          %2566 = vperm.xlu0 %2565, %v2076
          %v2567 = vpop.permute.xlu0 %2566
          %2570 = vset.pattern.permute.xlu0 0
          %2571 = vperm.xlu0 %2570, %v2077
          %v2572 = vpop.permute.xlu0 %2571
          %2575 = vset.pattern.permute.xlu0 0
          %2576 = vperm.xlu0 %2575, %v2078
          %v2577 = vpop.permute.xlu0 %2576
          %2580 = vset.pattern.permute.xlu0 0
          %2581 = vperm.xlu0 %2580, %v2079
          %v2582 = vpop.permute.xlu0 %2581
          %2585 = vset.pattern.permute.xlu0 0
          %2586 = vperm.xlu0 %2585, %v2080
          %v2587 = vpop.permute.xlu0 %2586
          %2590 = vset.pattern.permute.xlu0 0
          %2591 = vperm.xlu0 %2590, %v2081
          %v2592 = vpop.permute.xlu0 %2591
          %v2594 = vmul.f32 %v2547, %v2524
          %v2595 = vmul.f32 %v2552, %v2525
          %v2596 = vmul.f32 %v2557, %v2526
          %v2597 = vmul.f32 %v2562, %v2527
          %v2598 = vmul.f32 %v2567, %v2528
          %v2599 = vmul.f32 %v2572, %v2529
          %v2600 = vmul.f32 %v2577, %v2530
          %v2601 = vmul.f32 %v2582, %v2531
          %v2602 = vmul.f32 %v2587, %v2532
          %v2603 = vmul.f32 %v2592, %v2533
          %v2604 = vmul.f32 %v2547, %v2534
          %v2605 = vmul.f32 %v2552, %v2535
          %v2606 = vmul.f32 %v2557, %v2536
          %v2607 = vmul.f32 %v2562, %v2537
          %v2608 = vmul.f32 %v2567, %v2538
          %v2609 = vmul.f32 %v2572, %v2539
          %v2610 = vmul.f32 %v2577, %v2540
          %v2611 = vmul.f32 %v2582, %v2541
          %v2612 = vmul.f32 %v2587, %v2542
          %v2613 = vmul.f32 %v2592, %v2543
          %v2614 = vadd.f32 %v2594, %v2485
          %v2615 = vadd.f32 %v2595, %v2487
          %v2616 = vadd.f32 %v2596, %v2489
          %v2617 = vadd.f32 %v2597, %v2491
          %v2618 = vadd.f32 %v2598, %v2493
          %v2619 = vadd.f32 %v2599, %v2495
          %v2620 = vadd.f32 %v2600, %v2497
          %v2621 = vadd.f32 %v2601, %v2499
          %v2622 = vadd.f32 %v2602, %v2501
          %v2623 = vadd.f32 %v2603, %v2503
          %v2624 = vadd.f32 %v2604, %v2505
          %v2625 = vadd.f32 %v2605, %v2507
          %v2626 = vadd.f32 %v2606, %v2509
          %v2627 = vadd.f32 %v2607, %v2511
          %v2628 = vadd.f32 %v2608, %v2513
          %v2629 = vadd.f32 %v2609, %v2515
          %v2630 = vadd.f32 %v2610, %v2517
          %v2631 = vadd.f32 %v2611, %v2519
          %v2632 = vadd.f32 %v2612, %v2521
          %v2633 = vadd.f32 %v2613, %v2523
          %v2634 = vmul.f32 %v2614, %v1876
          %v2635 = vmul.f32 %v2615, %v1879
          %v2636 = vmul.f32 %v2616, %v1884
          %v2637 = vmul.f32 %v2617, %v1887
          %v2638 = vmul.f32 %v2618, %v1892
          %v2639 = vmul.f32 %v2619, %v1895
          %v2640 = vmul.f32 %v2620, %v1900
          %v2641 = vmul.f32 %v2621, %v1903
          %v2642 = vmul.f32 %v2622, %v1908
          %v2643 = vmul.f32 %v2623, %v1911
          %v2644 = vmul.f32 %v2624, %v1992
          %v2645 = vmul.f32 %v2625, %v1995
          %v2646 = vmul.f32 %v2626, %v2000
          %v2647 = vmul.f32 %v2627, %v2003
          %v2648 = vmul.f32 %v2628, %v2008
          %v2649 = vmul.f32 %v2629, %v2011
          %v2650 = vmul.f32 %v2630, %v2016
          %v2651 = vmul.f32 %v2631, %v2019
          %v2652 = vmul.f32 %v2632, %v2024
          %v2653 = vmul.f32 %v2633, %v2027
          %v2654 = vld [vmem:[%s6] sm:$0xf]
          %v2655 = vld [vmem:[%s6 + $0x4] sm:$0xf]
          %v2656 = vld [vmem:[%s6 + $0x8] sm:$0xf]
          %v2657 = vld [vmem:[%s6 + $0xc] sm:$0xf]
          %v2658 = vld [vmem:[%s6 + $0x10] sm:$0xf]
          %v2659 = vpack.c.bf16 %v2635, %v2634
          %v2660 = vpack.c.bf16 %v2637, %v2636
          %v2661 = vpack.c.bf16 %v2639, %v2638
          %v2662 = vpack.c.bf16 %v2641, %v2640
          %v2663 = vpack.c.bf16 %v2643, %v2642
          %v2664 = vpack.c.bf16 %v2645, %v2644
          %v2665 = vpack.c.bf16 %v2647, %v2646
          %v2666 = vpack.c.bf16 %v2649, %v2648
          %v2667 = vpack.c.bf16 %v2651, %v2650
          %v2668 = vpack.c.bf16 %v2653, %v2652
          %v2669 = vld [vmem:[%s7] sm:$0xff]
          %v2670 = vld [vmem:[%s7 + $0x8] sm:$0xff]
          %v2671 = vld [vmem:[%s7 + $0x10] sm:$0xff]
          %v2672 = vld [vmem:[%s7 + $0x18] sm:$0xff]
          %v2673 = vld [vmem:[%s7 + $0x20] sm:$0xff]
          %2675 = vset.pattern.permute.xlu0 0
          %2676 = vperm.xlu0 %2675, %v2669
          %v2677 = vpop.permute.xlu0 %2676
          %2680 = vset.pattern.permute.xlu0 0
          %2681 = vperm.xlu0 %2680, %v2670
          %v2682 = vpop.permute.xlu0 %2681
          %2685 = vset.pattern.permute.xlu0 0
          %2686 = vperm.xlu0 %2685, %v2671
          %v2687 = vpop.permute.xlu0 %2686
          %2690 = vset.pattern.permute.xlu0 0
          %2691 = vperm.xlu0 %2690, %v2672
          %v2692 = vpop.permute.xlu0 %2691
          %2695 = vset.pattern.permute.xlu0 0
          %2696 = vperm.xlu0 %2695, %v2673
          %v2697 = vpop.permute.xlu0 %2696
          %v2704 = vunpack.c.l.b16 %v2654
          %v2705 = vunpack.c.l.b16 %v2655
          %v2706 = vunpack.c.l.b16 %v2656
          %v2707 = vunpack.c.l.b16 %v2657
          %v2708 = vunpack.c.l.b16 %v2658
          %v2709 = vpack.c.b16 %v2705, %v2704
          %v2710 = vpack.c.b16 %v2707, %v2706
          %v2711 = vpack.c.b16 %v2708, %v2708
          %vm2712 = vcmask 654336
          %v2714 = vsel %vm2712, %v2709, 0
          %v2717 = vsel %vm2712, %v2710, 0
          %v2720 = vsel %vm2712, %v2711, 0
          %2722 = vmatprep.subr.bf16.mxu0 0
          %2723 = vmatpush1.bf16.msra.mxu0 0
          %2724 = vmatprep.subr.bf16.mxu0 0
          %2725 = vmatpush1.bf16.msra.mxu0 0
          %2726 = vmatprep.subr.bf16.mxu0 0
          %2727 = vmatpush1.bf16.msra.mxu0 0
          %2728 = vmatprep.subr.bf16.mxu0 0
          %2729 = vmatpush1.bf16.msra.mxu0 %v2663
          %2730 = vmatprep.subr.bf16.mxu0 0
          %2731 = vmatpush1.bf16.msra.mxu0 %v2662
          %2732 = vmatprep.subr.bf16.mxu0 0
          %2733 = vmatpush1.bf16.msra.mxu0 %v2661
          %2734 = vmatprep.subr.bf16.mxu0 0
          %2735 = vmatpush1.bf16.msra.mxu0 %v2660
          %2736 = vmatprep.subr.bf16.mxu0 0
          %2737 = vmatpush1.bf16.msra.mxu0 %v2659
          %2738 = vmatprep.subr.bf16.mxu0 0
          %2739 = vmatpush2.bf16.msra.mxu0 0
          %2740 = vmatprep.subr.bf16.mxu0 0
          %2741 = vmatpush2.bf16.msra.mxu0 0
          %2742 = vmatprep.subr.bf16.mxu0 0
          %2743 = vmatpush2.bf16.msra.mxu0 0
          %2744 = vmatprep.subr.bf16.mxu0 0
          %2745 = vmatpush2.bf16.msra.mxu0 0
          %2746 = vmatprep.subr.bf16.mxu0 0
          %2747 = vmatpush2.bf16.msra.mxu0 0
          %2748 = vmatprep.subr.bf16.mxu0 0
          %2749 = vmatpush2.bf16.msra.mxu0 0
          %2750 = vmatprep.subr.bf16.mxu0 0
          %2751 = vmatpush2.bf16.msra.mxu0 0
          %2752 = vmatprep.subr.bf16.mxu0 0
          %2753 = vmatpush2.bf16.msra.mxu0 0
          %2754 = vmatprep.mubr.bf16.mxu0 0
          %2755 = vmatmul.mubr.bf16.gmra.mxu0 %v2714
          %v2756 = vpop.f32.mrf.mxu0
          %v2757 = vadd.f32 %v2677, %v2756
          %v2758 = vpop.f32.mrf.mxu0
          %v2759 = vpop.f32.mrf.mxu0
          %v2760 = vadd.f32 %v2682, %v2759
          %v2761 = vpop.f32.mrf.mxu0
          %2762 = vmatprep.mubr.bf16.mxu0 0
          %2763 = vmatmul.mubr.bf16.gmra.mxu0 %v2717
          %v2764 = vpop.f32.mrf.mxu0
          %v2765 = vadd.f32 %v2687, %v2764
          %v2766 = vpop.f32.mrf.mxu0
          %v2767 = vpop.f32.mrf.mxu0
          %v2768 = vadd.f32 %v2692, %v2767
          %v2769 = vpop.f32.mrf.mxu0
          %2770 = vmatprep.mubr.bf16.mxu0 0
          %2771 = vmatmul.mubr.bf16.gmra.mxu0 %v2720
          %v2772 = vpop.f32.mrf.mxu0
          %v2773 = vadd.f32 %v2697, %v2772
          %v2774 = vpop.f32.mrf.mxu0
          %v2775 = vpop.f32.mrf.mxu0
          %v2776 = vpop.f32.mrf.mxu0
          %2777 = vdwg.mxu0
          %2778 = vmatprep.subr.bf16.mxu0 0
          %2779 = vmatpush1.bf16.msra.mxu0 0
          %2780 = vmatprep.subr.bf16.mxu0 0
          %2781 = vmatpush1.bf16.msra.mxu0 0
          %2782 = vmatprep.subr.bf16.mxu0 0
          %2783 = vmatpush1.bf16.msra.mxu0 0
          %2784 = vmatprep.subr.bf16.mxu0 0
          %2785 = vmatpush1.bf16.msra.mxu0 %v2668
          %2786 = vmatprep.subr.bf16.mxu0 0
          %2787 = vmatpush1.bf16.msra.mxu0 %v2667
          %2788 = vmatprep.subr.bf16.mxu0 0
          %2789 = vmatpush1.bf16.msra.mxu0 %v2666
          %2790 = vmatprep.subr.bf16.mxu0 0
          %2791 = vmatpush1.bf16.msra.mxu0 %v2665
          %2792 = vmatprep.subr.bf16.mxu0 0
          %2793 = vmatpush1.bf16.msra.mxu0 %v2664
          %2794 = vmatprep.subr.bf16.mxu0 0
          %2795 = vmatpush2.bf16.msra.mxu0 0
          %2796 = vmatprep.subr.bf16.mxu0 0
          %2797 = vmatpush2.bf16.msra.mxu0 0
          %2798 = vmatprep.subr.bf16.mxu0 0
          %2799 = vmatpush2.bf16.msra.mxu0 0
          %2800 = vmatprep.subr.bf16.mxu0 0
          %2801 = vmatpush2.bf16.msra.mxu0 0
          %2802 = vmatprep.subr.bf16.mxu0 0
          %2803 = vmatpush2.bf16.msra.mxu0 0
          %2804 = vmatprep.subr.bf16.mxu0 0
          %2805 = vmatpush2.bf16.msra.mxu0 0
          %2806 = vmatprep.subr.bf16.mxu0 0
          %2807 = vmatpush2.bf16.msra.mxu0 0
          %2808 = vmatprep.subr.bf16.mxu0 0
          %2809 = vmatpush2.bf16.msra.mxu0 0
          %2810 = vmatprep.mubr.bf16.mxu0 0
          %2811 = vmatmul.mubr.bf16.gmra.mxu0 %v2714
          %v2812 = vpop.f32.mrf.mxu0
          %v2813 = vadd.f32 %v2677, %v2812
          %v2814 = vpop.f32.mrf.mxu0
          %v2815 = vpop.f32.mrf.mxu0
          %v2816 = vadd.f32 %v2682, %v2815
          %v2817 = vpop.f32.mrf.mxu0
          %2818 = vmatprep.mubr.bf16.mxu0 0
          %2819 = vmatmul.mubr.bf16.gmra.mxu0 %v2717
          %v2820 = vpop.f32.mrf.mxu0
          %v2821 = vadd.f32 %v2687, %v2820
          %v2822 = vpop.f32.mrf.mxu0
          %v2823 = vpop.f32.mrf.mxu0
          %v2824 = vadd.f32 %v2692, %v2823
          %v2825 = vpop.f32.mrf.mxu0
          %2826 = vmatprep.mubr.bf16.mxu0 0
          %2827 = vmatmul.mubr.bf16.gmra.mxu0 %v2720
          %v2828 = vpop.f32.mrf.mxu0
          %v2829 = vadd.f32 %v2697, %v2828
          %v2830 = vpop.f32.mrf.mxu0
          %v2831 = vpop.f32.mrf.mxu0
          %v2832 = vpop.f32.mrf.mxu0
          %2833 = vdwg.mxu0
          %p2834 = scmp.eq.s32.totalorder %s34, 1
          // Predicated region
          $region85: #{tpu_custom_call.1} parent=83 // pred_check
            %p2835 = pneg %p2834
          $region86: #{tpu_custom_call.1} parent=83 // pred_check_branch
            %2837 = sbr.rel (%p2835) target = $region88
          $region87: #{tpu_custom_call.1} parent=83 // pred_region
            %v2838 = vsel %vm539, 1, 0
            %vm2839 = vcmp.eq.s32.totalorder %v2838, 1
            %v2840 = vsel %vm2839, %v2757, 0.0
            %v2841 = vsel %vm2839, %v2760, 0.0
            %v2842 = vsel %vm2839, %v2765, 0.0
            %v2843 = vsel %vm2839, %v2768, 0.0
            %v2844 = vsel %vm2839, %v2773, 0.0
            %v2845 = vsel %vm2839, %v2813, 0.0
            %v2846 = vsel %vm2839, %v2816, 0.0
            %v2847 = vsel %vm2839, %v2821, 0.0
            %v2848 = vsel %vm2839, %v2824, 0.0
            %v2849 = vsel %vm2839, %v2829, 0.0
            %vm2850 = vcmask 64512
            %v2851 = vsel %vm2850, %v2840, 0.0
            %v2852 = vsel %vm2850, %v2845, 0.0
            %v2853 = vadd.f32 %v2851, %v2852
            %v2854 = vsel %vm2850, %v2841, 0.0
            %v2855 = vsel %vm2850, %v2846, 0.0
            %v2856 = vadd.f32 %v2854, %v2855
            %v2857 = vsel %vm2850, %v2842, 0.0
            %v2858 = vsel %vm2850, %v2847, 0.0
            %v2859 = vadd.f32 %v2857, %v2858
            %v2860 = vsel %vm2850, %v2843, 0.0
            %v2861 = vsel %vm2850, %v2848, 0.0
            %v2862 = vadd.f32 %v2860, %v2861
            %v2863 = vsel %vm2850, %v2844, 0.0
            %v2864 = vsel %vm2850, %v2849, 0.0
            %v2865 = vadd.f32 %v2863, %v2864
            %v2866 = vsel %vm2850, %v2853, 0.0
            %2867 = vadd.xlane.f32.xlu0 %v2866
            %v2868 = vpop.xlane.xlu0 %2867
            %v2869 = vsel %vm2850, %v2856, 0.0
            %2870 = vadd.xlane.f32.xlu0 %v2869
            %v2871 = vpop.xlane.xlu0 %2870
            %v2872 = vsel %vm2850, %v2859, 0.0
            %2873 = vadd.xlane.f32.xlu0 %v2872
            %v2874 = vpop.xlane.xlu0 %2873
            %v2875 = vsel %vm2850, %v2862, 0.0
            %2876 = vadd.xlane.f32.xlu0 %v2875
            %v2877 = vpop.xlane.xlu0 %2876
            %v2878 = vsel %vm2850, %v2865, 0.0
            %2879 = vadd.xlane.f32.xlu0 %v2878
            %v2880 = vpop.xlane.xlu0 %2879
            %s2881 = smul.f32 %s535, 2.0
            %v2882 = vstv %s2881
            %v2883 = vrcp.pop %v2882
            %v2884 = vmul.f32 %v2868, %v2883
            %v2885 = vmul.f32 %v2871, %v2883
            %v2886 = vmul.f32 %v2874, %v2883
            %v2887 = vmul.f32 %v2877, %v2883
            %v2888 = vmul.f32 %v2880, %v2883
            %v2889 = vsub.f32 %v2757, %v2884
            %v2890 = vsub.f32 %v2760, %v2885
            %v2891 = vsub.f32 %v2765, %v2886
            %v2892 = vsub.f32 %v2768, %v2887
            %v2893 = vsub.f32 %v2773, %v2888
            %v2894 = vsub.f32 %v2813, %v2884
            %v2895 = vsub.f32 %v2816, %v2885
            %v2896 = vsub.f32 %v2821, %v2886
            %v2897 = vsub.f32 %v2824, %v2887
            %v2898 = vsub.f32 %v2829, %v2888
            %v2899 = vsel %vm2839, %v2889, 0.0
            %v2900 = vsel %vm2839, %v2890, 0.0
            %v2901 = vsel %vm2839, %v2891, 0.0
            %v2902 = vsel %vm2839, %v2892, 0.0
            %v2903 = vsel %vm2839, %v2893, 0.0
            %v2904 = vsel %vm2839, %v2894, 0.0
            %v2905 = vsel %vm2839, %v2895, 0.0
            %v2906 = vsel %vm2839, %v2896, 0.0
            %v2907 = vsel %vm2839, %v2897, 0.0
            %v2908 = vsel %vm2839, %v2898, 0.0
            %v2909 = vmul.f32 %v2899, %v2899
            %v2910 = vmul.f32 %v2900, %v2900
            %v2911 = vmul.f32 %v2901, %v2901
            %v2912 = vmul.f32 %v2902, %v2902
            %v2913 = vmul.f32 %v2903, %v2903
            %v2914 = vmul.f32 %v2904, %v2904
            %v2915 = vmul.f32 %v2905, %v2905
            %v2916 = vmul.f32 %v2906, %v2906
            %v2917 = vmul.f32 %v2907, %v2907
            %v2918 = vmul.f32 %v2908, %v2908
            %v2919 = vsel %vm2850, %v2909, 0.0
            %v2920 = vsel %vm2850, %v2914, 0.0
            %v2921 = vadd.f32 %v2919, %v2920
            %v2922 = vsel %vm2850, %v2910, 0.0
            %v2923 = vsel %vm2850, %v2915, 0.0
            %v2924 = vadd.f32 %v2922, %v2923
            %v2925 = vsel %vm2850, %v2911, 0.0
            %v2926 = vsel %vm2850, %v2916, 0.0
            %v2927 = vadd.f32 %v2925, %v2926
            %v2928 = vsel %vm2850, %v2912, 0.0
            %v2929 = vsel %vm2850, %v2917, 0.0
            %v2930 = vadd.f32 %v2928, %v2929
            %v2931 = vsel %vm2850, %v2913, 0.0
            %v2932 = vsel %vm2850, %v2918, 0.0
            %v2933 = vadd.f32 %v2931, %v2932
            %v2934 = vsel %vm2850, %v2921, 0.0
            %2935 = vadd.xlane.f32.xlu0 %v2934
            %v2936 = vpop.xlane.xlu0 %2935
            %v2937 = vsel %vm2850, %v2924, 0.0
            %2938 = vadd.xlane.f32.xlu0 %v2937
            %v2939 = vpop.xlane.xlu0 %2938
            %v2940 = vsel %vm2850, %v2927, 0.0
            %2941 = vadd.xlane.f32.xlu0 %v2940
            %v2942 = vpop.xlane.xlu0 %2941
            %v2943 = vsel %vm2850, %v2930, 0.0
            %2944 = vadd.xlane.f32.xlu0 %v2943
            %v2945 = vpop.xlane.xlu0 %2944
            %v2946 = vsel %vm2850, %v2933, 0.0
            %2947 = vadd.xlane.f32.xlu0 %v2946
            %v2948 = vpop.xlane.xlu0 %2947
            %s2949 = sld [smem:[#allocation6 + $0x1]]
            %s2950 = sadd.s32 %s2949, %s540
            %s2951 = scvt.s32.f32 %s2949
            %s2952 = scvt.s32.f32 %s540
            %s2953 = scvt.s32.f32 %s2950
            %v2954 = vld [vmem:[#allocation4] sm:$0xff]
            %v2955 = vld [vmem:[#allocation4 + $0x8] sm:$0xff]
            %v2956 = vld [vmem:[#allocation4 + $0x10] sm:$0xff]
            %v2957 = vld [vmem:[#allocation4 + $0x18] sm:$0xff]
            %v2958 = vld [vmem:[#allocation4 + $0x20] sm:$0xff]
            %v2959 = vsub.f32 %v2884, %v2954
            %v2960 = vsub.f32 %v2885, %v2955
            %v2961 = vsub.f32 %v2886, %v2956
            %v2962 = vsub.f32 %v2887, %v2957
            %v2963 = vsub.f32 %v2888, %v2958
            %v2964 = vstv %s2953
            %v2965 = vrcp.pop %v2964
            %s2966 = vtos %v2965
            %s2967 = smul.f32 %s2952, %s2966
            %v2968 = vstv %s2967
            %v2969 = vmul.f32 %v2959, %v2968
            %v2970 = vmul.f32 %v2960, %v2968
            %v2971 = vmul.f32 %v2961, %v2968
            %v2972 = vmul.f32 %v2962, %v2968
            %v2973 = vmul.f32 %v2963, %v2968
            %v2974 = vadd.f32 %v2954, %v2969
            %v2975 = vadd.f32 %v2955, %v2970
            %v2976 = vadd.f32 %v2956, %v2971
            %v2977 = vadd.f32 %v2957, %v2972
            %v2978 = vadd.f32 %v2958, %v2973
            %vm2979 = vcmask 7168
            %2980 = vst.msk [vmem:[#allocation4] sm:$0xff] %vm2979, %v2974
            %2981 = vst.msk [vmem:[#allocation4 + $0x8] sm:$0xff] %vm2979, %v2975
            %2982 = vst.msk [vmem:[#allocation4 + $0x10] sm:$0xff] %vm2979, %v2976
            %2983 = vst.msk [vmem:[#allocation4 + $0x18] sm:$0xff] %vm2979, %v2977
            %2984 = vst.msk [vmem:[#allocation4 + $0x20] sm:$0xff] %vm2979, %v2978
            %v2985 = vld [vmem:[#allocation5] sm:$0xff]
            %v2986 = vld [vmem:[#allocation5 + $0x8] sm:$0xff]
            %v2987 = vld [vmem:[#allocation5 + $0x10] sm:$0xff]
            %v2988 = vld [vmem:[#allocation5 + $0x18] sm:$0xff]
            %v2989 = vld [vmem:[#allocation5 + $0x20] sm:$0xff]
            %v2990 = vadd.f32 %v2985, %v2936
            %v2991 = vadd.f32 %v2986, %v2939
            %v2992 = vadd.f32 %v2987, %v2942
            %v2993 = vadd.f32 %v2988, %v2945
            %v2994 = vadd.f32 %v2989, %v2948
            %v2995 = vmul.f32 %v2959, %v2959
            %v2996 = vmul.f32 %v2960, %v2960
            %v2997 = vmul.f32 %v2961, %v2961
            %v2998 = vmul.f32 %v2962, %v2962
            %v2999 = vmul.f32 %v2963, %v2963
            %s3000 = smul.f32 %s2951, %s2952
            %v3001 = vstv %s2953
            %v3002 = vrcp.pop %v3001
            %s3003 = vtos %v3002
            %s3004 = smul.f32 %s3000, %s3003
            %v3005 = vstv %s3004
            %v3006 = vmul.f32 %v2995, %v3005
            %v3007 = vmul.f32 %v2996, %v3005
            %v3008 = vmul.f32 %v2997, %v3005
            %v3009 = vmul.f32 %v2998, %v3005
            %v3010 = vmul.f32 %v2999, %v3005
            %v3011 = vadd.f32 %v2990, %v3006
            %v3012 = vadd.f32 %v2991, %v3007
            %v3013 = vadd.f32 %v2992, %v3008
            %v3014 = vadd.f32 %v2993, %v3009
            %v3015 = vadd.f32 %v2994, %v3010
            %3016 = vst.msk [vmem:[#allocation5] sm:$0xff] %vm2979, %v3011
            %3017 = vst.msk [vmem:[#allocation5 + $0x8] sm:$0xff] %vm2979, %v3012
            %3018 = vst.msk [vmem:[#allocation5 + $0x10] sm:$0xff] %vm2979, %v3013
            %3019 = vst.msk [vmem:[#allocation5 + $0x18] sm:$0xff] %vm2979, %v3014
            %3020 = vst.msk [vmem:[#allocation5 + $0x20] sm:$0xff] %vm2979, %v3015
            %s3021 = scalar_lea.smem [#allocation6], 1
            %3022 = sst [smem:[%s3021]] %s2950
          $region88: #{tpu_custom_call.1} parent=83 // pred_fallthru
            _
          %p3023 = scmp.eq.s32.totalorder %s34, 2
          // Predicated region
          $region89: #{tpu_custom_call.1} parent=83 // pred_check
            %p3024 = pneg %p3023
          $region90: #{tpu_custom_call.1} parent=83 // pred_check_branch
            %3026 = sbr.rel (%p3024) target = $region92
          $region91: #{tpu_custom_call.1} parent=83 // pred_region
            %v3027 = vld [vmem:[#allocation4] sm:$0xff]
            %v3028 = vld [vmem:[#allocation4 + $0x8] sm:$0xff]
            %v3029 = vld [vmem:[#allocation4 + $0x10] sm:$0xff]
            %v3030 = vld [vmem:[#allocation4 + $0x18] sm:$0xff]
            %v3031 = vld [vmem:[#allocation4 + $0x20] sm:$0xff]
            %v3032 = vld [vmem:[#allocation5] sm:$0xff]
            %v3033 = vld [vmem:[#allocation5 + $0x8] sm:$0xff]
            %v3034 = vld [vmem:[#allocation5 + $0x10] sm:$0xff]
            %v3035 = vld [vmem:[#allocation5 + $0x18] sm:$0xff]
            %v3036 = vld [vmem:[#allocation5 + $0x20] sm:$0xff]
            %s3037 = sld [smem:[#allocation6 + $0x1]]
            %s3038 = scvt.s32.f32 %s3037
            %v3039 = vld [vmem:[%s8] sm:$0xff]
            %v3040 = vld [vmem:[%s8 + $0x8] sm:$0xff]
            %v3041 = vld [vmem:[%s8 + $0x10] sm:$0xff]
            %v3042 = vld [vmem:[%s8 + $0x18] sm:$0xff]
            %v3043 = vld [vmem:[%s8 + $0x20] sm:$0xff]
            %v3044 = vld [vmem:[%s9] sm:$0xff]
            %v3045 = vld [vmem:[%s9 + $0x8] sm:$0xff]
            %v3046 = vld [vmem:[%s9 + $0x10] sm:$0xff]
            %v3047 = vld [vmem:[%s9 + $0x18] sm:$0xff]
            %v3048 = vld [vmem:[%s9 + $0x20] sm:$0xff]
            %v3049 = vld [vmem:[%s10] sm:$0xff]
            %v3050 = vld [vmem:[%s10 + $0x8] sm:$0xff]
            %v3051 = vld [vmem:[%s10 + $0x10] sm:$0xff]
            %v3052 = vld [vmem:[%s10 + $0x18] sm:$0xff]
            %v3053 = vld [vmem:[%s10 + $0x20] sm:$0xff]
            %v3054 = vstv %s3038
            %v3055 = vrcp.pop %v3054
            %v3056 = vmul.f32 %v3032, %v3055
            %v3057 = vmul.f32 %v3033, %v3055
            %v3058 = vmul.f32 %v3034, %v3055
            %v3059 = vmul.f32 %v3035, %v3055
            %v3060 = vmul.f32 %v3036, %v3055
            %v3061 = vmax.f32 %v3056, 0.0
            %v3062 = vmax.f32 %v3057, 0.0
            %v3063 = vmax.f32 %v3058, 0.0
            %v3064 = vmax.f32 %v3059, 0.0
            %v3065 = vmax.f32 %v3060, 0.0
            %3067 = vset.pattern.permute.xlu0 0
            %3068 = vperm.xlu0 %3067, %v3027
            %v3069 = vpop.permute.xlu0 %3068
            %3072 = vset.pattern.permute.xlu0 0
            %3073 = vperm.xlu0 %3072, %v3028
            %v3074 = vpop.permute.xlu0 %3073
            %3077 = vset.pattern.permute.xlu0 0
            %3078 = vperm.xlu0 %3077, %v3029
            %v3079 = vpop.permute.xlu0 %3078
            %3082 = vset.pattern.permute.xlu0 0
            %3083 = vperm.xlu0 %3082, %v3030
            %v3084 = vpop.permute.xlu0 %3083
            %3087 = vset.pattern.permute.xlu0 0
            %3088 = vperm.xlu0 %3087, %v3031
            %v3089 = vpop.permute.xlu0 %3088
            %v3091 = vsub.f32 %v2757, %v3069
            %v3092 = vsub.f32 %v2760, %v3074
            %v3093 = vsub.f32 %v2765, %v3079
            %v3094 = vsub.f32 %v2768, %v3084
            %v3095 = vsub.f32 %v2773, %v3089
            %v3096 = vsub.f32 %v2813, %v3069
            %v3097 = vsub.f32 %v2816, %v3074
            %v3098 = vsub.f32 %v2821, %v3079
            %v3099 = vsub.f32 %v2824, %v3084
            %v3100 = vsub.f32 %v2829, %v3089
            %v3101 = vadd.f32 %v3061, 1e-08
            %v3102 = vadd.f32 %v3062, 1e-08
            %v3103 = vadd.f32 %v3063, 1e-08
            %v3104 = vadd.f32 %v3064, 1e-08
            %v3105 = vadd.f32 %v3065, 1e-08
            %v3106 = vrsqrt.pop %v3101
            %v3107 = vrsqrt.pop %v3102
            %v3108 = vrsqrt.pop %v3103
            %v3109 = vrsqrt.pop %v3104
            %v3110 = vrsqrt.pop %v3105
            %3112 = vset.pattern.permute.xlu0 0
            %3113 = vperm.xlu0 %3112, %v3106
            %v3114 = vpop.permute.xlu0 %3113
            %3117 = vset.pattern.permute.xlu0 0
            %3118 = vperm.xlu0 %3117, %v3107
            %v3119 = vpop.permute.xlu0 %3118
            %3122 = vset.pattern.permute.xlu0 0
            %3123 = vperm.xlu0 %3122, %v3108
            %v3124 = vpop.permute.xlu0 %3123
            %3127 = vset.pattern.permute.xlu0 0
            %3128 = vperm.xlu0 %3127, %v3109
            %v3129 = vpop.permute.xlu0 %3128
            %3132 = vset.pattern.permute.xlu0 0
            %3133 = vperm.xlu0 %3132, %v3110
            %v3134 = vpop.permute.xlu0 %3133
            %v3136 = vmul.f32 %v3091, %v3114
            %v3137 = vmul.f32 %v3092, %v3119
            %v3138 = vmul.f32 %v3093, %v3124
            %v3139 = vmul.f32 %v3094, %v3129
            %v3140 = vmul.f32 %v3095, %v3134
            %v3141 = vmul.f32 %v3096, %v3114
            %v3142 = vmul.f32 %v3097, %v3119
            %v3143 = vmul.f32 %v3098, %v3124
            %v3144 = vmul.f32 %v3099, %v3129
            %v3145 = vmul.f32 %v3100, %v3134
            %3147 = vset.pattern.permute.xlu0 0
            %3148 = vperm.xlu0 %3147, %v3039
            %v3149 = vpop.permute.xlu0 %3148
            %3152 = vset.pattern.permute.xlu0 0
            %3153 = vperm.xlu0 %3152, %v3040
            %v3154 = vpop.permute.xlu0 %3153
            %3157 = vset.pattern.permute.xlu0 0
            %3158 = vperm.xlu0 %3157, %v3041
            %v3159 = vpop.permute.xlu0 %3158
            %3162 = vset.pattern.permute.xlu0 0
            %3163 = vperm.xlu0 %3162, %v3042
            %v3164 = vpop.permute.xlu0 %3163
            %3167 = vset.pattern.permute.xlu0 0
            %3168 = vperm.xlu0 %3167, %v3043
            %v3169 = vpop.permute.xlu0 %3168
            %v3171 = vmul.f32 %v3136, %v3149
            %v3172 = vmul.f32 %v3137, %v3154
            %v3173 = vmul.f32 %v3138, %v3159
            %v3174 = vmul.f32 %v3139, %v3164
            %v3175 = vmul.f32 %v3140, %v3169
            %v3176 = vmul.f32 %v3141, %v3149
            %v3177 = vmul.f32 %v3142, %v3154
            %v3178 = vmul.f32 %v3143, %v3159
            %v3179 = vmul.f32 %v3144, %v3164
            %v3180 = vmul.f32 %v3145, %v3169
            %3182 = vset.pattern.permute.xlu0 0
            %3183 = vperm.xlu0 %3182, %v3044
            %v3184 = vpop.permute.xlu0 %3183
            %3187 = vset.pattern.permute.xlu0 0
            %3188 = vperm.xlu0 %3187, %v3045
            %v3189 = vpop.permute.xlu0 %3188
            %3192 = vset.pattern.permute.xlu0 0
            %3193 = vperm.xlu0 %3192, %v3046
            %v3194 = vpop.permute.xlu0 %3193
            %3197 = vset.pattern.permute.xlu0 0
            %3198 = vperm.xlu0 %3197, %v3047
            %v3199 = vpop.permute.xlu0 %3198
            %3202 = vset.pattern.permute.xlu0 0
            %3203 = vperm.xlu0 %3202, %v3048
            %v3204 = vpop.permute.xlu0 %3203
            %v3206 = vadd.f32 %v3171, %v3184
            %v3207 = vadd.f32 %v3172, %v3189
            %v3208 = vadd.f32 %v3173, %v3194
            %v3209 = vadd.f32 %v3174, %v3199
            %v3210 = vadd.f32 %v3175, %v3204
            %v3211 = vadd.f32 %v3176, %v3184
            %v3212 = vadd.f32 %v3177, %v3189
            %v3213 = vadd.f32 %v3178, %v3194
            %v3214 = vadd.f32 %v3179, %v3199
            %v3215 = vadd.f32 %v3180, %v3204
            %v3216 = vxor.u32 %v3206, 2147483648
            %v3217 = vxor.u32 %v3207, 2147483648
            %v3218 = vxor.u32 %v3208, 2147483648
            %v3219 = vxor.u32 %v3209, 2147483648
            %v3220 = vxor.u32 %v3210, 2147483648
            %v3221 = vxor.u32 %v3211, 2147483648
            %v3222 = vxor.u32 %v3212, 2147483648
            %v3223 = vxor.u32 %v3213, 2147483648
            %v3224 = vxor.u32 %v3214, 2147483648
            %v3225 = vxor.u32 %v3215, 2147483648
            %v3226 = vmul.f32 %v3216, 1.442695
            %v3227 = vpow.pop %v3226
            %v3228 = vmul.f32 %v3217, 1.442695
            %v3229 = vpow.pop %v3228
            %v3230 = vmul.f32 %v3218, 1.442695
            %v3231 = vpow.pop %v3230
            %v3232 = vmul.f32 %v3219, 1.442695
            %v3233 = vpow.pop %v3232
            %v3234 = vmul.f32 %v3220, 1.442695
            %v3235 = vpow.pop %v3234
            %v3236 = vmul.f32 %v3221, 1.442695
            %v3237 = vpow.pop %v3236
            %v3238 = vmul.f32 %v3222, 1.442695
            %v3239 = vpow.pop %v3238
            %v3240 = vmul.f32 %v3223, 1.442695
            %v3241 = vpow.pop %v3240
            %v3242 = vmul.f32 %v3224, 1.442695
            %v3243 = vpow.pop %v3242
            %v3244 = vmul.f32 %v3225, 1.442695
            %v3245 = vpow.pop %v3244
            %v3246 = vadd.f32 %v3227, 1.0
            %v3247 = vadd.f32 %v3229, 1.0
            %v3248 = vadd.f32 %v3231, 1.0
            %v3249 = vadd.f32 %v3233, 1.0
            %v3250 = vadd.f32 %v3235, 1.0
            %v3251 = vadd.f32 %v3237, 1.0
            %v3252 = vadd.f32 %v3239, 1.0
            %v3253 = vadd.f32 %v3241, 1.0
            %v3254 = vadd.f32 %v3243, 1.0
            %v3255 = vadd.f32 %v3245, 1.0
            %v3256 = vrcp.pop %v3246
            %v3257 = vmul.f32 1.0, %v3256
            %v3258 = vrcp.pop %v3247
            %v3259 = vmul.f32 1.0, %v3258
            %v3260 = vrcp.pop %v3248
            %v3261 = vmul.f32 1.0, %v3260
            %v3262 = vrcp.pop %v3249
            %v3263 = vmul.f32 1.0, %v3262
            %v3264 = vrcp.pop %v3250
            %v3265 = vmul.f32 1.0, %v3264
            %v3266 = vrcp.pop %v3251
            %v3267 = vmul.f32 1.0, %v3266
            %v3268 = vrcp.pop %v3252
            %v3269 = vmul.f32 1.0, %v3268
            %v3270 = vrcp.pop %v3253
            %v3271 = vmul.f32 1.0, %v3270
            %v3272 = vrcp.pop %v3254
            %v3273 = vmul.f32 1.0, %v3272
            %v3274 = vrcp.pop %v3255
            %v3275 = vmul.f32 1.0, %v3274
            %v3276 = vsub.f32 1.0, %v3257
            %v3277 = vsub.f32 1.0, %v3259
            %v3278 = vsub.f32 1.0, %v3261
            %v3279 = vsub.f32 1.0, %v3263
            %v3280 = vsub.f32 1.0, %v3265
            %v3281 = vsub.f32 1.0, %v3267
            %v3282 = vsub.f32 1.0, %v3269
            %v3283 = vsub.f32 1.0, %v3271
            %v3284 = vsub.f32 1.0, %v3273
            %v3285 = vsub.f32 1.0, %v3275
            %3287 = vset.pattern.permute.xlu0 0
            %3288 = vperm.xlu0 %3287, %v3049
            %v3289 = vpop.permute.xlu0 %3288
            %3292 = vset.pattern.permute.xlu0 0
            %3293 = vperm.xlu0 %3292, %v3050
            %v3294 = vpop.permute.xlu0 %3293
            %3297 = vset.pattern.permute.xlu0 0
            %3298 = vperm.xlu0 %3297, %v3051
            %v3299 = vpop.permute.xlu0 %3298
            %3302 = vset.pattern.permute.xlu0 0
            %3303 = vperm.xlu0 %3302, %v3052
            %v3304 = vpop.permute.xlu0 %3303
            %3307 = vset.pattern.permute.xlu0 0
            %3308 = vperm.xlu0 %3307, %v3053
            %v3309 = vpop.permute.xlu0 %3308
            %v3311 = vmul.f32 %v3289, %v3276
            %v3312 = vmul.f32 %v3294, %v3277
            %v3313 = vmul.f32 %v3299, %v3278
            %v3314 = vmul.f32 %v3304, %v3279
            %v3315 = vmul.f32 %v3309, %v3280
            %v3316 = vmul.f32 %v3289, %v3281
            %v3317 = vmul.f32 %v3294, %v3282
            %v3318 = vmul.f32 %v3299, %v3283
            %v3319 = vmul.f32 %v3304, %v3284
            %v3320 = vmul.f32 %v3309, %v3285
            %v3321 = vadd.f32 %v3311, %v3257
            %v3322 = vadd.f32 %v3312, %v3259
            %v3323 = vadd.f32 %v3313, %v3261
            %v3324 = vadd.f32 %v3314, %v3263
            %v3325 = vadd.f32 %v3315, %v3265
            %v3326 = vadd.f32 %v3316, %v3267
            %v3327 = vadd.f32 %v3317, %v3269
            %v3328 = vadd.f32 %v3318, %v3271
            %v3329 = vadd.f32 %v3319, %v3273
            %v3330 = vadd.f32 %v3320, %v3275
            %v3331 = vmul.f32 %v3321, %v2757
            %v3332 = vmul.f32 %v3322, %v2760
            %v3333 = vmul.f32 %v3323, %v2765
            %v3334 = vmul.f32 %v3324, %v2768
            %v3335 = vmul.f32 %v3325, %v2773
            %v3336 = vmul.f32 %v3326, %v2813
            %v3337 = vmul.f32 %v3327, %v2816
            %v3338 = vmul.f32 %v3328, %v2821
            %v3339 = vmul.f32 %v3329, %v2824
            %v3340 = vmul.f32 %v3330, %v2829
            %v3341 = vld [vmem:[%s11] sm:$0x1]
            %v3342 = vpack.c.bf16 %v3332, %v3331
            %v3343 = vpack.c.bf16 %v3334, %v3333
            %v3344 = vpack.c.bf16 %v3335, %v3335
            %v3345 = vpack.c.bf16 %v3337, %v3336
            %v3346 = vpack.c.bf16 %v3339, %v3338
            %v3347 = vpack.c.bf16 %v3340, %v3340
            %v3348 = vld [vmem:[#allocation7] sm:$0x1]
            %3350 = vset.pattern.permute.xlu0 0
            %3351 = vperm.xlu0 %3350, %v3348
            %v3352 = vpop.permute.xlu0 %3351
            %v3354 = vlaneseq
            %v3355 = vshrl.u32 %v3354, 7
            %v3356 = vsub.s32 0, %v3355
            %v3357 = vrot.slane %v3352, %v3356
            %vm3358 = vcmask 326656
            %v3360 = vsel %vm3358, %v3341, 0
            %vm3362 = vcmask 1043456
            %v3364 = vsel %vm3362, %v3344, 0
            %3366 = vmatprep.subr.bf16.mxu0 0
            %3367 = vmatpush1.bf16.msra.mxu0 0
            %3368 = vmatprep.subr.bf16.mxu0 0
            %3369 = vmatpush1.bf16.msra.mxu0 0
            %3370 = vmatprep.subr.bf16.mxu0 0
            %3371 = vmatpush1.bf16.msra.mxu0 0
            %3372 = vmatprep.subr.bf16.mxu0 0
            %3373 = vmatpush1.bf16.msra.mxu0 0
            %3374 = vmatprep.subr.bf16.mxu0 0
            %3375 = vmatpush1.bf16.msra.mxu0 0
            %3376 = vmatprep.subr.bf16.mxu0 0
            %3377 = vmatpush1.bf16.msra.mxu0 %v3364
            %3378 = vmatprep.subr.bf16.mxu0 0
            %3379 = vmatpush1.bf16.msra.mxu0 %v3343
            %3380 = vmatprep.subr.bf16.mxu0 0
            %3381 = vmatpush1.bf16.msra.mxu0 %v3342
            %3382 = vmatprep.subr.bf16.mxu0 0
            %3383 = vmatpush2.bf16.msra.mxu0 0
            %3384 = vmatprep.subr.bf16.mxu0 0
            %3385 = vmatpush2.bf16.msra.mxu0 0
            %3386 = vmatprep.subr.bf16.mxu0 0
            %3387 = vmatpush2.bf16.msra.mxu0 0
            %3388 = vmatprep.subr.bf16.mxu0 0
            %3389 = vmatpush2.bf16.msra.mxu0 0
            %3390 = vmatprep.subr.bf16.mxu0 0
            %3391 = vmatpush2.bf16.msra.mxu0 0
            %3392 = vmatprep.subr.bf16.mxu0 0
            %3393 = vmatpush2.bf16.msra.mxu0 0
            %3394 = vmatprep.subr.bf16.mxu0 0
            %3395 = vmatpush2.bf16.msra.mxu0 0
            %3396 = vmatprep.subr.bf16.mxu0 0
            %3397 = vmatpush2.bf16.msra.mxu0 0
            %3398 = vmatprep.mubr.bf16.mxu0 0
            %3399 = vmatmul.mubr.bf16.gmra.mxu0 %v3360
            %v3400 = vpop.f32.mrf.mxu0
            %v3401 = vadd.f32 %v3357, %v3400
            %v3402 = vpop.f32.mrf.mxu0
            %v3403 = vpop.f32.mrf.mxu0
            %v3404 = vpop.f32.mrf.mxu0
            %3405 = vdwg.mxu0
            %v3407 = vsel %vm3362, %v3347, 0
            %3409 = vmatprep.subr.bf16.mxu0 0
            %3410 = vmatpush1.bf16.msra.mxu0 0
            %3411 = vmatprep.subr.bf16.mxu0 0
            %3412 = vmatpush1.bf16.msra.mxu0 0
            %3413 = vmatprep.subr.bf16.mxu0 0
            %3414 = vmatpush1.bf16.msra.mxu0 0
            %3415 = vmatprep.subr.bf16.mxu0 0
            %3416 = vmatpush1.bf16.msra.mxu0 0
            %3417 = vmatprep.subr.bf16.mxu0 0
            %3418 = vmatpush1.bf16.msra.mxu0 0
            %3419 = vmatprep.subr.bf16.mxu0 0
            %3420 = vmatpush1.bf16.msra.mxu0 %v3407
            %3421 = vmatprep.subr.bf16.mxu0 0
            %3422 = vmatpush1.bf16.msra.mxu0 %v3346
            %3423 = vmatprep.subr.bf16.mxu0 0
            %3424 = vmatpush1.bf16.msra.mxu0 %v3345
            %3425 = vmatprep.subr.bf16.mxu0 0
            %3426 = vmatpush2.bf16.msra.mxu0 0
            %3427 = vmatprep.subr.bf16.mxu0 0
            %3428 = vmatpush2.bf16.msra.mxu0 0
            %3429 = vmatprep.subr.bf16.mxu0 0
            %3430 = vmatpush2.bf16.msra.mxu0 0
            %3431 = vmatprep.subr.bf16.mxu0 0
            %3432 = vmatpush2.bf16.msra.mxu0 0
            %3433 = vmatprep.subr.bf16.mxu0 0
            %3434 = vmatpush2.bf16.msra.mxu0 0
            %3435 = vmatprep.subr.bf16.mxu0 0
            %3436 = vmatpush2.bf16.msra.mxu0 0
            %3437 = vmatprep.subr.bf16.mxu0 0
            %3438 = vmatpush2.bf16.msra.mxu0 0
            %3439 = vmatprep.subr.bf16.mxu0 0
            %3440 = vmatpush2.bf16.msra.mxu0 0
            %3441 = vmatprep.mubr.bf16.mxu0 0
            %3442 = vmatmul.mubr.bf16.gmra.mxu0 %v3360
            %v3443 = vpop.f32.mrf.mxu0
            %v3444 = vadd.f32 %v3357, %v3443
            %v3445 = vpop.f32.mrf.mxu0
            %v3446 = vpop.f32.mrf.mxu0
            %v3447 = vpop.f32.mrf.mxu0
            %3448 = vdwg.mxu0
            %vm3449 = vcmask 57344
            %3450 = vst.msk [vmem:[%s501] sm:$0x1] %vm3449, %v3401
            %3451 = vst.msk [vmem:[%s501 + $0x1] sm:$0x1] %vm3449, %v3444
          $region92: #{tpu_custom_call.1} parent=83 // pred_fallthru
            _
        $region84: #{tpu_custom_call.1} parent=71 // pred_fallthru
          _
        %s3452 = sand.u32 %s348, 1
        %s3453 = scalar_lea.sflag [#allocation9], %s3452
        %s3454 = sand.u32 %s348, 1
        %s3455 = smul.addr %s3454, 2
        %s3456 = scalar_lea.vmem [#allocation8], %s3455
        // Predicated region
        $region93: #{tpu_custom_call.1} parent=71 // pred_check
          %p3457 = pneg %p358
        $region94: #{tpu_custom_call.1} parent=71 // pred_check_branch
          %3459 = sbr.rel (%p3457) target = $region96
        $region95: #{tpu_custom_call.1} parent=71 // pred_region
          %s3460 = smul.u32 2, %s35
          %s3462 = ssub.s32 32, 32
          %3463 = vsyncadd %s3453, %s3462
          %s3464 = sadd.s32 %s36, %s3460
          %s3465 = smul.addr %s3464, 16
          %s3466 = scalar_lea.hbm %s13, %s3465
          %s3467 = sshll.u32 %s3456, 4
          %s3468 = int_to_ptr.vmem [resolvable:$true] %s3467
          %3473 = dma.vmem_to_hbm [thread:$0]  %s3468, 32, %s3466, %s3453, 16, 16, 1
        $region96: #{tpu_custom_call.1} parent=71 // pred_fallthru
          _
      $region72: #{tpu_custom_call.1} parent=5 // pred_fallthru
        _
      %p3474 = scmp.le.s32.totalorder 2, %s24
      // Predicated region
      $region97: #{tpu_custom_call.1} parent=5 // pred_check
        %p3475 = pneg %p3474
      $region98: #{tpu_custom_call.1} parent=5 // pred_check_branch
        %3477 = sbr.rel (%p3475) target = $region100
      $region99: #{tpu_custom_call.1} parent=5 // pred_region
        %s3478 = ssub.s32 %s24, 2
        // Predicated region
        $region101: #{tpu_custom_call.1} parent=99 // pred_check
          %p3479 = pneg %p364
        $region102: #{tpu_custom_call.1} parent=99 // pred_check_branch
          %3481 = sbr.rel (%p3479) target = $region104
        $region103: #{tpu_custom_call.1} parent=99 // pred_region
          %s3482 = sand.u32 %s349, 1
          %s3483 = scalar_lea.sflag [#allocation9], %s3482
          %s3484 = sand.u32 %s349, 1
          %s3485 = smul.addr %s3484, 2
          %s3486 = scalar_lea.vmem [#allocation8], %s3485
          %3487 = dma.done %s3483, 32
        $region104: #{tpu_custom_call.1} parent=99 // pred_fallthru
          _
      $region100: #{tpu_custom_call.1} parent=5 // pred_fallthru
        _
    $region6: #{tpu_custom_call.1} parent=1 // loop_footer
      %s28 = sadd.s32 1, %s24
    $region7: #{tpu_custom_call.1} parent=1 // loop_footer_branch
      %23 = sbr.rel target = $region3
    $region8: #{tpu_custom_call.1} parent=1 // loop_exit
      _
    %3488 = vsyncpa [#allocation9], 1
    %s3489 = scalar_lea.sflag [#allocation9], 1
    %3490 = vsyncpa %s3489, 1

</llo_original>
